<compile_context>
chip_gen: v7x
topology: tpu7x:2x2x1
jax: 0.10.0
libtpu: 0.0.40
codegen_flags: <defaults>
</compile_context>

<pallas_src>
import functools

import jax
import jax.numpy as jnp
from jax.experimental import pallas as pl
from jax.experimental.pallas import tpu as pltpu

FEAT_DIM = 1280
PROJ_DIM = 256
CLASSNUM = 8
Y_PAD = 128  # lane-dense padded width for the classifier output


def _round_up(x, m):
    return ((x + m - 1) // m) * m


def _head_kernel(x_ref, w1_ref, b1_ref, w2_ref, b2_ref, w23_ref, b23_ref,
                 proj_ref, y_ref, acc_ref, *, inv_hw, hw_total, thw, mask_hw):
    hw = pl.program_id(1)

    @pl.when(hw == 0)
    def _():
        acc_ref[...] = jnp.zeros_like(acc_ref)

    # Accumulate the spatial sum of this (TB, THW, C) slab in f32 (x may be bf16).
    xv = x_ref[...].astype(jnp.float32)
    if mask_hw:
        # Ragged last spatial tile: zero rows beyond the true spatial extent so they
        # don't pollute the pooling sum.  (Static python flag -> zero cost otherwise.)
        row = hw * thw + jax.lax.broadcasted_iota(jnp.int32, xv.shape, 1)
        xv = jnp.where(row < hw_total, xv, 0.0)
    acc_ref[...] += jnp.sum(xv, axis=1)

    @pl.when(hw == pl.num_programs(1) - 1)
    def _():
        # Global average pool + flatten -> (TB, 1280).
        pooled = acc_ref[...] * inv_hw

        # projection_head: Linear(1280 -> 256) + ReLU.
        h = jnp.dot(pooled, w1_ref[...],
                    preferred_element_type=jnp.float32) + b1_ref[...]
        h = jnp.maximum(h, 0.0)

        # projection_head2: Linear(256 -> 256) == proj_feat.
        proj = jnp.dot(h, w2_ref[...],
                       preferred_element_type=jnp.float32) + b2_ref[...]
        proj_ref[...] = proj.astype(proj_ref.dtype)

        # drop == identity (eval); standard_head folded through projection_head2:
        #   y = proj @ w3 + b3 = h @ (w2 @ w3) + (b2 @ w3 + b3)
        y = jnp.dot(h, w23_ref[...],
                    preferred_element_type=jnp.float32) + b23_ref[...]
        y_ref[...] = y.astype(y_ref.dtype)


def effnet_moon_head(x, w1, b1, w2, b2, w3, b3):
    """x: (B, HW, 1280) channels-last feature map (f32 or bf16; streamed as-is).

    w*: pre-transposed (in, out) Linear weights; b*: (1, out) biases.
    Returns (proj_feat (B, 256), y (B, classnum)), both float32.
    """
    B, HW, C = x.shape
    assert C == FEAT_DIM
    classnum = w3.shape[1]
    assert classnum <= Y_PAD
    f32 = jnp.float32

    w1 = w1.astype(f32)
    w2 = w2.astype(f32)
    b1 = jnp.reshape(b1, (1, PROJ_DIM)).astype(f32)
    b2 = jnp.reshape(b2, (1, PROJ_DIM)).astype(f32)
    b3 = jnp.reshape(b3, (1, classnum)).astype(f32)

    # Fold standard_head through projection_head2 and pad to a lane-dense 128 slab.
    w23 = jnp.pad(w2 @ w3.astype(f32), ((0, 0), (0, Y_PAD - classnum)))
    b23 = jnp.pad(b2 @ w3.astype(f32) + b3, ((0, 0), (0, Y_PAD - classnum)))

    # ---- generation-aware VMEM budget --------------------------------------
    try:
        phys_vmem = int(pltpu.get_tpu_info().vmem_capacity_bytes)
    except Exception:  # conservative default (v7x-sized VMEM)
        phys_vmem = 64 << 20
    # 64 MiB scoped limit on v5e/v6e (128 MiB physical), 48 MiB on v7x (64 MiB).
    vmem_limit = int(min(64 << 20, (phys_vmem * 3) // 4))

    weight_elems = (FEAT_DIM * PROJ_DIM + PROJ_DIM
                    + PROJ_DIM * PROJ_DIM + PROJ_DIM
                    + PROJ_DIM * Y_PAD + Y_PAD)
    # Worst-case double-buffered f32 weights + accumulator/outputs/Mosaic scratch.
    fixed_bytes = 2 * 4 * weight_elems + (4 << 20)
    x_budget = max(1 << 20, (vmem_limit - fixed_bytes) // 2)   # per x pipeline buffer

    # ---- tile selection (no padded copy of x) -------------------------------
    itemsize = jnp.dtype(x.dtype).itemsize
    row_bytes = HW * FEAT_DIM * itemsize          # one batch row, full spatial extent

    if B <= 8:
        TB = B                                    # output block first dim == full B
    else:
        # >=2 batch tiles so the "parallel" axis feeds both v7x TensorCores.
        tb_cap = min(256, _round_up(pl.cdiv(B, 2), 8))
        tb_fit = max(8, (x_budget // row_bytes) // 8 * 8)
        TB = int(min(tb_cap, tb_fit))

    if TB * row_bytes <= x_budget or HW <= 8:
        THW = HW                                  # full extent: exempt from (8,128) rule
    else:
        THW = (x_budget // (TB * FEAT_DIM * itemsize)) // 8 * 8
        THW = int(max(8, min(THW, (HW // 8) * 8)))
    mask_hw = (HW % THW) != 0                     # ragged spatial tile -> mask in-kernel

    nb, nhw = pl.cdiv(B, TB), pl.cdiv(HW, THW)

    kernel = functools.partial(_head_kernel, inv_hw=1.0 / HW, hw_total=HW,
                               thw=THW, mask_hw=mask_hw)

    cost = pl.CostEstimate(
        flops=int(B * HW * FEAT_DIM + 2 * B * weight_elems),
        transcendentals=0,
        bytes_accessed=int(B * HW * FEAT_DIM * itemsize + 4 * weight_elems
                           + 4 * B * (PROJ_DIM + Y_PAD)),
    )

    const = lambda b, s: (0, 0)

    def _call(single_buffer_weights):
        # Constant-index weight operands never change block, so the second pipeline
        # buffer is wasted VMEM (~1.7 MiB) -> single-buffer them when supported.
        w_mode = (dict(pipeline_mode=pl.Buffered(1))
                  if single_buffer_weights else {})
        return pl.pallas_call(
            kernel,
            out_shape=(
                jax.ShapeDtypeStruct((B, PROJ_DIM), f32),
                jax.ShapeDtypeStruct((B, Y_PAD), f32),
            ),
            grid_spec=pltpu.PrefetchScalarGridSpec(
                num_scalar_prefetch=0,
                grid=(nb, nhw),
                in_specs=[
                    pl.BlockSpec((TB, THW, FEAT_DIM), lambda b, s: (b, s, 0)),
                    pl.BlockSpec((FEAT_DIM, PROJ_DIM), const, **w_mode),
                    pl.BlockSpec((1, PROJ_DIM), const, **w_mode),
                    pl.BlockSpec((PROJ_DIM, PROJ_DIM), const, **w_mode),
                    pl.BlockSpec((1, PROJ_DIM), const, **w_mode),
                    pl.BlockSpec((PROJ_DIM, Y_PAD), const, **w_mode),
                    pl.BlockSpec((1, Y_PAD), const, **w_mode),
                ],
                out_specs=(
                    pl.BlockSpec((TB, PROJ_DIM), lambda b, s: (b, 0)),
                    pl.BlockSpec((TB, Y_PAD), lambda b, s: (b, 0)),
                ),
                scratch_shapes=[pltpu.VMEM((TB, FEAT_DIM), jnp.float32)],
            ),
            compiler_params=pltpu.CompilerParams(
                dimension_semantics=("parallel", "arbitrary"),
                vmem_limit_bytes=vmem_limit),
            cost_estimate=cost,
        )(x, w1, b1, w2, b2, w23, b23)

    try:
        proj, y = _call(True)
    except Exception:
        # Fallback for jax versions without BlockSpec pipeline_mode / Buffered(1).
        proj, y = _call(False)

    return proj, y[:, :classnum]


def _reference(x, w1, b1, w2, b2, w3, b3):
    pooled = jnp.mean(x, axis=1)
    h = jnp.maximum(pooled @ w1 + b1.reshape(1, -1), 0.0)
    proj = h @ w2 + b2.reshape(1, -1)
    y = proj @ w3 + b3.reshape(1, -1)
    return proj, y


if __name__ == "__main__":
    key = jax.random.PRNGKey(0)
    B, H, W = 2, 4, 4  # small spatial extent consistent with a 1280-channel feature map

    k = jax.random.split(key, 7)
    # Backbone output feature map (B, H*W, C), streamed in bf16 (halves the dominant
    # HBM traffic); pooling and all matmuls stay f32 inside the kernel.
    x = jax.random.normal(k[0], (B, H * W, FEAT_DIM),
                          dtype=jnp.float32).astype(jnp.bfloat16)

    # nn.Linear weights are (out, in); stored pre-transposed as (in, out).
    w1 = jax.random.normal(k[1], (FEAT_DIM, PROJ_DIM), dtype=jnp.float32) * 0.02
    b1 = jax.random.normal(k[2], (1, PROJ_DIM), dtype=jnp.float32) * 0.01
    w2 = jax.random.normal(k[3], (PROJ_DIM, PROJ_DIM), dtype=jnp.float32) * 0.02
    b2 = jax.random.normal(k[4], (1, PROJ_DIM), dtype=jnp.float32) * 0.01
    w3 = jax.random.normal(k[5], (PROJ_DIM, CLASSNUM), dtype=jnp.float32) * 0.02
    b3 = jax.random.normal(k[6], (1, CLASSNUM), dtype=jnp.float32) * 0.01

    proj_feat, y = jax.block_until_ready(
        effnet_moon_head(x, w1, b1, w2, b2, w3, b3))

    # Reference computed from the same bf16-rounded features (f32 math).
    proj_ref, y_ref = _reference(x.astype(jnp.float32), w1, b1, w2, b2, w3, b3)
    assert proj_feat.shape == (B, PROJ_DIM) and y.shape == (B, CLASSNUM)
    assert jnp.allclose(proj_feat, proj_ref, atol=2e-4, rtol=2e-3)
    assert jnp.allclose(y, y_ref, atol=2e-4, rtol=2e-3)

    print("KERNEL_OK")
</pallas_src>

<mosaic_0001>
module attributes {stable_mosaic.version = 11 : i64} {
  func.func @_head_kernel(%arg0: i32, %arg1: i32, %arg2: memref<2x16x1280xbf16, #tpu.memory_space<vmem>>, %arg3: memref<1280x256xf32, #tpu.memory_space<vmem>>, %arg4: memref<1x256xf32, #tpu.memory_space<vmem>>, %arg5: memref<256x256xf32, #tpu.memory_space<vmem>>, %arg6: memref<1x256xf32, #tpu.memory_space<vmem>>, %arg7: memref<256x128xf32, #tpu.memory_space<vmem>>, %arg8: memref<1x128xf32, #tpu.memory_space<vmem>>, %arg9: memref<2x256xf32, #tpu.memory_space<vmem>>, %arg10: memref<2x128xf32, #tpu.memory_space<vmem>>, %arg11: memref<2x1280xf32, #tpu.memory_space<vmem>>) attributes {dimension_semantics = [#tpu.dimension_semantics<parallel>, #tpu.dimension_semantics<arbitrary>], iteration_bounds = array<i64: 1, 1>, scalar_prefetch = 0 : i64, scratch_operands = 1 : i64, tpu.core_type = #tpu.core_type<tc>, window_params = [{transform_indices = @transform_0, window_bounds = array<i64: 2, 16, 1280>}, {pipeline_mode = #tpu.pipeline_mode<synchronous>, transform_indices = @transform_1, window_bounds = array<i64: 1280, 256>}, {pipeline_mode = #tpu.pipeline_mode<synchronous>, transform_indices = @transform_2, window_bounds = array<i64: 1, 256>}, {pipeline_mode = #tpu.pipeline_mode<synchronous>, transform_indices = @transform_3, window_bounds = array<i64: 256, 256>}, {pipeline_mode = #tpu.pipeline_mode<synchronous>, transform_indices = @transform_4, window_bounds = array<i64: 1, 256>}, {pipeline_mode = #tpu.pipeline_mode<synchronous>, transform_indices = @transform_5, window_bounds = array<i64: 256, 128>}, {pipeline_mode = #tpu.pipeline_mode<synchronous>, transform_indices = @transform_6, window_bounds = array<i64: 1, 128>}, {transform_indices = @transform_7, window_bounds = array<i64: 2, 256>}, {transform_indices = @transform_8, window_bounds = array<i64: 2, 128>}]} {
    %c0_i32 = arith.constant 0 : i32
    %0 = arith.cmpi eq, %arg1, %c0_i32 : i32
    %1 = arith.extui %0 : i1 to i32
    %c0_i32_0 = arith.constant 0 : i32
    %2 = arith.cmpi ne, %1, %c0_i32_0 : i32
    scf.if %2 {
      %cst_9 = arith.constant 0.000000e+00 : f32
      %12 = vector.broadcast %cst_9 : f32 to vector<2x1280xf32>
      %c0_10 = arith.constant 0 : index
      %c0_11 = arith.constant 0 : index
      %13 = vector.load %arg11[%c0_10, %c0_11] : memref<2x1280xf32, #tpu.memory_space<vmem>>, vector<2x1280xf32>
      tpu.vector_store %arg11[%c0_10, %c0_11], %12 {strides = array<i32>} : memref<2x1280xf32, #tpu.memory_space<vmem>>, vector<2x1280xf32>,
    } else {
    }
    %c0 = arith.constant 0 : index
    %c0_1 = arith.constant 0 : index
    %c0_2 = arith.constant 0 : index
    %3 = vector.load %arg2[%c0, %c0_1, %c0_2] : memref<2x16x1280xbf16, #tpu.memory_space<vmem>>, vector<2x16x1280xbf16>
    %4 = arith.extf %3 : vector<2x16x1280xbf16> to vector<2x16x1280xf32>
    %c0_3 = arith.constant 0 : index
    %c0_4 = arith.constant 0 : index
    %5 = vector.load %arg11[%c0_3, %c0_4] : memref<2x1280xf32, #tpu.memory_space<vmem>>, vector<2x1280xf32>
    %cst = arith.constant dense<0.000000e+00> : vector<2x1280xf32>
    %6 = vector.multi_reduction <add>, %4, %cst [1] : vector<2x16x1280xf32> to vector<2x1280xf32>
    %7 = arith.addf %5, %6 : vector<2x1280xf32>
    %c0_5 = arith.constant 0 : index
    %c0_6 = arith.constant 0 : index
    %8 = vector.load %arg11[%c0_5, %c0_6] : memref<2x1280xf32, #tpu.memory_space<vmem>>, vector<2x1280xf32>
    tpu.vector_store %arg11[%c0_5, %c0_6], %7 {strides = array<i32>} : memref<2x1280xf32, #tpu.memory_space<vmem>>, vector<2x1280xf32>,
    %c0_i32_7 = arith.constant 0 : i32
    %9 = arith.cmpi eq, %arg1, %c0_i32_7 : i32
    %10 = arith.extui %9 : i1 to i32
    %c0_i32_8 = arith.constant 0 : i32
    %11 = arith.cmpi ne, %10, %c0_i32_8 : i32
    scf.if %11 {
      %c0_9 = arith.constant 0 : index
      %c0_10 = arith.constant 0 : index
      %12 = vector.load %arg11[%c0_9, %c0_10] : memref<2x1280xf32, #tpu.memory_space<vmem>>, vector<2x1280xf32>
      %cst_11 = arith.constant 6.250000e-02 : f32
      %13 = vector.broadcast %cst_11 : f32 to vector<2x1280xf32>
      %14 = arith.mulf %12, %13 : vector<2x1280xf32>
      %c0_12 = arith.constant 0 : index
      %c0_13 = arith.constant 0 : index
      %15 = vector.load %arg3[%c0_12, %c0_13] : memref<1280x256xf32, #tpu.memory_space<vmem>>, vector<1280x256xf32>
      %cst_14 = arith.constant dense<0.000000e+00> : vector<2x256xf32>
      %16 = tpu.matmul %14, %15, %cst_14 {dimension_numbers = #tpu.dot_dimension_numbers<[1], [0], [0], [1], [0, 0, 1, 1], [], []>} : vector<2x1280xf32>, vector<1280x256xf32>, vector<2x256xf32> -> vector<2x256xf32>
      %c0_15 = arith.constant 0 : index
      %c0_16 = arith.constant 0 : index
      %17 = vector.load %arg4[%c0_15, %c0_16] : memref<1x256xf32, #tpu.memory_space<vmem>>, vector<1x256xf32>
      %18 = vector.broadcast %17 : vector<1x256xf32> to vector<2x256xf32>
      %19 = arith.addf %16, %18 : vector<2x256xf32>
      %cst_17 = arith.constant 0.000000e+00 : f32
      %20 = vector.broadcast %cst_17 : f32 to vector<2x256xf32>
      %21 = arith.maximumf %19, %20 : vector<2x256xf32>
      %c0_18 = arith.constant 0 : index
      %c0_19 = arith.constant 0 : index
      %22 = vector.load %arg5[%c0_18, %c0_19] : memref<256x256xf32, #tpu.memory_space<vmem>>, vector<256x256xf32>
      %cst_20 = arith.constant dense<0.000000e+00> : vector<2x256xf32>
      %23 = tpu.matmul %21, %22, %cst_20 {dimension_numbers = #tpu.dot_dimension_numbers<[1], [0], [0], [1], [0, 0, 1, 1], [], []>} : vector<2x256xf32>, vector<256x256xf32>, vector<2x256xf32> -> vector<2x256xf32>
      %c0_21 = arith.constant 0 : index
      %c0_22 = arith.constant 0 : index
      %24 = vector.load %arg6[%c0_21, %c0_22] : memref<1x256xf32, #tpu.memory_space<vmem>>, vector<1x256xf32>
      %25 = vector.broadcast %24 : vector<1x256xf32> to vector<2x256xf32>
      %26 = arith.addf %23, %25 : vector<2x256xf32>
      %c0_23 = arith.constant 0 : index
      %c0_24 = arith.constant 0 : index
      %27 = vector.load %arg9[%c0_23, %c0_24] : memref<2x256xf32, #tpu.memory_space<vmem>>, vector<2x256xf32>
      tpu.vector_store %arg9[%c0_23, %c0_24], %26 {strides = array<i32>} : memref<2x256xf32, #tpu.memory_space<vmem>>, vector<2x256xf32>,
      %c0_25 = arith.constant 0 : index
      %c0_26 = arith.constant 0 : index
      %28 = vector.load %arg7[%c0_25, %c0_26] : memref<256x128xf32, #tpu.memory_space<vmem>>, vector<256x128xf32>
      %cst_27 = arith.constant dense<0.000000e+00> : vector<2x128xf32>
      %29 = tpu.matmul %21, %28, %cst_27 {dimension_numbers = #tpu.dot_dimension_numbers<[1], [0], [0], [1], [0, 0, 1, 1], [], []>} : vector<2x256xf32>, vector<256x128xf32>, vector<2x128xf32> -> vector<2x128xf32>
      %c0_28 = arith.constant 0 : index
      %c0_29 = arith.constant 0 : index
      %30 = vector.load %arg8[%c0_28, %c0_29] : memref<1x128xf32, #tpu.memory_space<vmem>>, vector<1x128xf32>
      %31 = vector.broadcast %30 : vector<1x128xf32> to vector<2x128xf32>
      %32 = arith.addf %29, %31 : vector<2x128xf32>
      %c0_30 = arith.constant 0 : index
      %c0_31 = arith.constant 0 : index
      %33 = vector.load %arg10[%c0_30, %c0_31] : memref<2x128xf32, #tpu.memory_space<vmem>>, vector<2x128xf32>
      tpu.vector_store %arg10[%c0_30, %c0_31], %32 {strides = array<i32>} : memref<2x128xf32, #tpu.memory_space<vmem>>, vector<2x128xf32>,
    } else {
    }
    return
  }
  func.func @transform_0(%arg0: i32, %arg1: i32) -> (i32, i32, i32) {
    %c0_i32 = arith.constant 0 : i32
    %c0_i32_0 = arith.constant 0 : i32
    return %arg0, %arg1, %c0_i32 : i32, i32, i32
  }
  func.func @transform_1(%arg0: i32, %arg1: i32) -> (i32, i32) {
    %c0_i32 = arith.constant 0 : i32
    %c0_i32_0 = arith.constant 0 : i32
    %c0_i32_1 = arith.constant 0 : i32
    return %c0_i32, %c0_i32_0 : i32, i32
  }
  func.func @transform_2(%arg0: i32, %arg1: i32) -> (i32, i32) {
    %c0_i32 = arith.constant 0 : i32
    %c0_i32_0 = arith.constant 0 : i32
    %c0_i32_1 = arith.constant 0 : i32
    return %c0_i32, %c0_i32_0 : i32, i32
  }
  func.func @transform_3(%arg0: i32, %arg1: i32) -> (i32, i32) {
    %c0_i32 = arith.constant 0 : i32
    %c0_i32_0 = arith.constant 0 : i32
    %c0_i32_1 = arith.constant 0 : i32
    return %c0_i32, %c0_i32_0 : i32, i32
  }
  func.func @transform_4(%arg0: i32, %arg1: i32) -> (i32, i32) {
    %c0_i32 = arith.constant 0 : i32
    %c0_i32_0 = arith.constant 0 : i32
    %c0_i32_1 = arith.constant 0 : i32
    return %c0_i32, %c0_i32_0 : i32, i32
  }
  func.func @transform_5(%arg0: i32, %arg1: i32) -> (i32, i32) {
    %c0_i32 = arith.constant 0 : i32
    %c0_i32_0 = arith.constant 0 : i32
    %c0_i32_1 = arith.constant 0 : i32
    return %c0_i32, %c0_i32_0 : i32, i32
  }
  func.func @transform_6(%arg0: i32, %arg1: i32) -> (i32, i32) {
    %c0_i32 = arith.constant 0 : i32
    %c0_i32_0 = arith.constant 0 : i32
    %c0_i32_1 = arith.constant 0 : i32
    return %c0_i32, %c0_i32_0 : i32, i32
  }
  func.func @transform_7(%arg0: i32, %arg1: i32) -> (i32, i32) {
    %c0_i32 = arith.constant 0 : i32
    %c0_i32_0 = arith.constant 0 : i32
    return %arg0, %c0_i32 : i32, i32
  }
  func.func @transform_8(%arg0: i32, %arg1: i32) -> (i32, i32) {
    %c0_i32 = arith.constant 0 : i32
    %c0_i32_0 = arith.constant 0 : i32
    return %arg0, %c0_i32 : i32, i32
  }
}

module attributes {stable_mosaic.version = 11 : i64} {
  func.func @_head_kernel(%arg0: i32, %arg1: i32, %arg2: memref<2x16x1280xbf16, #tpu.memory_space<vmem>>, %arg3: memref<1280x256xf32, #tpu.memory_space<vmem>>, %arg4: memref<1x256xf32, #tpu.memory_space<vmem>>, %arg5: memref<256x256xf32, #tpu.memory_space<vmem>>, %arg6: memref<1x256xf32, #tpu.memory_space<vmem>>, %arg7: memref<256x128xf32, #tpu.memory_space<vmem>>, %arg8: memref<1x128xf32, #tpu.memory_space<vmem>>, %arg9: memref<2x256xf32, #tpu.memory_space<vmem>>, %arg10: memref<2x128xf32, #tpu.memory_space<vmem>>, %arg11: memref<2x1280xf32, #tpu.memory_space<vmem>>) attributes {dimension_semantics = [#tpu.dimension_semantics<parallel>, #tpu.dimension_semantics<arbitrary>], iteration_bounds = array<i64: 1, 1>, scalar_prefetch = 0 : i64, scratch_operands = 1 : i64, tpu.core_type = #tpu.core_type<tc>, window_params = [{transform_indices = @transform_0, window_bounds = array<i64: 2, 16, 1280>}, {pipeline_mode = #tpu.pipeline_mode<synchronous>, transform_indices = @transform_1, window_bounds = array<i64: 1280, 256>}, {pipeline_mode = #tpu.pipeline_mode<synchronous>, transform_indices = @transform_2, window_bounds = array<i64: 1, 256>}, {pipeline_mode = #tpu.pipeline_mode<synchronous>, transform_indices = @transform_3, window_bounds = array<i64: 256, 256>}, {pipeline_mode = #tpu.pipeline_mode<synchronous>, transform_indices = @transform_4, window_bounds = array<i64: 1, 256>}, {pipeline_mode = #tpu.pipeline_mode<synchronous>, transform_indices = @transform_5, window_bounds = array<i64: 256, 128>}, {pipeline_mode = #tpu.pipeline_mode<synchronous>, transform_indices = @transform_6, window_bounds = array<i64: 1, 128>}, {transform_indices = @transform_7, window_bounds = array<i64: 2, 256>}, {transform_indices = @transform_8, window_bounds = array<i64: 2, 128>}]} {
    %c0_i32 = arith.constant 0 : i32
    %0 = arith.cmpi eq, %arg1, %c0_i32 : i32
    %1 = arith.extui %0 : i1 to i32
    %c0_i32_0 = arith.constant 0 : i32
    %2 = arith.cmpi ne, %1, %c0_i32_0 : i32
    scf.if %2 {
      %cst_9 = arith.constant 0.000000e+00 : f32
      %12 = vector.broadcast %cst_9 : f32 to vector<2x1280xf32>
      %c0_10 = arith.constant 0 : index
      %c0_11 = arith.constant 0 : index
      %13 = vector.load %arg11[%c0_10, %c0_11] : memref<2x1280xf32, #tpu.memory_space<vmem>>, vector<2x1280xf32>
      tpu.vector_store %arg11[%c0_10, %c0_11], %12 {strides = array<i32>} : memref<2x1280xf32, #tpu.memory_space<vmem>>, vector<2x1280xf32>,
    } else {
    }
    %c0 = arith.constant 0 : index
    %c0_1 = arith.constant 0 : index
    %c0_2 = arith.constant 0 : index
    %3 = vector.load %arg2[%c0, %c0_1, %c0_2] : memref<2x16x1280xbf16, #tpu.memory_space<vmem>>, vector<2x16x1280xbf16>
    %4 = arith.extf %3 : vector<2x16x1280xbf16> to vector<2x16x1280xf32>
    %c0_3 = arith.constant 0 : index
    %c0_4 = arith.constant 0 : index
    %5 = vector.load %arg11[%c0_3, %c0_4] : memref<2x1280xf32, #tpu.memory_space<vmem>>, vector<2x1280xf32>
    %cst = arith.constant dense<0.000000e+00> : vector<2x1280xf32>
    %6 = vector.multi_reduction <add>, %4, %cst [1] : vector<2x16x1280xf32> to vector<2x1280xf32>
    %7 = arith.addf %5, %6 : vector<2x1280xf32>
    %c0_5 = arith.constant 0 : index
    %c0_6 = arith.constant 0 : index
    %8 = vector.load %arg11[%c0_5, %c0_6] : memref<2x1280xf32, #tpu.memory_space<vmem>>, vector<2x1280xf32>
    tpu.vector_store %arg11[%c0_5, %c0_6], %7 {strides = array<i32>} : memref<2x1280xf32, #tpu.memory_space<vmem>>, vector<2x1280xf32>,
    %c0_i32_7 = arith.constant 0 : i32
    %9 = arith.cmpi eq, %arg1, %c0_i32_7 : i32
    %10 = arith.extui %9 : i1 to i32
    %c0_i32_8 = arith.constant 0 : i32
    %11 = arith.cmpi ne, %10, %c0_i32_8 : i32
    scf.if %11 {
      %c0_9 = arith.constant 0 : index
      %c0_10 = arith.constant 0 : index
      %12 = vector.load %arg11[%c0_9, %c0_10] : memref<2x1280xf32, #tpu.memory_space<vmem>>, vector<2x1280xf32>
      %cst_11 = arith.constant 6.250000e-02 : f32
      %13 = vector.broadcast %cst_11 : f32 to vector<2x1280xf32>
      %14 = arith.mulf %12, %13 : vector<2x1280xf32>
      %c0_12 = arith.constant 0 : index
      %c0_13 = arith.constant 0 : index
      %15 = vector.load %arg3[%c0_12, %c0_13] : memref<1280x256xf32, #tpu.memory_space<vmem>>, vector<1280x256xf32>
      %cst_14 = arith.constant dense<0.000000e+00> : vector<2x256xf32>
      %16 = tpu.matmul %14, %15, %cst_14 {dimension_numbers = #tpu.dot_dimension_numbers<[1], [0], [0], [1], [0, 0, 1, 1], [], []>} : vector<2x1280xf32>, vector<1280x256xf32>, vector<2x256xf32> -> vector<2x256xf32>
      %c0_15 = arith.constant 0 : index
      %c0_16 = arith.constant 0 : index
      %17 = vector.load %arg4[%c0_15, %c0_16] : memref<1x256xf32, #tpu.memory_space<vmem>>, vector<1x256xf32>
      %18 = vector.broadcast %17 : vector<1x256xf32> to vector<2x256xf32>
      %19 = arith.addf %16, %18 : vector<2x256xf32>
      %cst_17 = arith.constant 0.000000e+00 : f32
      %20 = vector.broadcast %cst_17 : f32 to vector<2x256xf32>
      %21 = arith.maximumf %19, %20 : vector<2x256xf32>
      %c0_18 = arith.constant 0 : index
      %c0_19 = arith.constant 0 : index
      %22 = vector.load %arg5[%c0_18, %c0_19] : memref<256x256xf32, #tpu.memory_space<vmem>>, vector<256x256xf32>
      %cst_20 = arith.constant dense<0.000000e+00> : vector<2x256xf32>
      %23 = tpu.matmul %21, %22, %cst_20 {dimension_numbers = #tpu.dot_dimension_numbers<[1], [0], [0], [1], [0, 0, 1, 1], [], []>} : vector<2x256xf32>, vector<256x256xf32>, vector<2x256xf32> -> vector<2x256xf32>
      %c0_21 = arith.constant 0 : index
      %c0_22 = arith.constant 0 : index
      %24 = vector.load %arg6[%c0_21, %c0_22] : memref<1x256xf32, #tpu.memory_space<vmem>>, vector<1x256xf32>
      %25 = vector.broadcast %24 : vector<1x256xf32> to vector<2x256xf32>
      %26 = arith.addf %23, %25 : vector<2x256xf32>
      %c0_23 = arith.constant 0 : index
      %c0_24 = arith.constant 0 : index
      %27 = vector.load %arg9[%c0_23, %c0_24] : memref<2x256xf32, #tpu.memory_space<vmem>>, vector<2x256xf32>
      tpu.vector_store %arg9[%c0_23, %c0_24], %26 {strides = array<i32>} : memref<2x256xf32, #tpu.memory_space<vmem>>, vector<2x256xf32>,
      %c0_25 = arith.constant 0 : index
      %c0_26 = arith.constant 0 : index
      %28 = vector.load %arg7[%c0_25, %c0_26] : memref<256x128xf32, #tpu.memory_space<vmem>>, vector<256x128xf32>
      %cst_27 = arith.constant dense<0.000000e+00> : vector<2x128xf32>
      %29 = tpu.matmul %21, %28, %cst_27 {dimension_numbers = #tpu.dot_dimension_numbers<[1], [0], [0], [1], [0, 0, 1, 1], [], []>} : vector<2x256xf32>, vector<256x128xf32>, vector<2x128xf32> -> vector<2x128xf32>
      %c0_28 = arith.constant 0 : index
      %c0_29 = arith.constant 0 : index
      %30 = vector.load %arg8[%c0_28, %c0_29] : memref<1x128xf32, #tpu.memory_space<vmem>>, vector<1x128xf32>
      %31 = vector.broadcast %30 : vector<1x128xf32> to vector<2x128xf32>
      %32 = arith.addf %29, %31 : vector<2x128xf32>
      %c0_30 = arith.constant 0 : index
      %c0_31 = arith.constant 0 : index
      %33 = vector.load %arg10[%c0_30, %c0_31] : memref<2x128xf32, #tpu.memory_space<vmem>>, vector<2x128xf32>
      tpu.vector_store %arg10[%c0_30, %c0_31], %32 {strides = array<i32>} : memref<2x128xf32, #tpu.memory_space<vmem>>, vector<2x128xf32>,
    } else {
    }
    return
  }
  func.func @transform_0(%arg0: i32, %arg1: i32) -> (i32, i32, i32) {
    %c0_i32 = arith.constant 0 : i32
    %c0_i32_0 = arith.constant 0 : i32
    return %arg0, %arg1, %c0_i32 : i32, i32, i32
  }
  func.func @transform_1(%arg0: i32, %arg1: i32) -> (i32, i32) {
    %c0_i32 = arith.constant 0 : i32
    %c0_i32_0 = arith.constant 0 : i32
    %c0_i32_1 = arith.constant 0 : i32
    return %c0_i32, %c0_i32_0 : i32, i32
  }
  func.func @transform_2(%arg0: i32, %arg1: i32) -> (i32, i32) {
    %c0_i32 = arith.constant 0 : i32
    %c0_i32_0 = arith.constant 0 : i32
    %c0_i32_1 = arith.constant 0 : i32
    return %c0_i32, %c0_i32_0 : i32, i32
  }
  func.func @transform_3(%arg0: i32, %arg1: i32) -> (i32, i32) {
    %c0_i32 = arith.constant 0 : i32
    %c0_i32_0 = arith.constant 0 : i32
    %c0_i32_1 = arith.constant 0 : i32
    return %c0_i32, %c0_i32_0 : i32, i32
  }
  func.func @transform_4(%arg0: i32, %arg1: i32) -> (i32, i32) {
    %c0_i32 = arith.constant 0 : i32
    %c0_i32_0 = arith.constant 0 : i32
    %c0_i32_1 = arith.constant 0 : i32
    return %c0_i32, %c0_i32_0 : i32, i32
  }
  func.func @transform_5(%arg0: i32, %arg1: i32) -> (i32, i32) {
    %c0_i32 = arith.constant 0 : i32
    %c0_i32_0 = arith.constant 0 : i32
    %c0_i32_1 = arith.constant 0 : i32
    return %c0_i32, %c0_i32_0 : i32, i32
  }
  func.func @transform_6(%arg0: i32, %arg1: i32) -> (i32, i32) {
    %c0_i32 = arith.constant 0 : i32
    %c0_i32_0 = arith.constant 0 : i32
    %c0_i32_1 = arith.constant 0 : i32
    return %c0_i32, %c0_i32_0 : i32, i32
  }
  func.func @transform_7(%arg0: i32, %arg1: i32) -> (i32, i32) {
    %c0_i32 = arith.constant 0 : i32
    %c0_i32_0 = arith.constant 0 : i32
    return %arg0, %c0_i32 : i32, i32
  }
  func.func @transform_8(%arg0: i32, %arg1: i32) -> (i32, i32) {
    %c0_i32 = arith.constant 0 : i32
    %c0_i32_0 = arith.constant 0 : i32
    return %arg0, %c0_i32 : i32, i32
  }
}

</mosaic_0001>

<llo_original>
// kernel: tpu_custom_call.1
$region0: #{tpu_custom_call.1}
  #allocation0 [shape = 'u32[]', space=smem, size = 0x4, offset = 0x4, fixed_abs, tag = 'smem constant byte address 0x4 - core index']
  #allocation1 [shape = 'u32[144,128]{1,0:T(1,128)}', space=vmem, size = 0x12000, scoped, tag = 'internal scratch']
  #allocation2 [shape = 'f32[2,1280]{1,0:T(2,128)}', space=vmem, size = 0x2800, scoped, tag = 'scratch operand']
  %s0 = inlined_call_operand.hbm [shape: bf16[2,16,1280], index: 0, kind: input, shape index: {}]
  %s1 = inlined_call_operand.hbm [shape: f32[1280,256], index: 1, kind: input, shape index: {}]
  %s2 = inlined_call_operand.hbm [shape: f32[1,256], index: 2, kind: input, shape index: {}]
  %s3 = inlined_call_operand.hbm [shape: f32[256,256], index: 3, kind: input, shape index: {}]
  %s4 = inlined_call_operand.hbm [shape: f32[1,256], index: 4, kind: input, shape index: {}]
  %s5 = inlined_call_operand.hbm [shape: f32[256,128], index: 5, kind: input, shape index: {}]
  %s6 = inlined_call_operand.hbm [shape: f32[1,128], index: 6, kind: input, shape index: {}]
  %s7 = inlined_call_operand.hbm [shape: f32[2,256], index: 7, kind: output, shape index: {0}]
  %s8 = inlined_call_operand.hbm [shape: f32[2,128], index: 8, kind: output, shape index: {1}]
  %9 = xla_tuple %s7, %s8
  %s10 = sld [smem:[#allocation0]]
  $region82: #{tpu_custom_call.1} parent=0
    _
  %s12 = ssub.s32 1, %s10
  %s13 = scalar_select 0, %s12, %s10
  $region1: #{tpu_custom_call.1} parent=0
    #allocation3 [shape = 'u8[81920]{0}', space=vmem, size = 0x14000, scoped, tag = 'input window, operand 0, single buffered']
    #allocation4 [shape = 's32[1]{0}', space=sflag, size = 0x4, scoped, tag = 'scoped memory for tpu_custom_call.1']
    #allocation5 [shape = 's32[1]{0}', space=sflag, size = 0x4, scoped, tag = 'scoped memory for tpu_custom_call.1']
    #allocation6 [shape = 'u8[1310720]{0}', space=vmem, size = 0x140000, scoped, tag = 'input window, operand 1, single buffered']
    #allocation7 [shape = 's32[1]{0}', space=sflag, size = 0x4, scoped, tag = 'scoped memory for tpu_custom_call.1']
    #allocation8 [shape = 'u8[1024]{0}', space=vmem, size = 0x400, scoped, tag = 'input window, operand 2, single buffered']
    #allocation9 [shape = 'u8[262144]{0}', space=vmem, size = 0x40000, scoped, tag = 'input window, operand 3, single buffered']
    #allocation10 [shape = 's32[1]{0}', space=sflag, size = 0x4, scoped, tag = 'scoped memory for tpu_custom_call.1']
    #allocation11 [shape = 'u8[1024]{0}', space=vmem, size = 0x400, scoped, tag = 'input window, operand 4, single buffered']
    #allocation12 [shape = 'u8[131072]{0}', space=vmem, size = 0x20000, scoped, tag = 'input window, operand 5, single buffered']
    #allocation13 [shape = 's32[1]{0}', space=sflag, size = 0x4, scoped, tag = 'scoped memory for tpu_custom_call.1']
    #allocation14 [shape = 'u8[512]{0}', space=vmem, size = 0x400, scoped, tag = 'input window, operand 6, single buffered']
    #allocation15 [shape = 'u8[2048]{0}', space=vmem, size = 0x800, scoped, tag = 'output window, operand 0, single buffered']
    #allocation16 [shape = 'u8[1024]{0}', space=vmem, size = 0x400, scoped, tag = 'output window, operand 1, single buffered']
    #allocation17 [shape = 's32[1]{0}', space=sflag, size = 0x4, scoped, tag = 'scoped memory for tpu_custom_call.1']
    %14 = vsyncpa [#allocation4], 0
    %15 = vsyncpa [#allocation7], 0
    %16 = vsyncpa [#allocation10], 0
    %17 = vsyncpa [#allocation13], 0
    %18 = vsyncpa [#allocation5], 0
    %19 = vsyncpa [#allocation17], 0
    // Predicated region
    $region2: #{tpu_custom_call.1} parent=1 // pred_check
      _
    $region3: #{tpu_custom_call.1} parent=1 // pred_check_branch
      %21 = sbr.rel (0) target = $region5
    $region4: #{tpu_custom_call.1} parent=1 // pred_region
      %s23 = ssub.s32 2560, 2560
      %24 = vsyncadd [#allocation4], %s23
      %s25 = sshll.u32 [#allocation3], 4
      %s26 = int_to_ptr.vmem [resolvable:$true] %s25
      %31 = dma.hbm_to_vmem [thread:$0]  %s0, 2560, %s26, [#allocation4], 640, 640, 40
    $region5: #{tpu_custom_call.1} parent=1 // pred_fallthru
      _
    // Predicated region
    $region6: #{tpu_custom_call.1} parent=1 // pred_check
      _
    $region7: #{tpu_custom_call.1} parent=1 // pred_check_branch
      %33 = sbr.rel (0) target = $region9
    $region8: #{tpu_custom_call.1} parent=1 // pred_region
      %s35 = ssub.s32 40960, 40960
      %36 = vsyncadd [#allocation7], %s35
      %s37 = sshll.u32 [#allocation6], 4
      %s38 = int_to_ptr.vmem [resolvable:$true] %s37
      %43 = dma.hbm_to_vmem [thread:$0]  %s1, 40960, %s38, [#allocation7], 256, 256, 16
    $region9: #{tpu_custom_call.1} parent=1 // pred_fallthru
      _
    // Predicated region
    $region10: #{tpu_custom_call.1} parent=1 // pred_check
      _
    $region11: #{tpu_custom_call.1} parent=1 // pred_check_branch
      %45 = sbr.rel (0) target = $region13
    $region12: #{tpu_custom_call.1} parent=1 // pred_region
      %s47 = ssub.s32 32, 32
      %48 = vsyncadd [#allocation7], %s47
      %s50 = sshll.u32 [#allocation8], 4
      %s51 = int_to_ptr.vmem [resolvable:$true] %s50
      %53 = dma.hbm_to_vmem [thread:$0]  %s2, 32, %s51, [#allocation7]
    $region13: #{tpu_custom_call.1} parent=1 // pred_fallthru
      _
    // Predicated region
    $region14: #{tpu_custom_call.1} parent=1 // pred_check
      _
    $region15: #{tpu_custom_call.1} parent=1 // pred_check_branch
      %55 = sbr.rel (0) target = $region17
    $region16: #{tpu_custom_call.1} parent=1 // pred_region
      %s57 = ssub.s32 8192, 8192
      %58 = vsyncadd [#allocation10], %s57
      %s59 = sshll.u32 [#allocation9], 4
      %s60 = int_to_ptr.vmem [resolvable:$true] %s59
      %65 = dma.hbm_to_vmem [thread:$0]  %s3, 8192, %s60, [#allocation10], 256, 256, 16
    $region17: #{tpu_custom_call.1} parent=1 // pred_fallthru
      _
    // Predicated region
    $region18: #{tpu_custom_call.1} parent=1 // pred_check
      _
    $region19: #{tpu_custom_call.1} parent=1 // pred_check_branch
      %67 = sbr.rel (0) target = $region21
    $region20: #{tpu_custom_call.1} parent=1 // pred_region
      %s69 = ssub.s32 32, 32
      %70 = vsyncadd [#allocation10], %s69
      %s72 = sshll.u32 [#allocation11], 4
      %s73 = int_to_ptr.vmem [resolvable:$true] %s72
      %75 = dma.hbm_to_vmem [thread:$0]  %s4, 32, %s73, [#allocation10]
    $region21: #{tpu_custom_call.1} parent=1 // pred_fallthru
      _
    // Predicated region
    $region22: #{tpu_custom_call.1} parent=1 // pred_check
      _
    $region23: #{tpu_custom_call.1} parent=1 // pred_check_branch
      %77 = sbr.rel (0) target = $region25
    $region24: #{tpu_custom_call.1} parent=1 // pred_region
      %s79 = ssub.s32 4096, 4096
      %80 = vsyncadd [#allocation13], %s79
      %s81 = sshll.u32 [#allocation12], 4
      %s82 = int_to_ptr.vmem [resolvable:$true] %s81
      %87 = dma.hbm_to_vmem [thread:$0]  %s5, 4096, %s82, [#allocation13], 128, 128, 8
    $region25: #{tpu_custom_call.1} parent=1 // pred_fallthru
      _
    // Predicated region
    $region26: #{tpu_custom_call.1} parent=1 // pred_check
      _
    $region27: #{tpu_custom_call.1} parent=1 // pred_check_branch
      %89 = sbr.rel (0) target = $region29
    $region28: #{tpu_custom_call.1} parent=1 // pred_region
      %s91 = ssub.s32 16, 16
      %92 = vsyncadd [#allocation13], %s91
      %s94 = sshll.u32 [#allocation14], 4
      %s95 = int_to_ptr.vmem [resolvable:$true] %s94
      %97 = dma.hbm_to_vmem [thread:$0]  %s6, 16, %s95, [#allocation13]
    $region29: #{tpu_custom_call.1} parent=1 // pred_fallthru
      _
    // Predicated region
    $region30: #{tpu_custom_call.1} parent=1 // pred_check
      _
    $region31: #{tpu_custom_call.1} parent=1 // pred_check_branch
      %99 = sbr.rel (0) target = $region33
    $region32: #{tpu_custom_call.1} parent=1 // pred_region
      %100 = dma.done [#allocation4], 2560
    $region33: #{tpu_custom_call.1} parent=1 // pred_fallthru
      _
    // Predicated region
    $region34: #{tpu_custom_call.1} parent=1 // pred_check
      _
    $region35: #{tpu_custom_call.1} parent=1 // pred_check_branch
      %102 = sbr.rel (0) target = $region37
    $region36: #{tpu_custom_call.1} parent=1 // pred_region
      %103 = dma.done [#allocation7], 40960
    $region37: #{tpu_custom_call.1} parent=1 // pred_fallthru
      _
    // Predicated region
    $region38: #{tpu_custom_call.1} parent=1 // pred_check
      _
    $region39: #{tpu_custom_call.1} parent=1 // pred_check_branch
      %105 = sbr.rel (0) target = $region41
    $region40: #{tpu_custom_call.1} parent=1 // pred_region
      %106 = dma.done [#allocation7], 32
    $region41: #{tpu_custom_call.1} parent=1 // pred_fallthru
      _
    // Predicated region
    $region42: #{tpu_custom_call.1} parent=1 // pred_check
      _
    $region43: #{tpu_custom_call.1} parent=1 // pred_check_branch
      %108 = sbr.rel (0) target = $region45
    $region44: #{tpu_custom_call.1} parent=1 // pred_region
      %109 = dma.done [#allocation10], 8192
    $region45: #{tpu_custom_call.1} parent=1 // pred_fallthru
      _
    // Predicated region
    $region46: #{tpu_custom_call.1} parent=1 // pred_check
      _
    $region47: #{tpu_custom_call.1} parent=1 // pred_check_branch
      %111 = sbr.rel (0) target = $region49
    $region48: #{tpu_custom_call.1} parent=1 // pred_region
      %112 = dma.done [#allocation10], 32
    $region49: #{tpu_custom_call.1} parent=1 // pred_fallthru
      _
    // Predicated region
    $region50: #{tpu_custom_call.1} parent=1 // pred_check
      _
    $region51: #{tpu_custom_call.1} parent=1 // pred_check_branch
      %114 = sbr.rel (0) target = $region53
    $region52: #{tpu_custom_call.1} parent=1 // pred_region
      %115 = dma.done [#allocation13], 4096
    $region53: #{tpu_custom_call.1} parent=1 // pred_fallthru
      _
    // Predicated region
    $region54: #{tpu_custom_call.1} parent=1 // pred_check
      _
    $region55: #{tpu_custom_call.1} parent=1 // pred_check_branch
      %117 = sbr.rel (0) target = $region57
    $region56: #{tpu_custom_call.1} parent=1 // pred_region
      %118 = dma.done [#allocation13], 16
    $region57: #{tpu_custom_call.1} parent=1 // pred_fallthru
      _
    %p119 = scmp.eq.s32.totalorder 0, 0
    // Predicated region
    $region58: #{tpu_custom_call.1} parent=1 // pred_check
      %p120 = pneg %p119
    $region59: #{tpu_custom_call.1} parent=1 // pred_check_branch
      %122 = sbr.rel (%p120) target = $region61
    $region60: #{tpu_custom_call.1} parent=1 // pred_region
      %123 = vst [vmem:[#allocation2] sm:$0xff] 0.0
      %124 = vst [vmem:[#allocation2 + $0x8] sm:$0xff] 0.0
      %125 = vst [vmem:[#allocation2 + $0x10] sm:$0xf] 0.0
    $region61: #{tpu_custom_call.1} parent=1 // pred_fallthru
      _
    %v126 = vld [vmem:[#allocation3] sm:$0xff]
    %v127 = vld [vmem:[#allocation3 + $0x8] sm:$0xff]
    %v128 = vld [vmem:[#allocation3 + $0x10] sm:$0xff]
    %v129 = vld [vmem:[#allocation3 + $0x18] sm:$0xff]
    %v130 = vld [vmem:[#allocation3 + $0x20] sm:$0xff]
    %v131 = vld [vmem:[#allocation3 + $0x28] sm:$0xff]
    %v132 = vld [vmem:[#allocation3 + $0x30] sm:$0xff]
    %v133 = vld [vmem:[#allocation3 + $0x38] sm:$0xff]
    %v134 = vld [vmem:[#allocation3 + $0x40] sm:$0xff]
    %v135 = vld [vmem:[#allocation3 + $0x48] sm:$0xff]
    %v136 = vld [vmem:[#allocation3 + $0x50] sm:$0xff]
    %v137 = vld [vmem:[#allocation3 + $0x58] sm:$0xff]
    %v138 = vld [vmem:[#allocation3 + $0x60] sm:$0xff]
    %v139 = vld [vmem:[#allocation3 + $0x68] sm:$0xff]
    %v140 = vld [vmem:[#allocation3 + $0x70] sm:$0xff]
    %v141 = vld [vmem:[#allocation3 + $0x78] sm:$0xff]
    %v142 = vld [vmem:[#allocation3 + $0x80] sm:$0xff]
    %v143 = vld [vmem:[#allocation3 + $0x88] sm:$0xff]
    %v144 = vld [vmem:[#allocation3 + $0x90] sm:$0xff]
    %v145 = vld [vmem:[#allocation3 + $0x98] sm:$0xff]
    %v146 = vunpack.c.l.bf16 %v126
    %v147 = vunpack.c.h.bf16 %v126
    %v148 = vunpack.c.l.bf16 %v127
    %v149 = vunpack.c.h.bf16 %v127
    %v150 = vunpack.c.l.bf16 %v128
    %v151 = vunpack.c.h.bf16 %v128
    %v152 = vunpack.c.l.bf16 %v129
    %v153 = vunpack.c.h.bf16 %v129
    %v154 = vunpack.c.l.bf16 %v130
    %v155 = vunpack.c.h.bf16 %v130
    %v156 = vunpack.c.l.bf16 %v131
    %v157 = vunpack.c.h.bf16 %v131
    %v158 = vunpack.c.l.bf16 %v132
    %v159 = vunpack.c.h.bf16 %v132
    %v160 = vunpack.c.l.bf16 %v133
    %v161 = vunpack.c.h.bf16 %v133
    %v162 = vunpack.c.l.bf16 %v134
    %v163 = vunpack.c.h.bf16 %v134
    %v164 = vunpack.c.l.bf16 %v135
    %v165 = vunpack.c.h.bf16 %v135
    %v166 = vunpack.c.l.bf16 %v136
    %v167 = vunpack.c.h.bf16 %v136
    %v168 = vunpack.c.l.bf16 %v137
    %v169 = vunpack.c.h.bf16 %v137
    %v170 = vunpack.c.l.bf16 %v138
    %v171 = vunpack.c.h.bf16 %v138
    %v172 = vunpack.c.l.bf16 %v139
    %v173 = vunpack.c.h.bf16 %v139
    %v174 = vunpack.c.l.bf16 %v140
    %v175 = vunpack.c.h.bf16 %v140
    %v176 = vunpack.c.l.bf16 %v141
    %v177 = vunpack.c.h.bf16 %v141
    %v178 = vunpack.c.l.bf16 %v142
    %v179 = vunpack.c.h.bf16 %v142
    %v180 = vunpack.c.l.bf16 %v143
    %v181 = vunpack.c.h.bf16 %v143
    %v182 = vunpack.c.l.bf16 %v144
    %v183 = vunpack.c.h.bf16 %v144
    %v184 = vunpack.c.l.bf16 %v145
    %v185 = vunpack.c.h.bf16 %v145
    %v186 = vld [vmem:[#allocation2] sm:$0xff]
    %v187 = vld [vmem:[#allocation2 + $0x8] sm:$0xff]
    %v188 = vld [vmem:[#allocation2 + $0x10] sm:$0xf]
    %v189 = vadd.f32 %v146, %v156
    %v190 = vrot.slane %v189, 4
    %v191 = vadd.f32 %v189, %v190
    %v192 = vrot.slane %v191, 2
    %v193 = vadd.f32 %v191, %v192
    %v194 = vrot.slane %v193, 1
    %v195 = vadd.f32 %v193, %v194
    %v196 = vadd.f32 %v147, %v157
    %v197 = vrot.slane %v196, 4
    %v198 = vadd.f32 %v196, %v197
    %v199 = vrot.slane %v198, 2
    %v200 = vadd.f32 %v198, %v199
    %v201 = vrot.slane %v200, 1
    %v202 = vadd.f32 %v200, %v201
    %v203 = vadd.f32 %v148, %v158
    %v204 = vrot.slane %v203, 4
    %v205 = vadd.f32 %v203, %v204
    %v206 = vrot.slane %v205, 2
    %v207 = vadd.f32 %v205, %v206
    %v208 = vrot.slane %v207, 1
    %v209 = vadd.f32 %v207, %v208
    %v210 = vadd.f32 %v149, %v159
    %v211 = vrot.slane %v210, 4
    %v212 = vadd.f32 %v210, %v211
    %v213 = vrot.slane %v212, 2
    %v214 = vadd.f32 %v212, %v213
    %v215 = vrot.slane %v214, 1
    %v216 = vadd.f32 %v214, %v215
    %v217 = vadd.f32 %v150, %v160
    %v218 = vrot.slane %v217, 4
    %v219 = vadd.f32 %v217, %v218
    %v220 = vrot.slane %v219, 2
    %v221 = vadd.f32 %v219, %v220
    %v222 = vrot.slane %v221, 1
    %v223 = vadd.f32 %v221, %v222
    %v224 = vadd.f32 %v151, %v161
    %v225 = vrot.slane %v224, 4
    %v226 = vadd.f32 %v224, %v225
    %v227 = vrot.slane %v226, 2
    %v228 = vadd.f32 %v226, %v227
    %v229 = vrot.slane %v228, 1
    %v230 = vadd.f32 %v228, %v229
    %v231 = vadd.f32 %v152, %v162
    %v232 = vrot.slane %v231, 4
    %v233 = vadd.f32 %v231, %v232
    %v234 = vrot.slane %v233, 2
    %v235 = vadd.f32 %v233, %v234
    %v236 = vrot.slane %v235, 1
    %v237 = vadd.f32 %v235, %v236
    %v238 = vadd.f32 %v153, %v163
    %v239 = vrot.slane %v238, 4
    %v240 = vadd.f32 %v238, %v239
    %v241 = vrot.slane %v240, 2
    %v242 = vadd.f32 %v240, %v241
    %v243 = vrot.slane %v242, 1
    %v244 = vadd.f32 %v242, %v243
    %v245 = vadd.f32 %v154, %v164
    %v246 = vrot.slane %v245, 4
    %v247 = vadd.f32 %v245, %v246
    %v248 = vrot.slane %v247, 2
    %v249 = vadd.f32 %v247, %v248
    %v250 = vrot.slane %v249, 1
    %v251 = vadd.f32 %v249, %v250
    %v252 = vadd.f32 %v155, %v165
    %v253 = vrot.slane %v252, 4
    %v254 = vadd.f32 %v252, %v253
    %v255 = vrot.slane %v254, 2
    %v256 = vadd.f32 %v254, %v255
    %v257 = vrot.slane %v256, 1
    %v258 = vadd.f32 %v256, %v257
    %v259 = vadd.f32 %v166, %v176
    %v260 = vrot.slane %v259, 4
    %v261 = vadd.f32 %v259, %v260
    %v262 = vrot.slane %v261, 2
    %v263 = vadd.f32 %v261, %v262
    %v264 = vrot.slane %v263, 1
    %v265 = vadd.f32 %v263, %v264
    %v266 = vadd.f32 %v167, %v177
    %v267 = vrot.slane %v266, 4
    %v268 = vadd.f32 %v266, %v267
    %v269 = vrot.slane %v268, 2
    %v270 = vadd.f32 %v268, %v269
    %v271 = vrot.slane %v270, 1
    %v272 = vadd.f32 %v270, %v271
    %v273 = vadd.f32 %v168, %v178
    %v274 = vrot.slane %v273, 4
    %v275 = vadd.f32 %v273, %v274
    %v276 = vrot.slane %v275, 2
    %v277 = vadd.f32 %v275, %v276
    %v278 = vrot.slane %v277, 1
    %v279 = vadd.f32 %v277, %v278
    %v280 = vadd.f32 %v169, %v179
    %v281 = vrot.slane %v280, 4
    %v282 = vadd.f32 %v280, %v281
    %v283 = vrot.slane %v282, 2
    %v284 = vadd.f32 %v282, %v283
    %v285 = vrot.slane %v284, 1
    %v286 = vadd.f32 %v284, %v285
    %v287 = vadd.f32 %v170, %v180
    %v288 = vrot.slane %v287, 4
    %v289 = vadd.f32 %v287, %v288
    %v290 = vrot.slane %v289, 2
    %v291 = vadd.f32 %v289, %v290
    %v292 = vrot.slane %v291, 1
    %v293 = vadd.f32 %v291, %v292
    %v294 = vadd.f32 %v171, %v181
    %v295 = vrot.slane %v294, 4
    %v296 = vadd.f32 %v294, %v295
    %v297 = vrot.slane %v296, 2
    %v298 = vadd.f32 %v296, %v297
    %v299 = vrot.slane %v298, 1
    %v300 = vadd.f32 %v298, %v299
    %v301 = vadd.f32 %v172, %v182
    %v302 = vrot.slane %v301, 4
    %v303 = vadd.f32 %v301, %v302
    %v304 = vrot.slane %v303, 2
    %v305 = vadd.f32 %v303, %v304
    %v306 = vrot.slane %v305, 1
    %v307 = vadd.f32 %v305, %v306
    %v308 = vadd.f32 %v173, %v183
    %v309 = vrot.slane %v308, 4
    %v310 = vadd.f32 %v308, %v309
    %v311 = vrot.slane %v310, 2
    %v312 = vadd.f32 %v310, %v311
    %v313 = vrot.slane %v312, 1
    %v314 = vadd.f32 %v312, %v313
    %v315 = vadd.f32 %v174, %v184
    %v316 = vrot.slane %v315, 4
    %v317 = vadd.f32 %v315, %v316
    %v318 = vrot.slane %v317, 2
    %v319 = vadd.f32 %v317, %v318
    %v320 = vrot.slane %v319, 1
    %v321 = vadd.f32 %v319, %v320
    %v322 = vadd.f32 %v175, %v185
    %v323 = vrot.slane %v322, 4
    %v324 = vadd.f32 %v322, %v323
    %v325 = vrot.slane %v324, 2
    %v326 = vadd.f32 %v324, %v325
    %v327 = vrot.slane %v326, 1
    %v328 = vadd.f32 %v326, %v327
    %v349 = vcombine.low %v195, %v202
    %v350 = vcombine.low %v209, %v216
    %v352 = vunpack.c.l.s4 1983009808
    %v353 = vunpack.c.0.s8 %v352
    %v354 = vlaneseq
    %v355 = vshrl.u32 %v354, 7
    %v356 = vsub.s32 %v353, %v355
    %v357 = vrot.slane %v349, %v356
    %v359 = vunpack.c.l.s4 1983009808
    %v360 = vunpack.c.0.s8 %v359
    %v361 = vlaneseq
    %v362 = vshrl.u32 %v361, 7
    %v363 = vsub.s32 %v360, %v362
    %v364 = vrot.slane %v350, %v363
    %v365 = vcombine.low %v357, %v364
    %v366 = vcombine.low %v223, %v230
    %v367 = vcombine.low %v237, %v244
    %v369 = vunpack.c.l.s4 1983009808
    %v370 = vunpack.c.0.s8 %v369
    %v371 = vlaneseq
    %v372 = vshrl.u32 %v371, 7
    %v373 = vsub.s32 %v370, %v372
    %v374 = vrot.slane %v366, %v373
    %v376 = vunpack.c.l.s4 1983009808
    %v377 = vunpack.c.0.s8 %v376
    %v378 = vlaneseq
    %v379 = vshrl.u32 %v378, 7
    %v380 = vsub.s32 %v377, %v379
    %v381 = vrot.slane %v367, %v380
    %v382 = vcombine.low %v374, %v381
    %v383 = vcombine.low %v251, %v258
    %v385 = vunpack.c.l.s4 1983009808
    %v386 = vunpack.c.0.s8 %v385
    %v387 = vlaneseq
    %v388 = vshrl.u32 %v387, 7
    %v389 = vsub.s32 %v386, %v388
    %v390 = vrot.slane %v383, %v389
    %v391 = vcombine.low %v265, %v272
    %v392 = vcombine.low %v279, %v286
    %v394 = vunpack.c.l.s4 1983009808
    %v395 = vunpack.c.0.s8 %v394
    %v396 = vlaneseq
    %v397 = vshrl.u32 %v396, 7
    %v398 = vsub.s32 %v395, %v397
    %v399 = vrot.slane %v391, %v398
    %v401 = vunpack.c.l.s4 1983009808
    %v402 = vunpack.c.0.s8 %v401
    %v403 = vlaneseq
    %v404 = vshrl.u32 %v403, 7
    %v405 = vsub.s32 %v402, %v404
    %v406 = vrot.slane %v392, %v405
    %v407 = vcombine.low %v399, %v406
    %v408 = vcombine.low %v293, %v300
    %v409 = vcombine.low %v307, %v314
    %v411 = vunpack.c.l.s4 1983009808
    %v412 = vunpack.c.0.s8 %v411
    %v413 = vlaneseq
    %v414 = vshrl.u32 %v413, 7
    %v415 = vsub.s32 %v412, %v414
    %v416 = vrot.slane %v408, %v415
    %v418 = vunpack.c.l.s4 1983009808
    %v419 = vunpack.c.0.s8 %v418
    %v420 = vlaneseq
    %v421 = vshrl.u32 %v420, 7
    %v422 = vsub.s32 %v419, %v421
    %v423 = vrot.slane %v409, %v422
    %v424 = vcombine.low %v416, %v423
    %v425 = vcombine.low %v321, %v328
    %v427 = vunpack.c.l.s4 1983009808
    %v428 = vunpack.c.0.s8 %v427
    %v429 = vlaneseq
    %v430 = vshrl.u32 %v429, 7
    %v431 = vsub.s32 %v428, %v430
    %v432 = vrot.slane %v425, %v431
    %vm433 = vcmask 1044484
    %v434 = vsel %vm433, %v365, %v365
    %vm435 = vcmask 1046534
    %v436 = vsel %vm435, %v365, %v434
    %v437 = vrot.slane %v407, 7
    %vm438 = vcmask 1041409
    %v439 = vsel %vm438, %v437, %v436
    %vm440 = vcmask 1043459
    %v441 = vsel %vm440, %v437, %v439
    %vm442 = vcmask 1045509
    %v443 = vsel %vm442, %v437, %v441
    %vm444 = vcmask 1047559
    %v445 = vsel %vm444, %v437, %v443
    %v446 = vsel %vm433, %v382, %v382
    %v447 = vsel %vm435, %v382, %v446
    %v448 = vrot.slane %v424, 7
    %v449 = vsel %vm438, %v448, %v447
    %v450 = vsel %vm440, %v448, %v449
    %v451 = vsel %vm442, %v448, %v450
    %v452 = vsel %vm444, %v448, %v451
    %v453 = vsel %vm433, %v390, %v390
    %v454 = vsel %vm435, %v390, %v453
    %v455 = vrot.slane %v432, 7
    %v456 = vsel %vm438, %v455, %v454
    %v457 = vsel %vm440, %v455, %v456
    %v458 = vsel %vm442, %v455, %v457
    %v459 = vsel %vm444, %v455, %v458
    %v463 = vadd.f32 %v186, %v445
    %v464 = vadd.f32 %v187, %v452
    %v465 = vadd.f32 %v188, %v459
    %466 = vst [vmem:[#allocation2] sm:$0xff] %v463
    %467 = vst [vmem:[#allocation2 + $0x8] sm:$0xff] %v464
    %468 = vst [vmem:[#allocation2 + $0x10] sm:$0xf] %v465
    // Predicated region
    $region62: #{tpu_custom_call.1} parent=1 // pred_check
      %p469 = pneg %p119
    $region63: #{tpu_custom_call.1} parent=1 // pred_check_branch
      %471 = sbr.rel (%p469) target = $region65
    $region64: #{tpu_custom_call.1} parent=1 // pred_region
      %v472 = vld [vmem:[#allocation2] sm:$0xff]
      %v473 = vld [vmem:[#allocation2 + $0x8] sm:$0xff]
      %v474 = vld [vmem:[#allocation2 + $0x10] sm:$0xf]
      %v475 = vmul.f32 %v472, 0.0625
      %v476 = vmul.f32 %v473, 0.0625
      %v477 = vmul.f32 %v474, 0.0625
      %v478 = vld [vmem:[#allocation6] sm:$0xff]
      %v479 = vld [vmem:[#allocation6 + $0x8] sm:$0xff]
      %v480 = vld [vmem:[#allocation6 + $0x10] sm:$0xff]
      %v481 = vld [vmem:[#allocation6 + $0x18] sm:$0xff]
      %v482 = vld [vmem:[#allocation6 + $0x20] sm:$0xff]
      %v483 = vld [vmem:[#allocation6 + $0x28] sm:$0xff]
      %v484 = vld [vmem:[#allocation6 + $0x30] sm:$0xff]
      %v485 = vld [vmem:[#allocation6 + $0x38] sm:$0xff]
      %v486 = vld [vmem:[#allocation6 + $0x40] sm:$0xff]
      %v487 = vld [vmem:[#allocation6 + $0x48] sm:$0xff]
      %v488 = vld [vmem:[#allocation6 + $0x50] sm:$0xff]
      %v489 = vld [vmem:[#allocation6 + $0x58] sm:$0xff]
      %v490 = vld [vmem:[#allocation6 + $0x60] sm:$0xff]
      %v491 = vld [vmem:[#allocation6 + $0x68] sm:$0xff]
      %v492 = vld [vmem:[#allocation6 + $0x70] sm:$0xff]
      %v493 = vld [vmem:[#allocation6 + $0x78] sm:$0xff]
      %v494 = vld [vmem:[#allocation6 + $0x80] sm:$0xff]
      %v495 = vld [vmem:[#allocation6 + $0x88] sm:$0xff]
      %v496 = vld [vmem:[#allocation6 + $0x90] sm:$0xff]
      %v497 = vld [vmem:[#allocation6 + $0x98] sm:$0xff]
      %v498 = vld [vmem:[#allocation6 + $0xa0] sm:$0xff]
      %v499 = vld [vmem:[#allocation6 + $0xa8] sm:$0xff]
      %v500 = vld [vmem:[#allocation6 + $0xb0] sm:$0xff]
      %v501 = vld [vmem:[#allocation6 + $0xb8] sm:$0xff]
      %v502 = vld [vmem:[#allocation6 + $0xc0] sm:$0xff]
      %v503 = vld [vmem:[#allocation6 + $0xc8] sm:$0xff]
      %v504 = vld [vmem:[#allocation6 + $0xd0] sm:$0xff]
      %v505 = vld [vmem:[#allocation6 + $0xd8] sm:$0xff]
      %v506 = vld [vmem:[#allocation6 + $0xe0] sm:$0xff]
      %v507 = vld [vmem:[#allocation6 + $0xe8] sm:$0xff]
      %v508 = vld [vmem:[#allocation6 + $0xf0] sm:$0xff]
      %v509 = vld [vmem:[#allocation6 + $0xf8] sm:$0xff]
      %v510 = vld [vmem:[#allocation6 + $0x100] sm:$0xff]
      %v511 = vld [vmem:[#allocation6 + $0x108] sm:$0xff]
      %v512 = vld [vmem:[#allocation6 + $0x110] sm:$0xff]
      %v513 = vld [vmem:[#allocation6 + $0x118] sm:$0xff]
      %v514 = vld [vmem:[#allocation6 + $0x120] sm:$0xff]
      %v515 = vld [vmem:[#allocation6 + $0x128] sm:$0xff]
      %v516 = vld [vmem:[#allocation6 + $0x130] sm:$0xff]
      %v517 = vld [vmem:[#allocation6 + $0x138] sm:$0xff]
      %v518 = vld [vmem:[#allocation6 + $0x140] sm:$0xff]
      %v519 = vld [vmem:[#allocation6 + $0x148] sm:$0xff]
      %v520 = vld [vmem:[#allocation6 + $0x150] sm:$0xff]
      %v521 = vld [vmem:[#allocation6 + $0x158] sm:$0xff]
      %v522 = vld [vmem:[#allocation6 + $0x160] sm:$0xff]
      %v523 = vld [vmem:[#allocation6 + $0x168] sm:$0xff]
      %v524 = vld [vmem:[#allocation6 + $0x170] sm:$0xff]
      %v525 = vld [vmem:[#allocation6 + $0x178] sm:$0xff]
      %v526 = vld [vmem:[#allocation6 + $0x180] sm:$0xff]
      %v527 = vld [vmem:[#allocation6 + $0x188] sm:$0xff]
      %v528 = vld [vmem:[#allocation6 + $0x190] sm:$0xff]
      %v529 = vld [vmem:[#allocation6 + $0x198] sm:$0xff]
      %v530 = vld [vmem:[#allocation6 + $0x1a0] sm:$0xff]
      %v531 = vld [vmem:[#allocation6 + $0x1a8] sm:$0xff]
      %v532 = vld [vmem:[#allocation6 + $0x1b0] sm:$0xff]
      %v533 = vld [vmem:[#allocation6 + $0x1b8] sm:$0xff]
      %v534 = vld [vmem:[#allocation6 + $0x1c0] sm:$0xff]
      %v535 = vld [vmem:[#allocation6 + $0x1c8] sm:$0xff]
      %v536 = vld [vmem:[#allocation6 + $0x1d0] sm:$0xff]
      %v537 = vld [vmem:[#allocation6 + $0x1d8] sm:$0xff]
      %v538 = vld [vmem:[#allocation6 + $0x1e0] sm:$0xff]
      %v539 = vld [vmem:[#allocation6 + $0x1e8] sm:$0xff]
      %v540 = vld [vmem:[#allocation6 + $0x1f0] sm:$0xff]
      %v541 = vld [vmem:[#allocation6 + $0x1f8] sm:$0xff]
      %v542 = vld [vmem:[#allocation6 + $0x200] sm:$0xff]
      %v543 = vld [vmem:[#allocation6 + $0x208] sm:$0xff]
      %v544 = vld [vmem:[#allocation6 + $0x210] sm:$0xff]
      %v545 = vld [vmem:[#allocation6 + $0x218] sm:$0xff]
      %v546 = vld [vmem:[#allocation6 + $0x220] sm:$0xff]
      %v547 = vld [vmem:[#allocation6 + $0x228] sm:$0xff]
      %v548 = vld [vmem:[#allocation6 + $0x230] sm:$0xff]
      %v549 = vld [vmem:[#allocation6 + $0x238] sm:$0xff]
      %v550 = vld [vmem:[#allocation6 + $0x240] sm:$0xff]
      %v551 = vld [vmem:[#allocation6 + $0x248] sm:$0xff]
      %v552 = vld [vmem:[#allocation6 + $0x250] sm:$0xff]
      %v553 = vld [vmem:[#allocation6 + $0x258] sm:$0xff]
      %v554 = vld [vmem:[#allocation6 + $0x260] sm:$0xff]
      %v555 = vld [vmem:[#allocation6 + $0x268] sm:$0xff]
      %v556 = vld [vmem:[#allocation6 + $0x270] sm:$0xff]
      %v557 = vld [vmem:[#allocation6 + $0x278] sm:$0xff]
      %v558 = vld [vmem:[#allocation6 + $0x280] sm:$0xff]
      %v559 = vld [vmem:[#allocation6 + $0x288] sm:$0xff]
      %v560 = vld [vmem:[#allocation6 + $0x290] sm:$0xff]
      %v561 = vld [vmem:[#allocation6 + $0x298] sm:$0xff]
      %v562 = vld [vmem:[#allocation6 + $0x2a0] sm:$0xff]
      %v563 = vld [vmem:[#allocation6 + $0x2a8] sm:$0xff]
      %v564 = vld [vmem:[#allocation6 + $0x2b0] sm:$0xff]
      %v565 = vld [vmem:[#allocation6 + $0x2b8] sm:$0xff]
      %v566 = vld [vmem:[#allocation6 + $0x2c0] sm:$0xff]
      %v567 = vld [vmem:[#allocation6 + $0x2c8] sm:$0xff]
      %v568 = vld [vmem:[#allocation6 + $0x2d0] sm:$0xff]
      %v569 = vld [vmem:[#allocation6 + $0x2d8] sm:$0xff]
      %v570 = vld [vmem:[#allocation6 + $0x2e0] sm:$0xff]
      %v571 = vld [vmem:[#allocation6 + $0x2e8] sm:$0xff]
      %v572 = vld [vmem:[#allocation6 + $0x2f0] sm:$0xff]
      %v573 = vld [vmem:[#allocation6 + $0x2f8] sm:$0xff]
      %v574 = vld [vmem:[#allocation6 + $0x300] sm:$0xff]
      %v575 = vld [vmem:[#allocation6 + $0x308] sm:$0xff]
      %v576 = vld [vmem:[#allocation6 + $0x310] sm:$0xff]
      %v577 = vld [vmem:[#allocation6 + $0x318] sm:$0xff]
      %v578 = vld [vmem:[#allocation6 + $0x320] sm:$0xff]
      %v579 = vld [vmem:[#allocation6 + $0x328] sm:$0xff]
      %v580 = vld [vmem:[#allocation6 + $0x330] sm:$0xff]
      %v581 = vld [vmem:[#allocation6 + $0x338] sm:$0xff]
      %v582 = vld [vmem:[#allocation6 + $0x340] sm:$0xff]
      %v583 = vld [vmem:[#allocation6 + $0x348] sm:$0xff]
      %v584 = vld [vmem:[#allocation6 + $0x350] sm:$0xff]
      %v585 = vld [vmem:[#allocation6 + $0x358] sm:$0xff]
      %v586 = vld [vmem:[#allocation6 + $0x360] sm:$0xff]
      %v587 = vld [vmem:[#allocation6 + $0x368] sm:$0xff]
      %v588 = vld [vmem:[#allocation6 + $0x370] sm:$0xff]
      %v589 = vld [vmem:[#allocation6 + $0x378] sm:$0xff]
      %v590 = vld [vmem:[#allocation6 + $0x380] sm:$0xff]
      %v591 = vld [vmem:[#allocation6 + $0x388] sm:$0xff]
      %v592 = vld [vmem:[#allocation6 + $0x390] sm:$0xff]
      %v593 = vld [vmem:[#allocation6 + $0x398] sm:$0xff]
      %v594 = vld [vmem:[#allocation6 + $0x3a0] sm:$0xff]
      %v595 = vld [vmem:[#allocation6 + $0x3a8] sm:$0xff]
      %v596 = vld [vmem:[#allocation6 + $0x3b0] sm:$0xff]
      %v597 = vld [vmem:[#allocation6 + $0x3b8] sm:$0xff]
      %v598 = vld [vmem:[#allocation6 + $0x3c0] sm:$0xff]
      %v599 = vld [vmem:[#allocation6 + $0x3c8] sm:$0xff]
      %v600 = vld [vmem:[#allocation6 + $0x3d0] sm:$0xff]
      %v601 = vld [vmem:[#allocation6 + $0x3d8] sm:$0xff]
      %v602 = vld [vmem:[#allocation6 + $0x3e0] sm:$0xff]
      %v603 = vld [vmem:[#allocation6 + $0x3e8] sm:$0xff]
      %v604 = vld [vmem:[#allocation6 + $0x3f0] sm:$0xff]
      %v605 = vld [vmem:[#allocation6 + $0x3f8] sm:$0xff]
      %v606 = vld [vmem:[#allocation6 + $0x400] sm:$0xff]
      %v607 = vld [vmem:[#allocation6 + $0x408] sm:$0xff]
      %v608 = vld [vmem:[#allocation6 + $0x410] sm:$0xff]
      %v609 = vld [vmem:[#allocation6 + $0x418] sm:$0xff]
      %v610 = vld [vmem:[#allocation6 + $0x420] sm:$0xff]
      %v611 = vld [vmem:[#allocation6 + $0x428] sm:$0xff]
      %v612 = vld [vmem:[#allocation6 + $0x430] sm:$0xff]
      %v613 = vld [vmem:[#allocation6 + $0x438] sm:$0xff]
      %v614 = vld [vmem:[#allocation6 + $0x440] sm:$0xff]
      %v615 = vld [vmem:[#allocation6 + $0x448] sm:$0xff]
      %v616 = vld [vmem:[#allocation6 + $0x450] sm:$0xff]
      %v617 = vld [vmem:[#allocation6 + $0x458] sm:$0xff]
      %v618 = vld [vmem:[#allocation6 + $0x460] sm:$0xff]
      %v619 = vld [vmem:[#allocation6 + $0x468] sm:$0xff]
      %v620 = vld [vmem:[#allocation6 + $0x470] sm:$0xff]
      %v621 = vld [vmem:[#allocation6 + $0x478] sm:$0xff]
      %v622 = vld [vmem:[#allocation6 + $0x480] sm:$0xff]
      %v623 = vld [vmem:[#allocation6 + $0x488] sm:$0xff]
      %v624 = vld [vmem:[#allocation6 + $0x490] sm:$0xff]
      %v625 = vld [vmem:[#allocation6 + $0x498] sm:$0xff]
      %v626 = vld [vmem:[#allocation6 + $0x4a0] sm:$0xff]
      %v627 = vld [vmem:[#allocation6 + $0x4a8] sm:$0xff]
      %v628 = vld [vmem:[#allocation6 + $0x4b0] sm:$0xff]
      %v629 = vld [vmem:[#allocation6 + $0x4b8] sm:$0xff]
      %v630 = vld [vmem:[#allocation6 + $0x4c0] sm:$0xff]
      %v631 = vld [vmem:[#allocation6 + $0x4c8] sm:$0xff]
      %v632 = vld [vmem:[#allocation6 + $0x4d0] sm:$0xff]
      %v633 = vld [vmem:[#allocation6 + $0x4d8] sm:$0xff]
      %v634 = vld [vmem:[#allocation6 + $0x4e0] sm:$0xff]
      %v635 = vld [vmem:[#allocation6 + $0x4e8] sm:$0xff]
      %v636 = vld [vmem:[#allocation6 + $0x4f0] sm:$0xff]
      %v637 = vld [vmem:[#allocation6 + $0x4f8] sm:$0xff]
      %v638 = vld [vmem:[#allocation6 + $0x500] sm:$0xff]
      %v639 = vld [vmem:[#allocation6 + $0x508] sm:$0xff]
      %v640 = vld [vmem:[#allocation6 + $0x510] sm:$0xff]
      %v641 = vld [vmem:[#allocation6 + $0x518] sm:$0xff]
      %v642 = vld [vmem:[#allocation6 + $0x520] sm:$0xff]
      %v643 = vld [vmem:[#allocation6 + $0x528] sm:$0xff]
      %v644 = vld [vmem:[#allocation6 + $0x530] sm:$0xff]
      %v645 = vld [vmem:[#allocation6 + $0x538] sm:$0xff]
      %v646 = vld [vmem:[#allocation6 + $0x540] sm:$0xff]
      %v647 = vld [vmem:[#allocation6 + $0x548] sm:$0xff]
      %v648 = vld [vmem:[#allocation6 + $0x550] sm:$0xff]
      %v649 = vld [vmem:[#allocation6 + $0x558] sm:$0xff]
      %v650 = vld [vmem:[#allocation6 + $0x560] sm:$0xff]
      %v651 = vld [vmem:[#allocation6 + $0x568] sm:$0xff]
      %v652 = vld [vmem:[#allocation6 + $0x570] sm:$0xff]
      %v653 = vld [vmem:[#allocation6 + $0x578] sm:$0xff]
      %v654 = vld [vmem:[#allocation6 + $0x580] sm:$0xff]
      %v655 = vld [vmem:[#allocation6 + $0x588] sm:$0xff]
      %v656 = vld [vmem:[#allocation6 + $0x590] sm:$0xff]
      %v657 = vld [vmem:[#allocation6 + $0x598] sm:$0xff]
      %v658 = vld [vmem:[#allocation6 + $0x5a0] sm:$0xff]
      %v659 = vld [vmem:[#allocation6 + $0x5a8] sm:$0xff]
      %v660 = vld [vmem:[#allocation6 + $0x5b0] sm:$0xff]
      %v661 = vld [vmem:[#allocation6 + $0x5b8] sm:$0xff]
      %v662 = vld [vmem:[#allocation6 + $0x5c0] sm:$0xff]
      %v663 = vld [vmem:[#allocation6 + $0x5c8] sm:$0xff]
      %v664 = vld [vmem:[#allocation6 + $0x5d0] sm:$0xff]
      %v665 = vld [vmem:[#allocation6 + $0x5d8] sm:$0xff]
      %v666 = vld [vmem:[#allocation6 + $0x5e0] sm:$0xff]
      %v667 = vld [vmem:[#allocation6 + $0x5e8] sm:$0xff]
      %v668 = vld [vmem:[#allocation6 + $0x5f0] sm:$0xff]
      %v669 = vld [vmem:[#allocation6 + $0x5f8] sm:$0xff]
      %v670 = vld [vmem:[#allocation6 + $0x600] sm:$0xff]
      %v671 = vld [vmem:[#allocation6 + $0x608] sm:$0xff]
      %v672 = vld [vmem:[#allocation6 + $0x610] sm:$0xff]
      %v673 = vld [vmem:[#allocation6 + $0x618] sm:$0xff]
      %v674 = vld [vmem:[#allocation6 + $0x620] sm:$0xff]
      %v675 = vld [vmem:[#allocation6 + $0x628] sm:$0xff]
      %v676 = vld [vmem:[#allocation6 + $0x630] sm:$0xff]
      %v677 = vld [vmem:[#allocation6 + $0x638] sm:$0xff]
      %v678 = vld [vmem:[#allocation6 + $0x640] sm:$0xff]
      %v679 = vld [vmem:[#allocation6 + $0x648] sm:$0xff]
      %v680 = vld [vmem:[#allocation6 + $0x650] sm:$0xff]
      %v681 = vld [vmem:[#allocation6 + $0x658] sm:$0xff]
      %v682 = vld [vmem:[#allocation6 + $0x660] sm:$0xff]
      %v683 = vld [vmem:[#allocation6 + $0x668] sm:$0xff]
      %v684 = vld [vmem:[#allocation6 + $0x670] sm:$0xff]
      %v685 = vld [vmem:[#allocation6 + $0x678] sm:$0xff]
      %v686 = vld [vmem:[#allocation6 + $0x680] sm:$0xff]
      %v687 = vld [vmem:[#allocation6 + $0x688] sm:$0xff]
      %v688 = vld [vmem:[#allocation6 + $0x690] sm:$0xff]
      %v689 = vld [vmem:[#allocation6 + $0x698] sm:$0xff]
      %v690 = vld [vmem:[#allocation6 + $0x6a0] sm:$0xff]
      %v691 = vld [vmem:[#allocation6 + $0x6a8] sm:$0xff]
      %v692 = vld [vmem:[#allocation6 + $0x6b0] sm:$0xff]
      %v693 = vld [vmem:[#allocation6 + $0x6b8] sm:$0xff]
      %v694 = vld [vmem:[#allocation6 + $0x6c0] sm:$0xff]
      %v695 = vld [vmem:[#allocation6 + $0x6c8] sm:$0xff]
      %v696 = vld [vmem:[#allocation6 + $0x6d0] sm:$0xff]
      %v697 = vld [vmem:[#allocation6 + $0x6d8] sm:$0xff]
      %v698 = vld [vmem:[#allocation6 + $0x6e0] sm:$0xff]
      %v699 = vld [vmem:[#allocation6 + $0x6e8] sm:$0xff]
      %v700 = vld [vmem:[#allocation6 + $0x6f0] sm:$0xff]
      %v701 = vld [vmem:[#allocation6 + $0x6f8] sm:$0xff]
      %v702 = vld [vmem:[#allocation6 + $0x700] sm:$0xff]
      %v703 = vld [vmem:[#allocation6 + $0x708] sm:$0xff]
      %v704 = vld [vmem:[#allocation6 + $0x710] sm:$0xff]
      %v705 = vld [vmem:[#allocation6 + $0x718] sm:$0xff]
      %v706 = vld [vmem:[#allocation6 + $0x720] sm:$0xff]
      %v707 = vld [vmem:[#allocation6 + $0x728] sm:$0xff]
      %v708 = vld [vmem:[#allocation6 + $0x730] sm:$0xff]
      %v709 = vld [vmem:[#allocation6 + $0x738] sm:$0xff]
      %v710 = vld [vmem:[#allocation6 + $0x740] sm:$0xff]
      %v711 = vld [vmem:[#allocation6 + $0x748] sm:$0xff]
      %v712 = vld [vmem:[#allocation6 + $0x750] sm:$0xff]
      %v713 = vld [vmem:[#allocation6 + $0x758] sm:$0xff]
      %v714 = vld [vmem:[#allocation6 + $0x760] sm:$0xff]
      %v715 = vld [vmem:[#allocation6 + $0x768] sm:$0xff]
      %v716 = vld [vmem:[#allocation6 + $0x770] sm:$0xff]
      %v717 = vld [vmem:[#allocation6 + $0x778] sm:$0xff]
      %v718 = vld [vmem:[#allocation6 + $0x780] sm:$0xff]
      %v719 = vld [vmem:[#allocation6 + $0x788] sm:$0xff]
      %v720 = vld [vmem:[#allocation6 + $0x790] sm:$0xff]
      %v721 = vld [vmem:[#allocation6 + $0x798] sm:$0xff]
      %v722 = vld [vmem:[#allocation6 + $0x7a0] sm:$0xff]
      %v723 = vld [vmem:[#allocation6 + $0x7a8] sm:$0xff]
      %v724 = vld [vmem:[#allocation6 + $0x7b0] sm:$0xff]
      %v725 = vld [vmem:[#allocation6 + $0x7b8] sm:$0xff]
      %v726 = vld [vmem:[#allocation6 + $0x7c0] sm:$0xff]
      %v727 = vld [vmem:[#allocation6 + $0x7c8] sm:$0xff]
      %v728 = vld [vmem:[#allocation6 + $0x7d0] sm:$0xff]
      %v729 = vld [vmem:[#allocation6 + $0x7d8] sm:$0xff]
      %v730 = vld [vmem:[#allocation6 + $0x7e0] sm:$0xff]
      %v731 = vld [vmem:[#allocation6 + $0x7e8] sm:$0xff]
      %v732 = vld [vmem:[#allocation6 + $0x7f0] sm:$0xff]
      %v733 = vld [vmem:[#allocation6 + $0x7f8] sm:$0xff]
      %v734 = vld [vmem:[#allocation6 + $0x800] sm:$0xff]
      %v735 = vld [vmem:[#allocation6 + $0x808] sm:$0xff]
      %v736 = vld [vmem:[#allocation6 + $0x810] sm:$0xff]
      %v737 = vld [vmem:[#allocation6 + $0x818] sm:$0xff]
      %v738 = vld [vmem:[#allocation6 + $0x820] sm:$0xff]
      %v739 = vld [vmem:[#allocation6 + $0x828] sm:$0xff]
      %v740 = vld [vmem:[#allocation6 + $0x830] sm:$0xff]
      %v741 = vld [vmem:[#allocation6 + $0x838] sm:$0xff]
      %v742 = vld [vmem:[#allocation6 + $0x840] sm:$0xff]
      %v743 = vld [vmem:[#allocation6 + $0x848] sm:$0xff]
      %v744 = vld [vmem:[#allocation6 + $0x850] sm:$0xff]
      %v745 = vld [vmem:[#allocation6 + $0x858] sm:$0xff]
      %v746 = vld [vmem:[#allocation6 + $0x860] sm:$0xff]
      %v747 = vld [vmem:[#allocation6 + $0x868] sm:$0xff]
      %v748 = vld [vmem:[#allocation6 + $0x870] sm:$0xff]
      %v749 = vld [vmem:[#allocation6 + $0x878] sm:$0xff]
      %v750 = vld [vmem:[#allocation6 + $0x880] sm:$0xff]
      %v751 = vld [vmem:[#allocation6 + $0x888] sm:$0xff]
      %v752 = vld [vmem:[#allocation6 + $0x890] sm:$0xff]
      %v753 = vld [vmem:[#allocation6 + $0x898] sm:$0xff]
      %v754 = vld [vmem:[#allocation6 + $0x8a0] sm:$0xff]
      %v755 = vld [vmem:[#allocation6 + $0x8a8] sm:$0xff]
      %v756 = vld [vmem:[#allocation6 + $0x8b0] sm:$0xff]
      %v757 = vld [vmem:[#allocation6 + $0x8b8] sm:$0xff]
      %v758 = vld [vmem:[#allocation6 + $0x8c0] sm:$0xff]
      %v759 = vld [vmem:[#allocation6 + $0x8c8] sm:$0xff]
      %v760 = vld [vmem:[#allocation6 + $0x8d0] sm:$0xff]
      %v761 = vld [vmem:[#allocation6 + $0x8d8] sm:$0xff]
      %v762 = vld [vmem:[#allocation6 + $0x8e0] sm:$0xff]
      %v763 = vld [vmem:[#allocation6 + $0x8e8] sm:$0xff]
      %v764 = vld [vmem:[#allocation6 + $0x8f0] sm:$0xff]
      %v765 = vld [vmem:[#allocation6 + $0x8f8] sm:$0xff]
      %v766 = vld [vmem:[#allocation6 + $0x900] sm:$0xff]
      %v767 = vld [vmem:[#allocation6 + $0x908] sm:$0xff]
      %v768 = vld [vmem:[#allocation6 + $0x910] sm:$0xff]
      %v769 = vld [vmem:[#allocation6 + $0x918] sm:$0xff]
      %v770 = vld [vmem:[#allocation6 + $0x920] sm:$0xff]
      %v771 = vld [vmem:[#allocation6 + $0x928] sm:$0xff]
      %v772 = vld [vmem:[#allocation6 + $0x930] sm:$0xff]
      %v773 = vld [vmem:[#allocation6 + $0x938] sm:$0xff]
      %v774 = vld [vmem:[#allocation6 + $0x940] sm:$0xff]
      %v775 = vld [vmem:[#allocation6 + $0x948] sm:$0xff]
      %v776 = vld [vmem:[#allocation6 + $0x950] sm:$0xff]
      %v777 = vld [vmem:[#allocation6 + $0x958] sm:$0xff]
      %v778 = vld [vmem:[#allocation6 + $0x960] sm:$0xff]
      %v779 = vld [vmem:[#allocation6 + $0x968] sm:$0xff]
      %v780 = vld [vmem:[#allocation6 + $0x970] sm:$0xff]
      %v781 = vld [vmem:[#allocation6 + $0x978] sm:$0xff]
      %v782 = vld [vmem:[#allocation6 + $0x980] sm:$0xff]
      %v783 = vld [vmem:[#allocation6 + $0x988] sm:$0xff]
      %v784 = vld [vmem:[#allocation6 + $0x990] sm:$0xff]
      %v785 = vld [vmem:[#allocation6 + $0x998] sm:$0xff]
      %v786 = vld [vmem:[#allocation6 + $0x9a0] sm:$0xff]
      %v787 = vld [vmem:[#allocation6 + $0x9a8] sm:$0xff]
      %v788 = vld [vmem:[#allocation6 + $0x9b0] sm:$0xff]
      %v789 = vld [vmem:[#allocation6 + $0x9b8] sm:$0xff]
      %v790 = vld [vmem:[#allocation6 + $0x9c0] sm:$0xff]
      %v791 = vld [vmem:[#allocation6 + $0x9c8] sm:$0xff]
      %v792 = vld [vmem:[#allocation6 + $0x9d0] sm:$0xff]
      %v793 = vld [vmem:[#allocation6 + $0x9d8] sm:$0xff]
      %v794 = vld [vmem:[#allocation6 + $0x9e0] sm:$0xff]
      %v795 = vld [vmem:[#allocation6 + $0x9e8] sm:$0xff]
      %v796 = vld [vmem:[#allocation6 + $0x9f0] sm:$0xff]
      %v797 = vld [vmem:[#allocation6 + $0x9f8] sm:$0xff]
      %v798 = vld [vmem:[#allocation8] sm:$0x3]
      %v800 = vlaneseq
      %v801 = vshrl.u32 %v800, 7
      %v802 = vsub.s32 0, %v801
      %v803 = vrot.slane %v798, %v802
      %v804 = vlaneseq
      %v805 = vshrl.u32 %v804, 7
      %v806 = vsub.s32 1, %v805
      %v807 = vrot.slane %v798, %v806
      %v813 = vcombine.high %v475, %v475
      %v815 = vunpack.c.l.s4 1983009808
      %v816 = vunpack.c.0.s8 %v815
      %v817 = vlaneseq
      %v818 = vshrl.u32 %v817, 7
      %v819 = vsub.s32 %v816, %v818
      %v820 = vrot.slane %v475, %v819
      %v822 = vunpack.c.l.s4 1983009808
      %v823 = vunpack.c.0.s8 %v822
      %v824 = vlaneseq
      %v825 = vshrl.u32 %v824, 7
      %v826 = vsub.s32 %v823, %v825
      %v827 = vrot.slane %v813, %v826
      %v828 = vcombine.high %v820, %v820
      %v829 = vcombine.high %v827, %v827
      %v830 = vcombine.high %v476, %v476
      %v832 = vunpack.c.l.s4 1983009808
      %v833 = vunpack.c.0.s8 %v832
      %v834 = vlaneseq
      %v835 = vshrl.u32 %v834, 7
      %v836 = vsub.s32 %v833, %v835
      %v837 = vrot.slane %v476, %v836
      %v839 = vunpack.c.l.s4 1983009808
      %v840 = vunpack.c.0.s8 %v839
      %v841 = vlaneseq
      %v842 = vshrl.u32 %v841, 7
      %v843 = vsub.s32 %v840, %v842
      %v844 = vrot.slane %v830, %v843
      %v845 = vcombine.high %v837, %v837
      %v846 = vcombine.high %v844, %v844
      %v848 = vunpack.c.l.s4 1983009808
      %v849 = vunpack.c.0.s8 %v848
      %v850 = vlaneseq
      %v851 = vshrl.u32 %v850, 7
      %v852 = vsub.s32 %v849, %v851
      %v853 = vrot.slane %v477, %v852
      %v854 = vcombine.high %v853, %v853
      %865 = vmatprep.subr.mxu0 %v479
      %866 = vmatpush1.msra.mxu0 %v478
      %867 = vmatprep.subr.mxu0 %v481
      %868 = vmatpush1.msra.mxu0 %v480
      %869 = vmatprep.subr.mxu0 %v483
      %870 = vmatpush1.msra.mxu0 %v482
      %871 = vmatprep.subr.mxu0 %v485
      %872 = vmatpush1.msra.mxu0 %v484
      %873 = vmatprep.subr.mxu0 %v487
      %874 = vmatpush1.msra.mxu0 %v486
      %875 = vmatprep.subr.mxu0 %v489
      %876 = vmatpush1.msra.mxu0 %v488
      %877 = vmatprep.subr.mxu0 %v491
      %878 = vmatpush1.msra.mxu0 %v490
      %879 = vmatprep.subr.mxu0 %v493
      %880 = vmatpush1.msra.mxu0 %v492
      %881 = vmatprep.subr.mxu0 %v495
      %882 = vmatpush1.msra.mxu0 %v494
      %883 = vmatprep.subr.mxu0 %v497
      %884 = vmatpush1.msra.mxu0 %v496
      %885 = vmatprep.subr.mxu0 %v499
      %886 = vmatpush1.msra.mxu0 %v498
      %887 = vmatprep.subr.mxu0 %v501
      %888 = vmatpush1.msra.mxu0 %v500
      %889 = vmatprep.subr.mxu0 %v503
      %890 = vmatpush1.msra.mxu0 %v502
      %891 = vmatprep.subr.mxu0 %v505
      %892 = vmatpush1.msra.mxu0 %v504
      %893 = vmatprep.subr.mxu0 %v507
      %894 = vmatpush1.msra.mxu0 %v506
      %895 = vmatprep.subr.mxu0 %v509
      %896 = vmatpush1.msra.mxu0 %v508
      %897 = vmatprep.subr.mxu0 %v511
      %898 = vmatpush1.msra.mxu0 %v510
      %899 = vmatprep.subr.mxu0 %v513
      %900 = vmatpush1.msra.mxu0 %v512
      %901 = vmatprep.subr.mxu0 %v515
      %902 = vmatpush1.msra.mxu0 %v514
      %903 = vmatprep.subr.mxu0 %v517
      %904 = vmatpush1.msra.mxu0 %v516
      %905 = vmatprep.subr.mxu0 %v519
      %906 = vmatpush1.msra.mxu0 %v518
      %907 = vmatprep.subr.mxu0 %v521
      %908 = vmatpush1.msra.mxu0 %v520
      %909 = vmatprep.subr.mxu0 %v523
      %910 = vmatpush1.msra.mxu0 %v522
      %911 = vmatprep.subr.mxu0 %v525
      %912 = vmatpush1.msra.mxu0 %v524
      %913 = vmatprep.subr.mxu0 %v527
      %914 = vmatpush1.msra.mxu0 %v526
      %915 = vmatprep.subr.mxu0 %v529
      %916 = vmatpush1.msra.mxu0 %v528
      %917 = vmatprep.subr.mxu0 %v531
      %918 = vmatpush1.msra.mxu0 %v530
      %919 = vmatprep.subr.mxu0 %v533
      %920 = vmatpush1.msra.mxu0 %v532
      %921 = vmatprep.subr.mxu0 %v535
      %922 = vmatpush1.msra.mxu0 %v534
      %923 = vmatprep.subr.mxu0 %v537
      %924 = vmatpush1.msra.mxu0 %v536
      %925 = vmatprep.subr.mxu0 %v539
      %926 = vmatpush1.msra.mxu0 %v538
      %927 = vmatprep.subr.mxu0 %v541
      %928 = vmatpush1.msra.mxu0 %v540
      %929 = vmatprep.mubr.f32.mxu0 %v828
      %930 = vmatmul.mubr.f32.gmra.mrb[0].mxu0 %v820
      %v931 = vpop.f32.mrb[0].mxu0
      %v932 = vadd.f32 %v803, %v931
      %v933 = vpop.f32.mrb[0].mxu0
      %v934 = vadd.f32 %v807, %v933
      %935 = vdwg.mxu0
      %936 = vmatprep.subr.mxu0 %v543
      %937 = vmatpush1.msra.mxu0 %v542
      %938 = vmatprep.subr.mxu0 %v545
      %939 = vmatpush1.msra.mxu0 %v544
      %940 = vmatprep.subr.mxu0 %v547
      %941 = vmatpush1.msra.mxu0 %v546
      %942 = vmatprep.subr.mxu0 %v549
      %943 = vmatpush1.msra.mxu0 %v548
      %944 = vmatprep.subr.mxu0 %v551
      %945 = vmatpush1.msra.mxu0 %v550
      %946 = vmatprep.subr.mxu0 %v553
      %947 = vmatpush1.msra.mxu0 %v552
      %948 = vmatprep.subr.mxu0 %v555
      %949 = vmatpush1.msra.mxu0 %v554
      %950 = vmatprep.subr.mxu0 %v557
      %951 = vmatpush1.msra.mxu0 %v556
      %952 = vmatprep.subr.mxu0 %v559
      %953 = vmatpush1.msra.mxu0 %v558
      %954 = vmatprep.subr.mxu0 %v561
      %955 = vmatpush1.msra.mxu0 %v560
      %956 = vmatprep.subr.mxu0 %v563
      %957 = vmatpush1.msra.mxu0 %v562
      %958 = vmatprep.subr.mxu0 %v565
      %959 = vmatpush1.msra.mxu0 %v564
      %960 = vmatprep.subr.mxu0 %v567
      %961 = vmatpush1.msra.mxu0 %v566
      %962 = vmatprep.subr.mxu0 %v569
      %963 = vmatpush1.msra.mxu0 %v568
      %964 = vmatprep.subr.mxu0 %v571
      %965 = vmatpush1.msra.mxu0 %v570
      %966 = vmatprep.subr.mxu0 %v573
      %967 = vmatpush1.msra.mxu0 %v572
      %968 = vmatprep.subr.mxu0 %v575
      %969 = vmatpush1.msra.mxu0 %v574
      %970 = vmatprep.subr.mxu0 %v577
      %971 = vmatpush1.msra.mxu0 %v576
      %972 = vmatprep.subr.mxu0 %v579
      %973 = vmatpush1.msra.mxu0 %v578
      %974 = vmatprep.subr.mxu0 %v581
      %975 = vmatpush1.msra.mxu0 %v580
      %976 = vmatprep.subr.mxu0 %v583
      %977 = vmatpush1.msra.mxu0 %v582
      %978 = vmatprep.subr.mxu0 %v585
      %979 = vmatpush1.msra.mxu0 %v584
      %980 = vmatprep.subr.mxu0 %v587
      %981 = vmatpush1.msra.mxu0 %v586
      %982 = vmatprep.subr.mxu0 %v589
      %983 = vmatpush1.msra.mxu0 %v588
      %984 = vmatprep.subr.mxu0 %v591
      %985 = vmatpush1.msra.mxu0 %v590
      %986 = vmatprep.subr.mxu0 %v593
      %987 = vmatpush1.msra.mxu0 %v592
      %988 = vmatprep.subr.mxu0 %v595
      %989 = vmatpush1.msra.mxu0 %v594
      %990 = vmatprep.subr.mxu0 %v597
      %991 = vmatpush1.msra.mxu0 %v596
      %992 = vmatprep.subr.mxu0 %v599
      %993 = vmatpush1.msra.mxu0 %v598
      %994 = vmatprep.subr.mxu0 %v601
      %995 = vmatpush1.msra.mxu0 %v600
      %996 = vmatprep.subr.mxu0 %v603
      %997 = vmatpush1.msra.mxu0 %v602
      %998 = vmatprep.subr.mxu0 %v605
      %999 = vmatpush1.msra.mxu0 %v604
      %1000 = vmatprep.mubr.f32.mxu0 %v829
      %1001 = vmatmul.mubr.f32.gmra.mrb[0].mxu0 %v827
      %v1002 = vpop.f32.mrb[0].mxu0
      %v1003 = vadd.f32 %v932, %v1002
      %v1004 = vpop.f32.mrb[0].mxu0
      %v1005 = vadd.f32 %v934, %v1004
      %1006 = vdwg.mxu0
      %1007 = vmatprep.subr.mxu0 %v607
      %1008 = vmatpush1.msra.mxu0 %v606
      %1009 = vmatprep.subr.mxu0 %v609
      %1010 = vmatpush1.msra.mxu0 %v608
      %1011 = vmatprep.subr.mxu0 %v611
      %1012 = vmatpush1.msra.mxu0 %v610
      %1013 = vmatprep.subr.mxu0 %v613
      %1014 = vmatpush1.msra.mxu0 %v612
      %1015 = vmatprep.subr.mxu0 %v615
      %1016 = vmatpush1.msra.mxu0 %v614
      %1017 = vmatprep.subr.mxu0 %v617
      %1018 = vmatpush1.msra.mxu0 %v616
      %1019 = vmatprep.subr.mxu0 %v619
      %1020 = vmatpush1.msra.mxu0 %v618
      %1021 = vmatprep.subr.mxu0 %v621
      %1022 = vmatpush1.msra.mxu0 %v620
      %1023 = vmatprep.subr.mxu0 %v623
      %1024 = vmatpush1.msra.mxu0 %v622
      %1025 = vmatprep.subr.mxu0 %v625
      %1026 = vmatpush1.msra.mxu0 %v624
      %1027 = vmatprep.subr.mxu0 %v627
      %1028 = vmatpush1.msra.mxu0 %v626
      %1029 = vmatprep.subr.mxu0 %v629
      %1030 = vmatpush1.msra.mxu0 %v628
      %1031 = vmatprep.subr.mxu0 %v631
      %1032 = vmatpush1.msra.mxu0 %v630
      %1033 = vmatprep.subr.mxu0 %v633
      %1034 = vmatpush1.msra.mxu0 %v632
      %1035 = vmatprep.subr.mxu0 %v635
      %1036 = vmatpush1.msra.mxu0 %v634
      %1037 = vmatprep.subr.mxu0 %v637
      %1038 = vmatpush1.msra.mxu0 %v636
      %1039 = vmatprep.subr.mxu0 %v639
      %1040 = vmatpush1.msra.mxu0 %v638
      %1041 = vmatprep.subr.mxu0 %v641
      %1042 = vmatpush1.msra.mxu0 %v640
      %1043 = vmatprep.subr.mxu0 %v643
      %1044 = vmatpush1.msra.mxu0 %v642
      %1045 = vmatprep.subr.mxu0 %v645
      %1046 = vmatpush1.msra.mxu0 %v644
      %1047 = vmatprep.subr.mxu0 %v647
      %1048 = vmatpush1.msra.mxu0 %v646
      %1049 = vmatprep.subr.mxu0 %v649
      %1050 = vmatpush1.msra.mxu0 %v648
      %1051 = vmatprep.subr.mxu0 %v651
      %1052 = vmatpush1.msra.mxu0 %v650
      %1053 = vmatprep.subr.mxu0 %v653
      %1054 = vmatpush1.msra.mxu0 %v652
      %1055 = vmatprep.subr.mxu0 %v655
      %1056 = vmatpush1.msra.mxu0 %v654
      %1057 = vmatprep.subr.mxu0 %v657
      %1058 = vmatpush1.msra.mxu0 %v656
      %1059 = vmatprep.subr.mxu0 %v659
      %1060 = vmatpush1.msra.mxu0 %v658
      %1061 = vmatprep.subr.mxu0 %v661
      %1062 = vmatpush1.msra.mxu0 %v660
      %1063 = vmatprep.subr.mxu0 %v663
      %1064 = vmatpush1.msra.mxu0 %v662
      %1065 = vmatprep.subr.mxu0 %v665
      %1066 = vmatpush1.msra.mxu0 %v664
      %1067 = vmatprep.subr.mxu0 %v667
      %1068 = vmatpush1.msra.mxu0 %v666
      %1069 = vmatprep.subr.mxu0 %v669
      %1070 = vmatpush1.msra.mxu0 %v668
      %1071 = vmatprep.mubr.f32.mxu0 %v845
      %1072 = vmatmul.mubr.f32.gmra.mrb[0].mxu0 %v837
      %v1073 = vpop.f32.mrb[0].mxu0
      %v1074 = vadd.f32 %v1003, %v1073
      %v1075 = vpop.f32.mrb[0].mxu0
      %v1076 = vadd.f32 %v1005, %v1075
      %1077 = vdwg.mxu0
      %1078 = vmatprep.subr.mxu0 %v671
      %1079 = vmatpush1.msra.mxu0 %v670
      %1080 = vmatprep.subr.mxu0 %v673
      %1081 = vmatpush1.msra.mxu0 %v672
      %1082 = vmatprep.subr.mxu0 %v675
      %1083 = vmatpush1.msra.mxu0 %v674
      %1084 = vmatprep.subr.mxu0 %v677
      %1085 = vmatpush1.msra.mxu0 %v676
      %1086 = vmatprep.subr.mxu0 %v679
      %1087 = vmatpush1.msra.mxu0 %v678
      %1088 = vmatprep.subr.mxu0 %v681
      %1089 = vmatpush1.msra.mxu0 %v680
      %1090 = vmatprep.subr.mxu0 %v683
      %1091 = vmatpush1.msra.mxu0 %v682
      %1092 = vmatprep.subr.mxu0 %v685
      %1093 = vmatpush1.msra.mxu0 %v684
      %1094 = vmatprep.subr.mxu0 %v687
      %1095 = vmatpush1.msra.mxu0 %v686
      %1096 = vmatprep.subr.mxu0 %v689
      %1097 = vmatpush1.msra.mxu0 %v688
      %1098 = vmatprep.subr.mxu0 %v691
      %1099 = vmatpush1.msra.mxu0 %v690
      %1100 = vmatprep.subr.mxu0 %v693
      %1101 = vmatpush1.msra.mxu0 %v692
      %1102 = vmatprep.subr.mxu0 %v695
      %1103 = vmatpush1.msra.mxu0 %v694
      %1104 = vmatprep.subr.mxu0 %v697
      %1105 = vmatpush1.msra.mxu0 %v696
      %1106 = vmatprep.subr.mxu0 %v699
      %1107 = vmatpush1.msra.mxu0 %v698
      %1108 = vmatprep.subr.mxu0 %v701
      %1109 = vmatpush1.msra.mxu0 %v700
      %1110 = vmatprep.subr.mxu0 %v703
      %1111 = vmatpush1.msra.mxu0 %v702
      %1112 = vmatprep.subr.mxu0 %v705
      %1113 = vmatpush1.msra.mxu0 %v704
      %1114 = vmatprep.subr.mxu0 %v707
      %1115 = vmatpush1.msra.mxu0 %v706
      %1116 = vmatprep.subr.mxu0 %v709
      %1117 = vmatpush1.msra.mxu0 %v708
      %1118 = vmatprep.subr.mxu0 %v711
      %1119 = vmatpush1.msra.mxu0 %v710
      %1120 = vmatprep.subr.mxu0 %v713
      %1121 = vmatpush1.msra.mxu0 %v712
      %1122 = vmatprep.subr.mxu0 %v715
      %1123 = vmatpush1.msra.mxu0 %v714
      %1124 = vmatprep.subr.mxu0 %v717
      %1125 = vmatpush1.msra.mxu0 %v716
      %1126 = vmatprep.subr.mxu0 %v719
      %1127 = vmatpush1.msra.mxu0 %v718
      %1128 = vmatprep.subr.mxu0 %v721
      %1129 = vmatpush1.msra.mxu0 %v720
      %1130 = vmatprep.subr.mxu0 %v723
      %1131 = vmatpush1.msra.mxu0 %v722
      %1132 = vmatprep.subr.mxu0 %v725
      %1133 = vmatpush1.msra.mxu0 %v724
      %1134 = vmatprep.subr.mxu0 %v727
      %1135 = vmatpush1.msra.mxu0 %v726
      %1136 = vmatprep.subr.mxu0 %v729
      %1137 = vmatpush1.msra.mxu0 %v728
      %1138 = vmatprep.subr.mxu0 %v731
      %1139 = vmatpush1.msra.mxu0 %v730
      %1140 = vmatprep.subr.mxu0 %v733
      %1141 = vmatpush1.msra.mxu0 %v732
      %1142 = vmatprep.mubr.f32.mxu0 %v846
      %1143 = vmatmul.mubr.f32.gmra.mrb[0].mxu0 %v844
      %v1144 = vpop.f32.mrb[0].mxu0
      %v1145 = vadd.f32 %v1074, %v1144
      %v1146 = vpop.f32.mrb[0].mxu0
      %v1147 = vadd.f32 %v1076, %v1146
      %1148 = vdwg.mxu0
      %1149 = vmatprep.subr.mxu0 %v735
      %1150 = vmatpush1.msra.mxu0 %v734
      %1151 = vmatprep.subr.mxu0 %v737
      %1152 = vmatpush1.msra.mxu0 %v736
      %1153 = vmatprep.subr.mxu0 %v739
      %1154 = vmatpush1.msra.mxu0 %v738
      %1155 = vmatprep.subr.mxu0 %v741
      %1156 = vmatpush1.msra.mxu0 %v740
      %1157 = vmatprep.subr.mxu0 %v743
      %1158 = vmatpush1.msra.mxu0 %v742
      %1159 = vmatprep.subr.mxu0 %v745
      %1160 = vmatpush1.msra.mxu0 %v744
      %1161 = vmatprep.subr.mxu0 %v747
      %1162 = vmatpush1.msra.mxu0 %v746
      %1163 = vmatprep.subr.mxu0 %v749
      %1164 = vmatpush1.msra.mxu0 %v748
      %1165 = vmatprep.subr.mxu0 %v751
      %1166 = vmatpush1.msra.mxu0 %v750
      %1167 = vmatprep.subr.mxu0 %v753
      %1168 = vmatpush1.msra.mxu0 %v752
      %1169 = vmatprep.subr.mxu0 %v755
      %1170 = vmatpush1.msra.mxu0 %v754
      %1171 = vmatprep.subr.mxu0 %v757
      %1172 = vmatpush1.msra.mxu0 %v756
      %1173 = vmatprep.subr.mxu0 %v759
      %1174 = vmatpush1.msra.mxu0 %v758
      %1175 = vmatprep.subr.mxu0 %v761
      %1176 = vmatpush1.msra.mxu0 %v760
      %1177 = vmatprep.subr.mxu0 %v763
      %1178 = vmatpush1.msra.mxu0 %v762
      %1179 = vmatprep.subr.mxu0 %v765
      %1180 = vmatpush1.msra.mxu0 %v764
      %1181 = vmatprep.subr.mxu0 %v767
      %1182 = vmatpush1.msra.mxu0 %v766
      %1183 = vmatprep.subr.mxu0 %v769
      %1184 = vmatpush1.msra.mxu0 %v768
      %1185 = vmatprep.subr.mxu0 %v771
      %1186 = vmatpush1.msra.mxu0 %v770
      %1187 = vmatprep.subr.mxu0 %v773
      %1188 = vmatpush1.msra.mxu0 %v772
      %1189 = vmatprep.subr.mxu0 %v775
      %1190 = vmatpush1.msra.mxu0 %v774
      %1191 = vmatprep.subr.mxu0 %v777
      %1192 = vmatpush1.msra.mxu0 %v776
      %1193 = vmatprep.subr.mxu0 %v779
      %1194 = vmatpush1.msra.mxu0 %v778
      %1195 = vmatprep.subr.mxu0 %v781
      %1196 = vmatpush1.msra.mxu0 %v780
      %1197 = vmatprep.subr.mxu0 %v783
      %1198 = vmatpush1.msra.mxu0 %v782
      %1199 = vmatprep.subr.mxu0 %v785
      %1200 = vmatpush1.msra.mxu0 %v784
      %1201 = vmatprep.subr.mxu0 %v787
      %1202 = vmatpush1.msra.mxu0 %v786
      %1203 = vmatprep.subr.mxu0 %v789
      %1204 = vmatpush1.msra.mxu0 %v788
      %1205 = vmatprep.subr.mxu0 %v791
      %1206 = vmatpush1.msra.mxu0 %v790
      %1207 = vmatprep.subr.mxu0 %v793
      %1208 = vmatpush1.msra.mxu0 %v792
      %1209 = vmatprep.subr.mxu0 %v795
      %1210 = vmatpush1.msra.mxu0 %v794
      %1211 = vmatprep.subr.mxu0 %v797
      %1212 = vmatpush1.msra.mxu0 %v796
      %1213 = vmatprep.mubr.f32.mxu0 %v854
      %1214 = vmatmul.mubr.f32.gmra.mrb[0].mxu0 %v853
      %v1215 = vpop.f32.mrb[0].mxu0
      %v1216 = vadd.f32 %v1145, %v1215
      %v1217 = vpop.f32.mrb[0].mxu0
      %v1218 = vadd.f32 %v1147, %v1217
      %1219 = vdwg.mxu0
      %v1220 = vmax.f32 %v1216, 0.0
      %v1221 = vmax.f32 %v1218, 0.0
      %v1222 = vld [vmem:[#allocation9] sm:$0xff]
      %v1223 = vld [vmem:[#allocation9 + $0x8] sm:$0xff]
      %v1224 = vld [vmem:[#allocation9 + $0x10] sm:$0xff]
      %v1225 = vld [vmem:[#allocation9 + $0x18] sm:$0xff]
      %v1226 = vld [vmem:[#allocation9 + $0x20] sm:$0xff]
      %v1227 = vld [vmem:[#allocation9 + $0x28] sm:$0xff]
      %v1228 = vld [vmem:[#allocation9 + $0x30] sm:$0xff]
      %v1229 = vld [vmem:[#allocation9 + $0x38] sm:$0xff]
      %v1230 = vld [vmem:[#allocation9 + $0x40] sm:$0xff]
      %v1231 = vld [vmem:[#allocation9 + $0x48] sm:$0xff]
      %v1232 = vld [vmem:[#allocation9 + $0x50] sm:$0xff]
      %v1233 = vld [vmem:[#allocation9 + $0x58] sm:$0xff]
      %v1234 = vld [vmem:[#allocation9 + $0x60] sm:$0xff]
      %v1235 = vld [vmem:[#allocation9 + $0x68] sm:$0xff]
      %v1236 = vld [vmem:[#allocation9 + $0x70] sm:$0xff]
      %v1237 = vld [vmem:[#allocation9 + $0x78] sm:$0xff]
      %v1238 = vld [vmem:[#allocation9 + $0x80] sm:$0xff]
      %v1239 = vld [vmem:[#allocation9 + $0x88] sm:$0xff]
      %v1240 = vld [vmem:[#allocation9 + $0x90] sm:$0xff]
      %v1241 = vld [vmem:[#allocation9 + $0x98] sm:$0xff]
      %v1242 = vld [vmem:[#allocation9 + $0xa0] sm:$0xff]
      %v1243 = vld [vmem:[#allocation9 + $0xa8] sm:$0xff]
      %v1244 = vld [vmem:[#allocation9 + $0xb0] sm:$0xff]
      %v1245 = vld [vmem:[#allocation9 + $0xb8] sm:$0xff]
      %v1246 = vld [vmem:[#allocation9 + $0xc0] sm:$0xff]
      %v1247 = vld [vmem:[#allocation9 + $0xc8] sm:$0xff]
      %v1248 = vld [vmem:[#allocation9 + $0xd0] sm:$0xff]
      %v1249 = vld [vmem:[#allocation9 + $0xd8] sm:$0xff]
      %v1250 = vld [vmem:[#allocation9 + $0xe0] sm:$0xff]
      %v1251 = vld [vmem:[#allocation9 + $0xe8] sm:$0xff]
      %v1252 = vld [vmem:[#allocation9 + $0xf0] sm:$0xff]
      %v1253 = vld [vmem:[#allocation9 + $0xf8] sm:$0xff]
      %v1254 = vld [vmem:[#allocation9 + $0x100] sm:$0xff]
      %v1255 = vld [vmem:[#allocation9 + $0x108] sm:$0xff]
      %v1256 = vld [vmem:[#allocation9 + $0x110] sm:$0xff]
      %v1257 = vld [vmem:[#allocation9 + $0x118] sm:$0xff]
      %v1258 = vld [vmem:[#allocation9 + $0x120] sm:$0xff]
      %v1259 = vld [vmem:[#allocation9 + $0x128] sm:$0xff]
      %v1260 = vld [vmem:[#allocation9 + $0x130] sm:$0xff]
      %v1261 = vld [vmem:[#allocation9 + $0x138] sm:$0xff]
      %v1262 = vld [vmem:[#allocation9 + $0x140] sm:$0xff]
      %v1263 = vld [vmem:[#allocation9 + $0x148] sm:$0xff]
      %v1264 = vld [vmem:[#allocation9 + $0x150] sm:$0xff]
      %v1265 = vld [vmem:[#allocation9 + $0x158] sm:$0xff]
      %v1266 = vld [vmem:[#allocation9 + $0x160] sm:$0xff]
      %v1267 = vld [vmem:[#allocation9 + $0x168] sm:$0xff]
      %v1268 = vld [vmem:[#allocation9 + $0x170] sm:$0xff]
      %v1269 = vld [vmem:[#allocation9 + $0x178] sm:$0xff]
      %v1270 = vld [vmem:[#allocation9 + $0x180] sm:$0xff]
      %v1271 = vld [vmem:[#allocation9 + $0x188] sm:$0xff]
      %v1272 = vld [vmem:[#allocation9 + $0x190] sm:$0xff]
      %v1273 = vld [vmem:[#allocation9 + $0x198] sm:$0xff]
      %v1274 = vld [vmem:[#allocation9 + $0x1a0] sm:$0xff]
      %v1275 = vld [vmem:[#allocation9 + $0x1a8] sm:$0xff]
      %v1276 = vld [vmem:[#allocation9 + $0x1b0] sm:$0xff]
      %v1277 = vld [vmem:[#allocation9 + $0x1b8] sm:$0xff]
      %v1278 = vld [vmem:[#allocation9 + $0x1c0] sm:$0xff]
      %v1279 = vld [vmem:[#allocation9 + $0x1c8] sm:$0xff]
      %v1280 = vld [vmem:[#allocation9 + $0x1d0] sm:$0xff]
      %v1281 = vld [vmem:[#allocation9 + $0x1d8] sm:$0xff]
      %v1282 = vld [vmem:[#allocation9 + $0x1e0] sm:$0xff]
      %v1283 = vld [vmem:[#allocation9 + $0x1e8] sm:$0xff]
      %v1284 = vld [vmem:[#allocation9 + $0x1f0] sm:$0xff]
      %v1285 = vld [vmem:[#allocation9 + $0x1f8] sm:$0xff]
      %v1286 = vld [vmem:[#allocation11] sm:$0x3]
      %v1288 = vlaneseq
      %v1289 = vshrl.u32 %v1288, 7
      %v1290 = vsub.s32 0, %v1289
      %v1291 = vrot.slane %v1286, %v1290
      %v1292 = vlaneseq
      %v1293 = vshrl.u32 %v1292, 7
      %v1294 = vsub.s32 1, %v1293
      %v1295 = vrot.slane %v1286, %v1294
      %1298 = vmatprep.subr.mxu0 %v1223
      %1299 = vmatpush1.msra.mxu0 %v1222
      %1300 = vmatprep.subr.mxu0 %v1225
      %1301 = vmatpush1.msra.mxu0 %v1224
      %1302 = vmatprep.subr.mxu0 %v1227
      %1303 = vmatpush1.msra.mxu0 %v1226
      %1304 = vmatprep.subr.mxu0 %v1229
      %1305 = vmatpush1.msra.mxu0 %v1228
      %1306 = vmatprep.subr.mxu0 %v1231
      %1307 = vmatpush1.msra.mxu0 %v1230
      %1308 = vmatprep.subr.mxu0 %v1233
      %1309 = vmatpush1.msra.mxu0 %v1232
      %1310 = vmatprep.subr.mxu0 %v1235
      %1311 = vmatpush1.msra.mxu0 %v1234
      %1312 = vmatprep.subr.mxu0 %v1237
      %1313 = vmatpush1.msra.mxu0 %v1236
      %1314 = vmatprep.subr.mxu0 %v1239
      %1315 = vmatpush1.msra.mxu0 %v1238
      %1316 = vmatprep.subr.mxu0 %v1241
      %1317 = vmatpush1.msra.mxu0 %v1240
      %1318 = vmatprep.subr.mxu0 %v1243
      %1319 = vmatpush1.msra.mxu0 %v1242
      %1320 = vmatprep.subr.mxu0 %v1245
      %1321 = vmatpush1.msra.mxu0 %v1244
      %1322 = vmatprep.subr.mxu0 %v1247
      %1323 = vmatpush1.msra.mxu0 %v1246
      %1324 = vmatprep.subr.mxu0 %v1249
      %1325 = vmatpush1.msra.mxu0 %v1248
      %1326 = vmatprep.subr.mxu0 %v1251
      %1327 = vmatpush1.msra.mxu0 %v1250
      %1328 = vmatprep.subr.mxu0 %v1253
      %1329 = vmatpush1.msra.mxu0 %v1252
      %1330 = vmatprep.subr.mxu0 %v1255
      %1331 = vmatpush1.msra.mxu0 %v1254
      %1332 = vmatprep.subr.mxu0 %v1257
      %1333 = vmatpush1.msra.mxu0 %v1256
      %1334 = vmatprep.subr.mxu0 %v1259
      %1335 = vmatpush1.msra.mxu0 %v1258
      %1336 = vmatprep.subr.mxu0 %v1261
      %1337 = vmatpush1.msra.mxu0 %v1260
      %1338 = vmatprep.subr.mxu0 %v1263
      %1339 = vmatpush1.msra.mxu0 %v1262
      %1340 = vmatprep.subr.mxu0 %v1265
      %1341 = vmatpush1.msra.mxu0 %v1264
      %1342 = vmatprep.subr.mxu0 %v1267
      %1343 = vmatpush1.msra.mxu0 %v1266
      %1344 = vmatprep.subr.mxu0 %v1269
      %1345 = vmatpush1.msra.mxu0 %v1268
      %1346 = vmatprep.subr.mxu0 %v1271
      %1347 = vmatpush1.msra.mxu0 %v1270
      %1348 = vmatprep.subr.mxu0 %v1273
      %1349 = vmatpush1.msra.mxu0 %v1272
      %1350 = vmatprep.subr.mxu0 %v1275
      %1351 = vmatpush1.msra.mxu0 %v1274
      %1352 = vmatprep.subr.mxu0 %v1277
      %1353 = vmatpush1.msra.mxu0 %v1276
      %1354 = vmatprep.subr.mxu0 %v1279
      %1355 = vmatpush1.msra.mxu0 %v1278
      %1356 = vmatprep.subr.mxu0 %v1281
      %1357 = vmatpush1.msra.mxu0 %v1280
      %1358 = vmatprep.subr.mxu0 %v1283
      %1359 = vmatpush1.msra.mxu0 %v1282
      %1360 = vmatprep.subr.mxu0 %v1285
      %1361 = vmatpush1.msra.mxu0 %v1284
      %1362 = vmatprep.mubr.f32.mxu0 %v1221
      %1363 = vmatmul.mubr.f32.gmra.mrb[0].mxu0 %v1220
      %v1364 = vpop.f32.mrb[0].mxu0
      %v1365 = vadd.f32 %v1291, %v1364
      %v1366 = vpop.f32.mrb[0].mxu0
      %v1367 = vadd.f32 %v1295, %v1366
      %1368 = vdwg.mxu0
      %v1371 = vcombine.low %v1365, %v1367
      %v1373 = vunpack.c.l.s4 1983009808
      %v1374 = vunpack.c.0.s8 %v1373
      %v1375 = vlaneseq
      %v1376 = vshrl.u32 %v1375, 7
      %v1377 = vsub.s32 %v1374, %v1376
      %v1378 = vrot.slane %v1371, %v1377
      %1380 = vst [vmem:[#allocation15] sm:$0xf] %v1378
      %v1381 = vld [vmem:[#allocation12] sm:$0xff]
      %v1382 = vld [vmem:[#allocation12 + $0x8] sm:$0xff]
      %v1383 = vld [vmem:[#allocation12 + $0x10] sm:$0xff]
      %v1384 = vld [vmem:[#allocation12 + $0x18] sm:$0xff]
      %v1385 = vld [vmem:[#allocation12 + $0x20] sm:$0xff]
      %v1386 = vld [vmem:[#allocation12 + $0x28] sm:$0xff]
      %v1387 = vld [vmem:[#allocation12 + $0x30] sm:$0xff]
      %v1388 = vld [vmem:[#allocation12 + $0x38] sm:$0xff]
      %v1389 = vld [vmem:[#allocation12 + $0x40] sm:$0xff]
      %v1390 = vld [vmem:[#allocation12 + $0x48] sm:$0xff]
      %v1391 = vld [vmem:[#allocation12 + $0x50] sm:$0xff]
      %v1392 = vld [vmem:[#allocation12 + $0x58] sm:$0xff]
      %v1393 = vld [vmem:[#allocation12 + $0x60] sm:$0xff]
      %v1394 = vld [vmem:[#allocation12 + $0x68] sm:$0xff]
      %v1395 = vld [vmem:[#allocation12 + $0x70] sm:$0xff]
      %v1396 = vld [vmem:[#allocation12 + $0x78] sm:$0xff]
      %v1397 = vld [vmem:[#allocation12 + $0x80] sm:$0xff]
      %v1398 = vld [vmem:[#allocation12 + $0x88] sm:$0xff]
      %v1399 = vld [vmem:[#allocation12 + $0x90] sm:$0xff]
      %v1400 = vld [vmem:[#allocation12 + $0x98] sm:$0xff]
      %v1401 = vld [vmem:[#allocation12 + $0xa0] sm:$0xff]
      %v1402 = vld [vmem:[#allocation12 + $0xa8] sm:$0xff]
      %v1403 = vld [vmem:[#allocation12 + $0xb0] sm:$0xff]
      %v1404 = vld [vmem:[#allocation12 + $0xb8] sm:$0xff]
      %v1405 = vld [vmem:[#allocation12 + $0xc0] sm:$0xff]
      %v1406 = vld [vmem:[#allocation12 + $0xc8] sm:$0xff]
      %v1407 = vld [vmem:[#allocation12 + $0xd0] sm:$0xff]
      %v1408 = vld [vmem:[#allocation12 + $0xd8] sm:$0xff]
      %v1409 = vld [vmem:[#allocation12 + $0xe0] sm:$0xff]
      %v1410 = vld [vmem:[#allocation12 + $0xe8] sm:$0xff]
      %v1411 = vld [vmem:[#allocation12 + $0xf0] sm:$0xff]
      %v1412 = vld [vmem:[#allocation12 + $0xf8] sm:$0xff]
      %v1413 = vld [vmem:[#allocation14] sm:$0x1]
      %v1415 = vlaneseq
      %v1416 = vshrl.u32 %v1415, 7
      %v1417 = vsub.s32 0, %v1416
      %v1418 = vrot.slane %v1413, %v1417
      %1420 = vmatprep.subr.mxu0 0.0
      %1421 = vmatpush1.msra.mxu0 %v1381
      %1422 = vmatprep.subr.mxu0 0.0
      %1423 = vmatpush1.msra.mxu0 %v1382
      %1424 = vmatprep.subr.mxu0 0.0
      %1425 = vmatpush1.msra.mxu0 %v1383
      %1426 = vmatprep.subr.mxu0 0.0
      %1427 = vmatpush1.msra.mxu0 %v1384
      %1428 = vmatprep.subr.mxu0 0.0
      %1429 = vmatpush1.msra.mxu0 %v1385
      %1430 = vmatprep.subr.mxu0 0.0
      %1431 = vmatpush1.msra.mxu0 %v1386
      %1432 = vmatprep.subr.mxu0 0.0
      %1433 = vmatpush1.msra.mxu0 %v1387
      %1434 = vmatprep.subr.mxu0 0.0
      %1435 = vmatpush1.msra.mxu0 %v1388
      %1436 = vmatprep.subr.mxu0 0.0
      %1437 = vmatpush1.msra.mxu0 %v1389
      %1438 = vmatprep.subr.mxu0 0.0
      %1439 = vmatpush1.msra.mxu0 %v1390
      %1440 = vmatprep.subr.mxu0 0.0
      %1441 = vmatpush1.msra.mxu0 %v1391
      %1442 = vmatprep.subr.mxu0 0.0
      %1443 = vmatpush1.msra.mxu0 %v1392
      %1444 = vmatprep.subr.mxu0 0.0
      %1445 = vmatpush1.msra.mxu0 %v1393
      %1446 = vmatprep.subr.mxu0 0.0
      %1447 = vmatpush1.msra.mxu0 %v1394
      %1448 = vmatprep.subr.mxu0 0.0
      %1449 = vmatpush1.msra.mxu0 %v1395
      %1450 = vmatprep.subr.mxu0 0.0
      %1451 = vmatpush1.msra.mxu0 %v1396
      %1452 = vmatprep.subr.mxu0 0.0
      %1453 = vmatpush1.msra.mxu0 %v1397
      %1454 = vmatprep.subr.mxu0 0.0
      %1455 = vmatpush1.msra.mxu0 %v1398
      %1456 = vmatprep.subr.mxu0 0.0
      %1457 = vmatpush1.msra.mxu0 %v1399
      %1458 = vmatprep.subr.mxu0 0.0
      %1459 = vmatpush1.msra.mxu0 %v1400
      %1460 = vmatprep.subr.mxu0 0.0
      %1461 = vmatpush1.msra.mxu0 %v1401
      %1462 = vmatprep.subr.mxu0 0.0
      %1463 = vmatpush1.msra.mxu0 %v1402
      %1464 = vmatprep.subr.mxu0 0.0
      %1465 = vmatpush1.msra.mxu0 %v1403
      %1466 = vmatprep.subr.mxu0 0.0
      %1467 = vmatpush1.msra.mxu0 %v1404
      %1468 = vmatprep.subr.mxu0 0.0
      %1469 = vmatpush1.msra.mxu0 %v1405
      %1470 = vmatprep.subr.mxu0 0.0
      %1471 = vmatpush1.msra.mxu0 %v1406
      %1472 = vmatprep.subr.mxu0 0.0
      %1473 = vmatpush1.msra.mxu0 %v1407
      %1474 = vmatprep.subr.mxu0 0.0
      %1475 = vmatpush1.msra.mxu0 %v1408
      %1476 = vmatprep.subr.mxu0 0.0
      %1477 = vmatpush1.msra.mxu0 %v1409
      %1478 = vmatprep.subr.mxu0 0.0
      %1479 = vmatpush1.msra.mxu0 %v1410
      %1480 = vmatprep.subr.mxu0 0.0
      %1481 = vmatpush1.msra.mxu0 %v1411
      %1482 = vmatprep.subr.mxu0 0.0
      %1483 = vmatpush1.msra.mxu0 %v1412
      %1484 = vmatprep.mubr.f32.mxu0 %v1221
      %1485 = vmatmul.mubr.f32.gmra.mrb[0].mxu0 %v1220
      %v1486 = vpop.f32.mrb[0].mxu0
      %v1487 = vadd.f32 %v1418, %v1486
      %v1488 = vpop.f32.mrb[0].mxu0
      %1489 = vdwg.mxu0
      %1490 = vst [vmem:[#allocation16] sm:$0x3] %v1487
    $region65: #{tpu_custom_call.1} parent=1 // pred_fallthru
      _
    // Predicated region
    $region66: #{tpu_custom_call.1} parent=1 // pred_check
      _
    $region67: #{tpu_custom_call.1} parent=1 // pred_check_branch
      %1492 = sbr.rel (0) target = $region69
    $region68: #{tpu_custom_call.1} parent=1 // pred_region
      %s1494 = ssub.s32 64, 64
      %1495 = vsyncadd [#allocation5], %s1494
      %s1497 = sshll.u32 [#allocation15], 4
      %s1498 = int_to_ptr.vmem [resolvable:$true] %s1497
      %1500 = dma.vmem_to_hbm [thread:$0]  %s1498, 64, %s7, [#allocation5]
    $region69: #{tpu_custom_call.1} parent=1 // pred_fallthru
      _
    // Predicated region
    $region70: #{tpu_custom_call.1} parent=1 // pred_check
      _
    $region71: #{tpu_custom_call.1} parent=1 // pred_check_branch
      %1502 = sbr.rel (0) target = $region73
    $region72: #{tpu_custom_call.1} parent=1 // pred_region
      %s1504 = ssub.s32 32, 32
      %1505 = vsyncadd [#allocation17], %s1504
      %s1507 = sshll.u32 [#allocation16], 4
      %s1508 = int_to_ptr.vmem [resolvable:$true] %s1507
      %1510 = dma.vmem_to_hbm [thread:$0]  %s1508, 32, %s8, [#allocation17]
    $region73: #{tpu_custom_call.1} parent=1 // pred_fallthru
      _
    // Predicated region
    $region74: #{tpu_custom_call.1} parent=1 // pred_check
      _
    $region75: #{tpu_custom_call.1} parent=1 // pred_check_branch
      %1512 = sbr.rel (0) target = $region77
    $region76: #{tpu_custom_call.1} parent=1 // pred_region
      %1513 = dma.done [#allocation5], 64
    $region77: #{tpu_custom_call.1} parent=1 // pred_fallthru
      _
    // Predicated region
    $region78: #{tpu_custom_call.1} parent=1 // pred_check
      _
    $region79: #{tpu_custom_call.1} parent=1 // pred_check_branch
      %1515 = sbr.rel (0) target = $region81
    $region80: #{tpu_custom_call.1} parent=1 // pred_region
      %1516 = dma.done [#allocation17], 32
    $region81: #{tpu_custom_call.1} parent=1 // pred_fallthru
      _
    %1517 = vsyncpa [#allocation4], 1
    %1518 = vsyncpa [#allocation7], 1
    %1519 = vsyncpa [#allocation10], 1
    %1520 = vsyncpa [#allocation13], 1
    %1521 = vsyncpa [#allocation5], 1
    %1522 = vsyncpa [#allocation17], 1

// kernel: tpu_custom_call.1
$region0: #{tpu_custom_call.1}
  #allocation0 [shape = 'u32[]', space=smem, size = 0x4, offset = 0x4, fixed_abs, tag = 'smem constant byte address 0x4 - core index']
  #allocation1 [shape = 'u32[144,128]{1,0:T(1,128)}', space=vmem, size = 0x12000, scoped, tag = 'internal scratch']
  #allocation2 [shape = 'f32[2,1280]{1,0:T(2,128)}', space=vmem, size = 0x2800, scoped, tag = 'scratch operand']
  %s0 = inlined_call_operand.hbm [shape: bf16[2,16,1280], index: 0, kind: input, shape index: {}]
  %s1 = inlined_call_operand.hbm [shape: f32[1280,256], index: 1, kind: input, shape index: {}]
  %s2 = inlined_call_operand.hbm [shape: f32[1,256], index: 2, kind: input, shape index: {}]
  %s3 = inlined_call_operand.hbm [shape: f32[256,256], index: 3, kind: input, shape index: {}]
  %s4 = inlined_call_operand.hbm [shape: f32[1,256], index: 4, kind: input, shape index: {}]
  %s5 = inlined_call_operand.hbm [shape: f32[256,128], index: 5, kind: input, shape index: {}]
  %s6 = inlined_call_operand.hbm [shape: f32[1,128], index: 6, kind: input, shape index: {}]
  %s7 = inlined_call_operand.hbm [shape: f32[2,256], index: 7, kind: output, shape index: {0}]
  %s8 = inlined_call_operand.hbm [shape: f32[2,128], index: 8, kind: output, shape index: {1}]
  %9 = xla_tuple %s7, %s8
  %s10 = sld [smem:[#allocation0]]
  $region82: #{tpu_custom_call.1} parent=0
    _
  %s12 = ssub.s32 1, %s10
  %s13 = scalar_select 0, %s12, %s10
  $region1: #{tpu_custom_call.1} parent=0
    #allocation3 [shape = 'u8[81920]{0}', space=vmem, size = 0x14000, scoped, tag = 'input window, operand 0, single buffered']
    #allocation4 [shape = 's32[1]{0}', space=sflag, size = 0x4, scoped, tag = 'scoped memory for tpu_custom_call.1']
    #allocation5 [shape = 's32[1]{0}', space=sflag, size = 0x4, scoped, tag = 'scoped memory for tpu_custom_call.1']
    #allocation6 [shape = 'u8[1310720]{0}', space=vmem, size = 0x140000, scoped, tag = 'input window, operand 1, single buffered']
    #allocation7 [shape = 's32[1]{0}', space=sflag, size = 0x4, scoped, tag = 'scoped memory for tpu_custom_call.1']
    #allocation8 [shape = 'u8[1024]{0}', space=vmem, size = 0x400, scoped, tag = 'input window, operand 2, single buffered']
    #allocation9 [shape = 'u8[262144]{0}', space=vmem, size = 0x40000, scoped, tag = 'input window, operand 3, single buffered']
    #allocation10 [shape = 's32[1]{0}', space=sflag, size = 0x4, scoped, tag = 'scoped memory for tpu_custom_call.1']
    #allocation11 [shape = 'u8[1024]{0}', space=vmem, size = 0x400, scoped, tag = 'input window, operand 4, single buffered']
    #allocation12 [shape = 'u8[131072]{0}', space=vmem, size = 0x20000, scoped, tag = 'input window, operand 5, single buffered']
    #allocation13 [shape = 's32[1]{0}', space=sflag, size = 0x4, scoped, tag = 'scoped memory for tpu_custom_call.1']
    #allocation14 [shape = 'u8[512]{0}', space=vmem, size = 0x400, scoped, tag = 'input window, operand 6, single buffered']
    #allocation15 [shape = 'u8[2048]{0}', space=vmem, size = 0x800, scoped, tag = 'output window, operand 0, single buffered']
    #allocation16 [shape = 'u8[1024]{0}', space=vmem, size = 0x400, scoped, tag = 'output window, operand 1, single buffered']
    #allocation17 [shape = 's32[1]{0}', space=sflag, size = 0x4, scoped, tag = 'scoped memory for tpu_custom_call.1']
    %14 = vsyncpa [#allocation4], 0
    %15 = vsyncpa [#allocation7], 0
    %16 = vsyncpa [#allocation10], 0
    %17 = vsyncpa [#allocation13], 0
    %18 = vsyncpa [#allocation5], 0
    %19 = vsyncpa [#allocation17], 0
    // Predicated region
    $region2: #{tpu_custom_call.1} parent=1 // pred_check
      _
    $region3: #{tpu_custom_call.1} parent=1 // pred_check_branch
      %21 = sbr.rel (0) target = $region5
    $region4: #{tpu_custom_call.1} parent=1 // pred_region
      %s23 = ssub.s32 2560, 2560
      %24 = vsyncadd [#allocation4], %s23
      %s25 = sshll.u32 [#allocation3], 4
      %s26 = int_to_ptr.vmem [resolvable:$true] %s25
      %31 = dma.hbm_to_vmem [thread:$0]  %s0, 2560, %s26, [#allocation4], 640, 640, 40
    $region5: #{tpu_custom_call.1} parent=1 // pred_fallthru
      _
    // Predicated region
    $region6: #{tpu_custom_call.1} parent=1 // pred_check
      _
    $region7: #{tpu_custom_call.1} parent=1 // pred_check_branch
      %33 = sbr.rel (0) target = $region9
    $region8: #{tpu_custom_call.1} parent=1 // pred_region
      %s35 = ssub.s32 40960, 40960
      %36 = vsyncadd [#allocation7], %s35
      %s37 = sshll.u32 [#allocation6], 4
      %s38 = int_to_ptr.vmem [resolvable:$true] %s37
      %43 = dma.hbm_to_vmem [thread:$0]  %s1, 40960, %s38, [#allocation7], 256, 256, 16
    $region9: #{tpu_custom_call.1} parent=1 // pred_fallthru
      _
    // Predicated region
    $region10: #{tpu_custom_call.1} parent=1 // pred_check
      _
    $region11: #{tpu_custom_call.1} parent=1 // pred_check_branch
      %45 = sbr.rel (0) target = $region13
    $region12: #{tpu_custom_call.1} parent=1 // pred_region
      %s47 = ssub.s32 32, 32
      %48 = vsyncadd [#allocation7], %s47
      %s50 = sshll.u32 [#allocation8], 4
      %s51 = int_to_ptr.vmem [resolvable:$true] %s50
      %53 = dma.hbm_to_vmem [thread:$0]  %s2, 32, %s51, [#allocation7]
    $region13: #{tpu_custom_call.1} parent=1 // pred_fallthru
      _
    // Predicated region
    $region14: #{tpu_custom_call.1} parent=1 // pred_check
      _
    $region15: #{tpu_custom_call.1} parent=1 // pred_check_branch
      %55 = sbr.rel (0) target = $region17
    $region16: #{tpu_custom_call.1} parent=1 // pred_region
      %s57 = ssub.s32 8192, 8192
      %58 = vsyncadd [#allocation10], %s57
      %s59 = sshll.u32 [#allocation9], 4
      %s60 = int_to_ptr.vmem [resolvable:$true] %s59
      %65 = dma.hbm_to_vmem [thread:$0]  %s3, 8192, %s60, [#allocation10], 256, 256, 16
    $region17: #{tpu_custom_call.1} parent=1 // pred_fallthru
      _
    // Predicated region
    $region18: #{tpu_custom_call.1} parent=1 // pred_check
      _
    $region19: #{tpu_custom_call.1} parent=1 // pred_check_branch
      %67 = sbr.rel (0) target = $region21
    $region20: #{tpu_custom_call.1} parent=1 // pred_region
      %s69 = ssub.s32 32, 32
      %70 = vsyncadd [#allocation10], %s69
      %s72 = sshll.u32 [#allocation11], 4
      %s73 = int_to_ptr.vmem [resolvable:$true] %s72
      %75 = dma.hbm_to_vmem [thread:$0]  %s4, 32, %s73, [#allocation10]
    $region21: #{tpu_custom_call.1} parent=1 // pred_fallthru
      _
    // Predicated region
    $region22: #{tpu_custom_call.1} parent=1 // pred_check
      _
    $region23: #{tpu_custom_call.1} parent=1 // pred_check_branch
      %77 = sbr.rel (0) target = $region25
    $region24: #{tpu_custom_call.1} parent=1 // pred_region
      %s79 = ssub.s32 4096, 4096
      %80 = vsyncadd [#allocation13], %s79
      %s81 = sshll.u32 [#allocation12], 4
      %s82 = int_to_ptr.vmem [resolvable:$true] %s81
      %87 = dma.hbm_to_vmem [thread:$0]  %s5, 4096, %s82, [#allocation13], 128, 128, 8
    $region25: #{tpu_custom_call.1} parent=1 // pred_fallthru
      _
    // Predicated region
    $region26: #{tpu_custom_call.1} parent=1 // pred_check
      _
    $region27: #{tpu_custom_call.1} parent=1 // pred_check_branch
      %89 = sbr.rel (0) target = $region29
    $region28: #{tpu_custom_call.1} parent=1 // pred_region
      %s91 = ssub.s32 16, 16
      %92 = vsyncadd [#allocation13], %s91
      %s94 = sshll.u32 [#allocation14], 4
      %s95 = int_to_ptr.vmem [resolvable:$true] %s94
      %97 = dma.hbm_to_vmem [thread:$0]  %s6, 16, %s95, [#allocation13]
    $region29: #{tpu_custom_call.1} parent=1 // pred_fallthru
      _
    // Predicated region
    $region30: #{tpu_custom_call.1} parent=1 // pred_check
      _
    $region31: #{tpu_custom_call.1} parent=1 // pred_check_branch
      %99 = sbr.rel (0) target = $region33
    $region32: #{tpu_custom_call.1} parent=1 // pred_region
      %100 = dma.done [#allocation4], 2560
    $region33: #{tpu_custom_call.1} parent=1 // pred_fallthru
      _
    // Predicated region
    $region34: #{tpu_custom_call.1} parent=1 // pred_check
      _
    $region35: #{tpu_custom_call.1} parent=1 // pred_check_branch
      %102 = sbr.rel (0) target = $region37
    $region36: #{tpu_custom_call.1} parent=1 // pred_region
      %103 = dma.done [#allocation7], 40960
    $region37: #{tpu_custom_call.1} parent=1 // pred_fallthru
      _
    // Predicated region
    $region38: #{tpu_custom_call.1} parent=1 // pred_check
      _
    $region39: #{tpu_custom_call.1} parent=1 // pred_check_branch
      %105 = sbr.rel (0) target = $region41
    $region40: #{tpu_custom_call.1} parent=1 // pred_region
      %106 = dma.done [#allocation7], 32
    $region41: #{tpu_custom_call.1} parent=1 // pred_fallthru
      _
    // Predicated region
    $region42: #{tpu_custom_call.1} parent=1 // pred_check
      _
    $region43: #{tpu_custom_call.1} parent=1 // pred_check_branch
      %108 = sbr.rel (0) target = $region45
    $region44: #{tpu_custom_call.1} parent=1 // pred_region
      %109 = dma.done [#allocation10], 8192
    $region45: #{tpu_custom_call.1} parent=1 // pred_fallthru
      _
    // Predicated region
    $region46: #{tpu_custom_call.1} parent=1 // pred_check
      _
    $region47: #{tpu_custom_call.1} parent=1 // pred_check_branch
      %111 = sbr.rel (0) target = $region49
    $region48: #{tpu_custom_call.1} parent=1 // pred_region
      %112 = dma.done [#allocation10], 32
    $region49: #{tpu_custom_call.1} parent=1 // pred_fallthru
      _
    // Predicated region
    $region50: #{tpu_custom_call.1} parent=1 // pred_check
      _
    $region51: #{tpu_custom_call.1} parent=1 // pred_check_branch
      %114 = sbr.rel (0) target = $region53
    $region52: #{tpu_custom_call.1} parent=1 // pred_region
      %115 = dma.done [#allocation13], 4096
    $region53: #{tpu_custom_call.1} parent=1 // pred_fallthru
      _
    // Predicated region
    $region54: #{tpu_custom_call.1} parent=1 // pred_check
      _
    $region55: #{tpu_custom_call.1} parent=1 // pred_check_branch
      %117 = sbr.rel (0) target = $region57
    $region56: #{tpu_custom_call.1} parent=1 // pred_region
      %118 = dma.done [#allocation13], 16
    $region57: #{tpu_custom_call.1} parent=1 // pred_fallthru
      _
    %p119 = scmp.eq.s32.totalorder 0, 0
    // Predicated region
    $region58: #{tpu_custom_call.1} parent=1 // pred_check
      %p120 = pneg %p119
    $region59: #{tpu_custom_call.1} parent=1 // pred_check_branch
      %122 = sbr.rel (%p120) target = $region61
    $region60: #{tpu_custom_call.1} parent=1 // pred_region
      %123 = vst [vmem:[#allocation2] sm:$0xff] 0.0
      %124 = vst [vmem:[#allocation2 + $0x8] sm:$0xff] 0.0
      %125 = vst [vmem:[#allocation2 + $0x10] sm:$0xf] 0.0
    $region61: #{tpu_custom_call.1} parent=1 // pred_fallthru
      _
    %v126 = vld [vmem:[#allocation3] sm:$0xff]
    %v127 = vld [vmem:[#allocation3 + $0x8] sm:$0xff]
    %v128 = vld [vmem:[#allocation3 + $0x10] sm:$0xff]
    %v129 = vld [vmem:[#allocation3 + $0x18] sm:$0xff]
    %v130 = vld [vmem:[#allocation3 + $0x20] sm:$0xff]
    %v131 = vld [vmem:[#allocation3 + $0x28] sm:$0xff]
    %v132 = vld [vmem:[#allocation3 + $0x30] sm:$0xff]
    %v133 = vld [vmem:[#allocation3 + $0x38] sm:$0xff]
    %v134 = vld [vmem:[#allocation3 + $0x40] sm:$0xff]
    %v135 = vld [vmem:[#allocation3 + $0x48] sm:$0xff]
    %v136 = vld [vmem:[#allocation3 + $0x50] sm:$0xff]
    %v137 = vld [vmem:[#allocation3 + $0x58] sm:$0xff]
    %v138 = vld [vmem:[#allocation3 + $0x60] sm:$0xff]
    %v139 = vld [vmem:[#allocation3 + $0x68] sm:$0xff]
    %v140 = vld [vmem:[#allocation3 + $0x70] sm:$0xff]
    %v141 = vld [vmem:[#allocation3 + $0x78] sm:$0xff]
    %v142 = vld [vmem:[#allocation3 + $0x80] sm:$0xff]
    %v143 = vld [vmem:[#allocation3 + $0x88] sm:$0xff]
    %v144 = vld [vmem:[#allocation3 + $0x90] sm:$0xff]
    %v145 = vld [vmem:[#allocation3 + $0x98] sm:$0xff]
    %v146 = vunpack.c.l.bf16 %v126
    %v147 = vunpack.c.h.bf16 %v126
    %v148 = vunpack.c.l.bf16 %v127
    %v149 = vunpack.c.h.bf16 %v127
    %v150 = vunpack.c.l.bf16 %v128
    %v151 = vunpack.c.h.bf16 %v128
    %v152 = vunpack.c.l.bf16 %v129
    %v153 = vunpack.c.h.bf16 %v129
    %v154 = vunpack.c.l.bf16 %v130
    %v155 = vunpack.c.h.bf16 %v130
    %v156 = vunpack.c.l.bf16 %v131
    %v157 = vunpack.c.h.bf16 %v131
    %v158 = vunpack.c.l.bf16 %v132
    %v159 = vunpack.c.h.bf16 %v132
    %v160 = vunpack.c.l.bf16 %v133
    %v161 = vunpack.c.h.bf16 %v133
    %v162 = vunpack.c.l.bf16 %v134
    %v163 = vunpack.c.h.bf16 %v134
    %v164 = vunpack.c.l.bf16 %v135
    %v165 = vunpack.c.h.bf16 %v135
    %v166 = vunpack.c.l.bf16 %v136
    %v167 = vunpack.c.h.bf16 %v136
    %v168 = vunpack.c.l.bf16 %v137
    %v169 = vunpack.c.h.bf16 %v137
    %v170 = vunpack.c.l.bf16 %v138
    %v171 = vunpack.c.h.bf16 %v138
    %v172 = vunpack.c.l.bf16 %v139
    %v173 = vunpack.c.h.bf16 %v139
    %v174 = vunpack.c.l.bf16 %v140
    %v175 = vunpack.c.h.bf16 %v140
    %v176 = vunpack.c.l.bf16 %v141
    %v177 = vunpack.c.h.bf16 %v141
    %v178 = vunpack.c.l.bf16 %v142
    %v179 = vunpack.c.h.bf16 %v142
    %v180 = vunpack.c.l.bf16 %v143
    %v181 = vunpack.c.h.bf16 %v143
    %v182 = vunpack.c.l.bf16 %v144
    %v183 = vunpack.c.h.bf16 %v144
    %v184 = vunpack.c.l.bf16 %v145
    %v185 = vunpack.c.h.bf16 %v145
    %v186 = vld [vmem:[#allocation2] sm:$0xff]
    %v187 = vld [vmem:[#allocation2 + $0x8] sm:$0xff]
    %v188 = vld [vmem:[#allocation2 + $0x10] sm:$0xf]
    %v189 = vadd.f32 %v146, %v156
    %v190 = vrot.slane %v189, 4
    %v191 = vadd.f32 %v189, %v190
    %v192 = vrot.slane %v191, 2
    %v193 = vadd.f32 %v191, %v192
    %v194 = vrot.slane %v193, 1
    %v195 = vadd.f32 %v193, %v194
    %v196 = vadd.f32 %v147, %v157
    %v197 = vrot.slane %v196, 4
    %v198 = vadd.f32 %v196, %v197
    %v199 = vrot.slane %v198, 2
    %v200 = vadd.f32 %v198, %v199
    %v201 = vrot.slane %v200, 1
    %v202 = vadd.f32 %v200, %v201
    %v203 = vadd.f32 %v148, %v158
    %v204 = vrot.slane %v203, 4
    %v205 = vadd.f32 %v203, %v204
    %v206 = vrot.slane %v205, 2
    %v207 = vadd.f32 %v205, %v206
    %v208 = vrot.slane %v207, 1
    %v209 = vadd.f32 %v207, %v208
    %v210 = vadd.f32 %v149, %v159
    %v211 = vrot.slane %v210, 4
    %v212 = vadd.f32 %v210, %v211
    %v213 = vrot.slane %v212, 2
    %v214 = vadd.f32 %v212, %v213
    %v215 = vrot.slane %v214, 1
    %v216 = vadd.f32 %v214, %v215
    %v217 = vadd.f32 %v150, %v160
    %v218 = vrot.slane %v217, 4
    %v219 = vadd.f32 %v217, %v218
    %v220 = vrot.slane %v219, 2
    %v221 = vadd.f32 %v219, %v220
    %v222 = vrot.slane %v221, 1
    %v223 = vadd.f32 %v221, %v222
    %v224 = vadd.f32 %v151, %v161
    %v225 = vrot.slane %v224, 4
    %v226 = vadd.f32 %v224, %v225
    %v227 = vrot.slane %v226, 2
    %v228 = vadd.f32 %v226, %v227
    %v229 = vrot.slane %v228, 1
    %v230 = vadd.f32 %v228, %v229
    %v231 = vadd.f32 %v152, %v162
    %v232 = vrot.slane %v231, 4
    %v233 = vadd.f32 %v231, %v232
    %v234 = vrot.slane %v233, 2
    %v235 = vadd.f32 %v233, %v234
    %v236 = vrot.slane %v235, 1
    %v237 = vadd.f32 %v235, %v236
    %v238 = vadd.f32 %v153, %v163
    %v239 = vrot.slane %v238, 4
    %v240 = vadd.f32 %v238, %v239
    %v241 = vrot.slane %v240, 2
    %v242 = vadd.f32 %v240, %v241
    %v243 = vrot.slane %v242, 1
    %v244 = vadd.f32 %v242, %v243
    %v245 = vadd.f32 %v154, %v164
    %v246 = vrot.slane %v245, 4
    %v247 = vadd.f32 %v245, %v246
    %v248 = vrot.slane %v247, 2
    %v249 = vadd.f32 %v247, %v248
    %v250 = vrot.slane %v249, 1
    %v251 = vadd.f32 %v249, %v250
    %v252 = vadd.f32 %v155, %v165
    %v253 = vrot.slane %v252, 4
    %v254 = vadd.f32 %v252, %v253
    %v255 = vrot.slane %v254, 2
    %v256 = vadd.f32 %v254, %v255
    %v257 = vrot.slane %v256, 1
    %v258 = vadd.f32 %v256, %v257
    %v259 = vadd.f32 %v166, %v176
    %v260 = vrot.slane %v259, 4
    %v261 = vadd.f32 %v259, %v260
    %v262 = vrot.slane %v261, 2
    %v263 = vadd.f32 %v261, %v262
    %v264 = vrot.slane %v263, 1
    %v265 = vadd.f32 %v263, %v264
    %v266 = vadd.f32 %v167, %v177
    %v267 = vrot.slane %v266, 4
    %v268 = vadd.f32 %v266, %v267
    %v269 = vrot.slane %v268, 2
    %v270 = vadd.f32 %v268, %v269
    %v271 = vrot.slane %v270, 1
    %v272 = vadd.f32 %v270, %v271
    %v273 = vadd.f32 %v168, %v178
    %v274 = vrot.slane %v273, 4
    %v275 = vadd.f32 %v273, %v274
    %v276 = vrot.slane %v275, 2
    %v277 = vadd.f32 %v275, %v276
    %v278 = vrot.slane %v277, 1
    %v279 = vadd.f32 %v277, %v278
    %v280 = vadd.f32 %v169, %v179
    %v281 = vrot.slane %v280, 4
    %v282 = vadd.f32 %v280, %v281
    %v283 = vrot.slane %v282, 2
    %v284 = vadd.f32 %v282, %v283
    %v285 = vrot.slane %v284, 1
    %v286 = vadd.f32 %v284, %v285
    %v287 = vadd.f32 %v170, %v180
    %v288 = vrot.slane %v287, 4
    %v289 = vadd.f32 %v287, %v288
    %v290 = vrot.slane %v289, 2
    %v291 = vadd.f32 %v289, %v290
    %v292 = vrot.slane %v291, 1
    %v293 = vadd.f32 %v291, %v292
    %v294 = vadd.f32 %v171, %v181
    %v295 = vrot.slane %v294, 4
    %v296 = vadd.f32 %v294, %v295
    %v297 = vrot.slane %v296, 2
    %v298 = vadd.f32 %v296, %v297
    %v299 = vrot.slane %v298, 1
    %v300 = vadd.f32 %v298, %v299
    %v301 = vadd.f32 %v172, %v182
    %v302 = vrot.slane %v301, 4
    %v303 = vadd.f32 %v301, %v302
    %v304 = vrot.slane %v303, 2
    %v305 = vadd.f32 %v303, %v304
    %v306 = vrot.slane %v305, 1
    %v307 = vadd.f32 %v305, %v306
    %v308 = vadd.f32 %v173, %v183
    %v309 = vrot.slane %v308, 4
    %v310 = vadd.f32 %v308, %v309
    %v311 = vrot.slane %v310, 2
    %v312 = vadd.f32 %v310, %v311
    %v313 = vrot.slane %v312, 1
    %v314 = vadd.f32 %v312, %v313
    %v315 = vadd.f32 %v174, %v184
    %v316 = vrot.slane %v315, 4
    %v317 = vadd.f32 %v315, %v316
    %v318 = vrot.slane %v317, 2
    %v319 = vadd.f32 %v317, %v318
    %v320 = vrot.slane %v319, 1
    %v321 = vadd.f32 %v319, %v320
    %v322 = vadd.f32 %v175, %v185
    %v323 = vrot.slane %v322, 4
    %v324 = vadd.f32 %v322, %v323
    %v325 = vrot.slane %v324, 2
    %v326 = vadd.f32 %v324, %v325
    %v327 = vrot.slane %v326, 1
    %v328 = vadd.f32 %v326, %v327
    %v349 = vcombine.low %v195, %v202
    %v350 = vcombine.low %v209, %v216
    %v352 = vunpack.c.l.s4 1983009808
    %v353 = vunpack.c.0.s8 %v352
    %v354 = vlaneseq
    %v355 = vshrl.u32 %v354, 7
    %v356 = vsub.s32 %v353, %v355
    %v357 = vrot.slane %v349, %v356
    %v359 = vunpack.c.l.s4 1983009808
    %v360 = vunpack.c.0.s8 %v359
    %v361 = vlaneseq
    %v362 = vshrl.u32 %v361, 7
    %v363 = vsub.s32 %v360, %v362
    %v364 = vrot.slane %v350, %v363
    %v365 = vcombine.low %v357, %v364
    %v366 = vcombine.low %v223, %v230
    %v367 = vcombine.low %v237, %v244
    %v369 = vunpack.c.l.s4 1983009808
    %v370 = vunpack.c.0.s8 %v369
    %v371 = vlaneseq
    %v372 = vshrl.u32 %v371, 7
    %v373 = vsub.s32 %v370, %v372
    %v374 = vrot.slane %v366, %v373
    %v376 = vunpack.c.l.s4 1983009808
    %v377 = vunpack.c.0.s8 %v376
    %v378 = vlaneseq
    %v379 = vshrl.u32 %v378, 7
    %v380 = vsub.s32 %v377, %v379
    %v381 = vrot.slane %v367, %v380
    %v382 = vcombine.low %v374, %v381
    %v383 = vcombine.low %v251, %v258
    %v385 = vunpack.c.l.s4 1983009808
    %v386 = vunpack.c.0.s8 %v385
    %v387 = vlaneseq
    %v388 = vshrl.u32 %v387, 7
    %v389 = vsub.s32 %v386, %v388
    %v390 = vrot.slane %v383, %v389
    %v391 = vcombine.low %v265, %v272
    %v392 = vcombine.low %v279, %v286
    %v394 = vunpack.c.l.s4 1983009808
    %v395 = vunpack.c.0.s8 %v394
    %v396 = vlaneseq
    %v397 = vshrl.u32 %v396, 7
    %v398 = vsub.s32 %v395, %v397
    %v399 = vrot.slane %v391, %v398
    %v401 = vunpack.c.l.s4 1983009808
    %v402 = vunpack.c.0.s8 %v401
    %v403 = vlaneseq
    %v404 = vshrl.u32 %v403, 7
    %v405 = vsub.s32 %v402, %v404
    %v406 = vrot.slane %v392, %v405
    %v407 = vcombine.low %v399, %v406
    %v408 = vcombine.low %v293, %v300
    %v409 = vcombine.low %v307, %v314
    %v411 = vunpack.c.l.s4 1983009808
    %v412 = vunpack.c.0.s8 %v411
    %v413 = vlaneseq
    %v414 = vshrl.u32 %v413, 7
    %v415 = vsub.s32 %v412, %v414
    %v416 = vrot.slane %v408, %v415
    %v418 = vunpack.c.l.s4 1983009808
    %v419 = vunpack.c.0.s8 %v418
    %v420 = vlaneseq
    %v421 = vshrl.u32 %v420, 7
    %v422 = vsub.s32 %v419, %v421
    %v423 = vrot.slane %v409, %v422
    %v424 = vcombine.low %v416, %v423
    %v425 = vcombine.low %v321, %v328
    %v427 = vunpack.c.l.s4 1983009808
    %v428 = vunpack.c.0.s8 %v427
    %v429 = vlaneseq
    %v430 = vshrl.u32 %v429, 7
    %v431 = vsub.s32 %v428, %v430
    %v432 = vrot.slane %v425, %v431
    %vm433 = vcmask 1044484
    %v434 = vsel %vm433, %v365, %v365
    %vm435 = vcmask 1046534
    %v436 = vsel %vm435, %v365, %v434
    %v437 = vrot.slane %v407, 7
    %vm438 = vcmask 1041409
    %v439 = vsel %vm438, %v437, %v436
    %vm440 = vcmask 1043459
    %v441 = vsel %vm440, %v437, %v439
    %vm442 = vcmask 1045509
    %v443 = vsel %vm442, %v437, %v441
    %vm444 = vcmask 1047559
    %v445 = vsel %vm444, %v437, %v443
    %v446 = vsel %vm433, %v382, %v382
    %v447 = vsel %vm435, %v382, %v446
    %v448 = vrot.slane %v424, 7
    %v449 = vsel %vm438, %v448, %v447
    %v450 = vsel %vm440, %v448, %v449
    %v451 = vsel %vm442, %v448, %v450
    %v452 = vsel %vm444, %v448, %v451
    %v453 = vsel %vm433, %v390, %v390
    %v454 = vsel %vm435, %v390, %v453
    %v455 = vrot.slane %v432, 7
    %v456 = vsel %vm438, %v455, %v454
    %v457 = vsel %vm440, %v455, %v456
    %v458 = vsel %vm442, %v455, %v457
    %v459 = vsel %vm444, %v455, %v458
    %v463 = vadd.f32 %v186, %v445
    %v464 = vadd.f32 %v187, %v452
    %v465 = vadd.f32 %v188, %v459
    %466 = vst [vmem:[#allocation2] sm:$0xff] %v463
    %467 = vst [vmem:[#allocation2 + $0x8] sm:$0xff] %v464
    %468 = vst [vmem:[#allocation2 + $0x10] sm:$0xf] %v465
    // Predicated region
    $region62: #{tpu_custom_call.1} parent=1 // pred_check
      %p469 = pneg %p119
    $region63: #{tpu_custom_call.1} parent=1 // pred_check_branch
      %471 = sbr.rel (%p469) target = $region65
    $region64: #{tpu_custom_call.1} parent=1 // pred_region
      %v472 = vld [vmem:[#allocation2] sm:$0xff]
      %v473 = vld [vmem:[#allocation2 + $0x8] sm:$0xff]
      %v474 = vld [vmem:[#allocation2 + $0x10] sm:$0xf]
      %v475 = vmul.f32 %v472, 0.0625
      %v476 = vmul.f32 %v473, 0.0625
      %v477 = vmul.f32 %v474, 0.0625
      %v478 = vld [vmem:[#allocation6] sm:$0xff]
      %v479 = vld [vmem:[#allocation6 + $0x8] sm:$0xff]
      %v480 = vld [vmem:[#allocation6 + $0x10] sm:$0xff]
      %v481 = vld [vmem:[#allocation6 + $0x18] sm:$0xff]
      %v482 = vld [vmem:[#allocation6 + $0x20] sm:$0xff]
      %v483 = vld [vmem:[#allocation6 + $0x28] sm:$0xff]
      %v484 = vld [vmem:[#allocation6 + $0x30] sm:$0xff]
      %v485 = vld [vmem:[#allocation6 + $0x38] sm:$0xff]
      %v486 = vld [vmem:[#allocation6 + $0x40] sm:$0xff]
      %v487 = vld [vmem:[#allocation6 + $0x48] sm:$0xff]
      %v488 = vld [vmem:[#allocation6 + $0x50] sm:$0xff]
      %v489 = vld [vmem:[#allocation6 + $0x58] sm:$0xff]
      %v490 = vld [vmem:[#allocation6 + $0x60] sm:$0xff]
      %v491 = vld [vmem:[#allocation6 + $0x68] sm:$0xff]
      %v492 = vld [vmem:[#allocation6 + $0x70] sm:$0xff]
      %v493 = vld [vmem:[#allocation6 + $0x78] sm:$0xff]
      %v494 = vld [vmem:[#allocation6 + $0x80] sm:$0xff]
      %v495 = vld [vmem:[#allocation6 + $0x88] sm:$0xff]
      %v496 = vld [vmem:[#allocation6 + $0x90] sm:$0xff]
      %v497 = vld [vmem:[#allocation6 + $0x98] sm:$0xff]
      %v498 = vld [vmem:[#allocation6 + $0xa0] sm:$0xff]
      %v499 = vld [vmem:[#allocation6 + $0xa8] sm:$0xff]
      %v500 = vld [vmem:[#allocation6 + $0xb0] sm:$0xff]
      %v501 = vld [vmem:[#allocation6 + $0xb8] sm:$0xff]
      %v502 = vld [vmem:[#allocation6 + $0xc0] sm:$0xff]
      %v503 = vld [vmem:[#allocation6 + $0xc8] sm:$0xff]
      %v504 = vld [vmem:[#allocation6 + $0xd0] sm:$0xff]
      %v505 = vld [vmem:[#allocation6 + $0xd8] sm:$0xff]
      %v506 = vld [vmem:[#allocation6 + $0xe0] sm:$0xff]
      %v507 = vld [vmem:[#allocation6 + $0xe8] sm:$0xff]
      %v508 = vld [vmem:[#allocation6 + $0xf0] sm:$0xff]
      %v509 = vld [vmem:[#allocation6 + $0xf8] sm:$0xff]
      %v510 = vld [vmem:[#allocation6 + $0x100] sm:$0xff]
      %v511 = vld [vmem:[#allocation6 + $0x108] sm:$0xff]
      %v512 = vld [vmem:[#allocation6 + $0x110] sm:$0xff]
      %v513 = vld [vmem:[#allocation6 + $0x118] sm:$0xff]
      %v514 = vld [vmem:[#allocation6 + $0x120] sm:$0xff]
      %v515 = vld [vmem:[#allocation6 + $0x128] sm:$0xff]
      %v516 = vld [vmem:[#allocation6 + $0x130] sm:$0xff]
      %v517 = vld [vmem:[#allocation6 + $0x138] sm:$0xff]
      %v518 = vld [vmem:[#allocation6 + $0x140] sm:$0xff]
      %v519 = vld [vmem:[#allocation6 + $0x148] sm:$0xff]
      %v520 = vld [vmem:[#allocation6 + $0x150] sm:$0xff]
      %v521 = vld [vmem:[#allocation6 + $0x158] sm:$0xff]
      %v522 = vld [vmem:[#allocation6 + $0x160] sm:$0xff]
      %v523 = vld [vmem:[#allocation6 + $0x168] sm:$0xff]
      %v524 = vld [vmem:[#allocation6 + $0x170] sm:$0xff]
      %v525 = vld [vmem:[#allocation6 + $0x178] sm:$0xff]
      %v526 = vld [vmem:[#allocation6 + $0x180] sm:$0xff]
      %v527 = vld [vmem:[#allocation6 + $0x188] sm:$0xff]
      %v528 = vld [vmem:[#allocation6 + $0x190] sm:$0xff]
      %v529 = vld [vmem:[#allocation6 + $0x198] sm:$0xff]
      %v530 = vld [vmem:[#allocation6 + $0x1a0] sm:$0xff]
      %v531 = vld [vmem:[#allocation6 + $0x1a8] sm:$0xff]
      %v532 = vld [vmem:[#allocation6 + $0x1b0] sm:$0xff]
      %v533 = vld [vmem:[#allocation6 + $0x1b8] sm:$0xff]
      %v534 = vld [vmem:[#allocation6 + $0x1c0] sm:$0xff]
      %v535 = vld [vmem:[#allocation6 + $0x1c8] sm:$0xff]
      %v536 = vld [vmem:[#allocation6 + $0x1d0] sm:$0xff]
      %v537 = vld [vmem:[#allocation6 + $0x1d8] sm:$0xff]
      %v538 = vld [vmem:[#allocation6 + $0x1e0] sm:$0xff]
      %v539 = vld [vmem:[#allocation6 + $0x1e8] sm:$0xff]
      %v540 = vld [vmem:[#allocation6 + $0x1f0] sm:$0xff]
      %v541 = vld [vmem:[#allocation6 + $0x1f8] sm:$0xff]
      %v542 = vld [vmem:[#allocation6 + $0x200] sm:$0xff]
      %v543 = vld [vmem:[#allocation6 + $0x208] sm:$0xff]
      %v544 = vld [vmem:[#allocation6 + $0x210] sm:$0xff]
      %v545 = vld [vmem:[#allocation6 + $0x218] sm:$0xff]
      %v546 = vld [vmem:[#allocation6 + $0x220] sm:$0xff]
      %v547 = vld [vmem:[#allocation6 + $0x228] sm:$0xff]
      %v548 = vld [vmem:[#allocation6 + $0x230] sm:$0xff]
      %v549 = vld [vmem:[#allocation6 + $0x238] sm:$0xff]
      %v550 = vld [vmem:[#allocation6 + $0x240] sm:$0xff]
      %v551 = vld [vmem:[#allocation6 + $0x248] sm:$0xff]
      %v552 = vld [vmem:[#allocation6 + $0x250] sm:$0xff]
      %v553 = vld [vmem:[#allocation6 + $0x258] sm:$0xff]
      %v554 = vld [vmem:[#allocation6 + $0x260] sm:$0xff]
      %v555 = vld [vmem:[#allocation6 + $0x268] sm:$0xff]
      %v556 = vld [vmem:[#allocation6 + $0x270] sm:$0xff]
      %v557 = vld [vmem:[#allocation6 + $0x278] sm:$0xff]
      %v558 = vld [vmem:[#allocation6 + $0x280] sm:$0xff]
      %v559 = vld [vmem:[#allocation6 + $0x288] sm:$0xff]
      %v560 = vld [vmem:[#allocation6 + $0x290] sm:$0xff]
      %v561 = vld [vmem:[#allocation6 + $0x298] sm:$0xff]
      %v562 = vld [vmem:[#allocation6 + $0x2a0] sm:$0xff]
      %v563 = vld [vmem:[#allocation6 + $0x2a8] sm:$0xff]
      %v564 = vld [vmem:[#allocation6 + $0x2b0] sm:$0xff]
      %v565 = vld [vmem:[#allocation6 + $0x2b8] sm:$0xff]
      %v566 = vld [vmem:[#allocation6 + $0x2c0] sm:$0xff]
      %v567 = vld [vmem:[#allocation6 + $0x2c8] sm:$0xff]
      %v568 = vld [vmem:[#allocation6 + $0x2d0] sm:$0xff]
      %v569 = vld [vmem:[#allocation6 + $0x2d8] sm:$0xff]
      %v570 = vld [vmem:[#allocation6 + $0x2e0] sm:$0xff]
      %v571 = vld [vmem:[#allocation6 + $0x2e8] sm:$0xff]
      %v572 = vld [vmem:[#allocation6 + $0x2f0] sm:$0xff]
      %v573 = vld [vmem:[#allocation6 + $0x2f8] sm:$0xff]
      %v574 = vld [vmem:[#allocation6 + $0x300] sm:$0xff]
      %v575 = vld [vmem:[#allocation6 + $0x308] sm:$0xff]
      %v576 = vld [vmem:[#allocation6 + $0x310] sm:$0xff]
      %v577 = vld [vmem:[#allocation6 + $0x318] sm:$0xff]
      %v578 = vld [vmem:[#allocation6 + $0x320] sm:$0xff]
      %v579 = vld [vmem:[#allocation6 + $0x328] sm:$0xff]
      %v580 = vld [vmem:[#allocation6 + $0x330] sm:$0xff]
      %v581 = vld [vmem:[#allocation6 + $0x338] sm:$0xff]
      %v582 = vld [vmem:[#allocation6 + $0x340] sm:$0xff]
      %v583 = vld [vmem:[#allocation6 + $0x348] sm:$0xff]
      %v584 = vld [vmem:[#allocation6 + $0x350] sm:$0xff]
      %v585 = vld [vmem:[#allocation6 + $0x358] sm:$0xff]
      %v586 = vld [vmem:[#allocation6 + $0x360] sm:$0xff]
      %v587 = vld [vmem:[#allocation6 + $0x368] sm:$0xff]
      %v588 = vld [vmem:[#allocation6 + $0x370] sm:$0xff]
      %v589 = vld [vmem:[#allocation6 + $0x378] sm:$0xff]
      %v590 = vld [vmem:[#allocation6 + $0x380] sm:$0xff]
      %v591 = vld [vmem:[#allocation6 + $0x388] sm:$0xff]
      %v592 = vld [vmem:[#allocation6 + $0x390] sm:$0xff]
      %v593 = vld [vmem:[#allocation6 + $0x398] sm:$0xff]
      %v594 = vld [vmem:[#allocation6 + $0x3a0] sm:$0xff]
      %v595 = vld [vmem:[#allocation6 + $0x3a8] sm:$0xff]
      %v596 = vld [vmem:[#allocation6 + $0x3b0] sm:$0xff]
      %v597 = vld [vmem:[#allocation6 + $0x3b8] sm:$0xff]
      %v598 = vld [vmem:[#allocation6 + $0x3c0] sm:$0xff]
      %v599 = vld [vmem:[#allocation6 + $0x3c8] sm:$0xff]
      %v600 = vld [vmem:[#allocation6 + $0x3d0] sm:$0xff]
      %v601 = vld [vmem:[#allocation6 + $0x3d8] sm:$0xff]
      %v602 = vld [vmem:[#allocation6 + $0x3e0] sm:$0xff]
      %v603 = vld [vmem:[#allocation6 + $0x3e8] sm:$0xff]
      %v604 = vld [vmem:[#allocation6 + $0x3f0] sm:$0xff]
      %v605 = vld [vmem:[#allocation6 + $0x3f8] sm:$0xff]
      %v606 = vld [vmem:[#allocation6 + $0x400] sm:$0xff]
      %v607 = vld [vmem:[#allocation6 + $0x408] sm:$0xff]
      %v608 = vld [vmem:[#allocation6 + $0x410] sm:$0xff]
      %v609 = vld [vmem:[#allocation6 + $0x418] sm:$0xff]
      %v610 = vld [vmem:[#allocation6 + $0x420] sm:$0xff]
      %v611 = vld [vmem:[#allocation6 + $0x428] sm:$0xff]
      %v612 = vld [vmem:[#allocation6 + $0x430] sm:$0xff]
      %v613 = vld [vmem:[#allocation6 + $0x438] sm:$0xff]
      %v614 = vld [vmem:[#allocation6 + $0x440] sm:$0xff]
      %v615 = vld [vmem:[#allocation6 + $0x448] sm:$0xff]
      %v616 = vld [vmem:[#allocation6 + $0x450] sm:$0xff]
      %v617 = vld [vmem:[#allocation6 + $0x458] sm:$0xff]
      %v618 = vld [vmem:[#allocation6 + $0x460] sm:$0xff]
      %v619 = vld [vmem:[#allocation6 + $0x468] sm:$0xff]
      %v620 = vld [vmem:[#allocation6 + $0x470] sm:$0xff]
      %v621 = vld [vmem:[#allocation6 + $0x478] sm:$0xff]
      %v622 = vld [vmem:[#allocation6 + $0x480] sm:$0xff]
      %v623 = vld [vmem:[#allocation6 + $0x488] sm:$0xff]
      %v624 = vld [vmem:[#allocation6 + $0x490] sm:$0xff]
      %v625 = vld [vmem:[#allocation6 + $0x498] sm:$0xff]
      %v626 = vld [vmem:[#allocation6 + $0x4a0] sm:$0xff]
      %v627 = vld [vmem:[#allocation6 + $0x4a8] sm:$0xff]
      %v628 = vld [vmem:[#allocation6 + $0x4b0] sm:$0xff]
      %v629 = vld [vmem:[#allocation6 + $0x4b8] sm:$0xff]
      %v630 = vld [vmem:[#allocation6 + $0x4c0] sm:$0xff]
      %v631 = vld [vmem:[#allocation6 + $0x4c8] sm:$0xff]
      %v632 = vld [vmem:[#allocation6 + $0x4d0] sm:$0xff]
      %v633 = vld [vmem:[#allocation6 + $0x4d8] sm:$0xff]
      %v634 = vld [vmem:[#allocation6 + $0x4e0] sm:$0xff]
      %v635 = vld [vmem:[#allocation6 + $0x4e8] sm:$0xff]
      %v636 = vld [vmem:[#allocation6 + $0x4f0] sm:$0xff]
      %v637 = vld [vmem:[#allocation6 + $0x4f8] sm:$0xff]
      %v638 = vld [vmem:[#allocation6 + $0x500] sm:$0xff]
      %v639 = vld [vmem:[#allocation6 + $0x508] sm:$0xff]
      %v640 = vld [vmem:[#allocation6 + $0x510] sm:$0xff]
      %v641 = vld [vmem:[#allocation6 + $0x518] sm:$0xff]
      %v642 = vld [vmem:[#allocation6 + $0x520] sm:$0xff]
      %v643 = vld [vmem:[#allocation6 + $0x528] sm:$0xff]
      %v644 = vld [vmem:[#allocation6 + $0x530] sm:$0xff]
      %v645 = vld [vmem:[#allocation6 + $0x538] sm:$0xff]
      %v646 = vld [vmem:[#allocation6 + $0x540] sm:$0xff]
      %v647 = vld [vmem:[#allocation6 + $0x548] sm:$0xff]
      %v648 = vld [vmem:[#allocation6 + $0x550] sm:$0xff]
      %v649 = vld [vmem:[#allocation6 + $0x558] sm:$0xff]
      %v650 = vld [vmem:[#allocation6 + $0x560] sm:$0xff]
      %v651 = vld [vmem:[#allocation6 + $0x568] sm:$0xff]
      %v652 = vld [vmem:[#allocation6 + $0x570] sm:$0xff]
      %v653 = vld [vmem:[#allocation6 + $0x578] sm:$0xff]
      %v654 = vld [vmem:[#allocation6 + $0x580] sm:$0xff]
      %v655 = vld [vmem:[#allocation6 + $0x588] sm:$0xff]
      %v656 = vld [vmem:[#allocation6 + $0x590] sm:$0xff]
      %v657 = vld [vmem:[#allocation6 + $0x598] sm:$0xff]
      %v658 = vld [vmem:[#allocation6 + $0x5a0] sm:$0xff]
      %v659 = vld [vmem:[#allocation6 + $0x5a8] sm:$0xff]
      %v660 = vld [vmem:[#allocation6 + $0x5b0] sm:$0xff]
      %v661 = vld [vmem:[#allocation6 + $0x5b8] sm:$0xff]
      %v662 = vld [vmem:[#allocation6 + $0x5c0] sm:$0xff]
      %v663 = vld [vmem:[#allocation6 + $0x5c8] sm:$0xff]
      %v664 = vld [vmem:[#allocation6 + $0x5d0] sm:$0xff]
      %v665 = vld [vmem:[#allocation6 + $0x5d8] sm:$0xff]
      %v666 = vld [vmem:[#allocation6 + $0x5e0] sm:$0xff]
      %v667 = vld [vmem:[#allocation6 + $0x5e8] sm:$0xff]
      %v668 = vld [vmem:[#allocation6 + $0x5f0] sm:$0xff]
      %v669 = vld [vmem:[#allocation6 + $0x5f8] sm:$0xff]
      %v670 = vld [vmem:[#allocation6 + $0x600] sm:$0xff]
      %v671 = vld [vmem:[#allocation6 + $0x608] sm:$0xff]
      %v672 = vld [vmem:[#allocation6 + $0x610] sm:$0xff]
      %v673 = vld [vmem:[#allocation6 + $0x618] sm:$0xff]
      %v674 = vld [vmem:[#allocation6 + $0x620] sm:$0xff]
      %v675 = vld [vmem:[#allocation6 + $0x628] sm:$0xff]
      %v676 = vld [vmem:[#allocation6 + $0x630] sm:$0xff]
      %v677 = vld [vmem:[#allocation6 + $0x638] sm:$0xff]
      %v678 = vld [vmem:[#allocation6 + $0x640] sm:$0xff]
      %v679 = vld [vmem:[#allocation6 + $0x648] sm:$0xff]
      %v680 = vld [vmem:[#allocation6 + $0x650] sm:$0xff]
      %v681 = vld [vmem:[#allocation6 + $0x658] sm:$0xff]
      %v682 = vld [vmem:[#allocation6 + $0x660] sm:$0xff]
      %v683 = vld [vmem:[#allocation6 + $0x668] sm:$0xff]
      %v684 = vld [vmem:[#allocation6 + $0x670] sm:$0xff]
      %v685 = vld [vmem:[#allocation6 + $0x678] sm:$0xff]
      %v686 = vld [vmem:[#allocation6 + $0x680] sm:$0xff]
      %v687 = vld [vmem:[#allocation6 + $0x688] sm:$0xff]
      %v688 = vld [vmem:[#allocation6 + $0x690] sm:$0xff]
      %v689 = vld [vmem:[#allocation6 + $0x698] sm:$0xff]
      %v690 = vld [vmem:[#allocation6 + $0x6a0] sm:$0xff]
      %v691 = vld [vmem:[#allocation6 + $0x6a8] sm:$0xff]
      %v692 = vld [vmem:[#allocation6 + $0x6b0] sm:$0xff]
      %v693 = vld [vmem:[#allocation6 + $0x6b8] sm:$0xff]
      %v694 = vld [vmem:[#allocation6 + $0x6c0] sm:$0xff]
      %v695 = vld [vmem:[#allocation6 + $0x6c8] sm:$0xff]
      %v696 = vld [vmem:[#allocation6 + $0x6d0] sm:$0xff]
      %v697 = vld [vmem:[#allocation6 + $0x6d8] sm:$0xff]
      %v698 = vld [vmem:[#allocation6 + $0x6e0] sm:$0xff]
      %v699 = vld [vmem:[#allocation6 + $0x6e8] sm:$0xff]
      %v700 = vld [vmem:[#allocation6 + $0x6f0] sm:$0xff]
      %v701 = vld [vmem:[#allocation6 + $0x6f8] sm:$0xff]
      %v702 = vld [vmem:[#allocation6 + $0x700] sm:$0xff]
      %v703 = vld [vmem:[#allocation6 + $0x708] sm:$0xff]
      %v704 = vld [vmem:[#allocation6 + $0x710] sm:$0xff]
      %v705 = vld [vmem:[#allocation6 + $0x718] sm:$0xff]
      %v706 = vld [vmem:[#allocation6 + $0x720] sm:$0xff]
      %v707 = vld [vmem:[#allocation6 + $0x728] sm:$0xff]
      %v708 = vld [vmem:[#allocation6 + $0x730] sm:$0xff]
      %v709 = vld [vmem:[#allocation6 + $0x738] sm:$0xff]
      %v710 = vld [vmem:[#allocation6 + $0x740] sm:$0xff]
      %v711 = vld [vmem:[#allocation6 + $0x748] sm:$0xff]
      %v712 = vld [vmem:[#allocation6 + $0x750] sm:$0xff]
      %v713 = vld [vmem:[#allocation6 + $0x758] sm:$0xff]
      %v714 = vld [vmem:[#allocation6 + $0x760] sm:$0xff]
      %v715 = vld [vmem:[#allocation6 + $0x768] sm:$0xff]
      %v716 = vld [vmem:[#allocation6 + $0x770] sm:$0xff]
      %v717 = vld [vmem:[#allocation6 + $0x778] sm:$0xff]
      %v718 = vld [vmem:[#allocation6 + $0x780] sm:$0xff]
      %v719 = vld [vmem:[#allocation6 + $0x788] sm:$0xff]
      %v720 = vld [vmem:[#allocation6 + $0x790] sm:$0xff]
      %v721 = vld [vmem:[#allocation6 + $0x798] sm:$0xff]
      %v722 = vld [vmem:[#allocation6 + $0x7a0] sm:$0xff]
      %v723 = vld [vmem:[#allocation6 + $0x7a8] sm:$0xff]
      %v724 = vld [vmem:[#allocation6 + $0x7b0] sm:$0xff]
      %v725 = vld [vmem:[#allocation6 + $0x7b8] sm:$0xff]
      %v726 = vld [vmem:[#allocation6 + $0x7c0] sm:$0xff]
      %v727 = vld [vmem:[#allocation6 + $0x7c8] sm:$0xff]
      %v728 = vld [vmem:[#allocation6 + $0x7d0] sm:$0xff]
      %v729 = vld [vmem:[#allocation6 + $0x7d8] sm:$0xff]
      %v730 = vld [vmem:[#allocation6 + $0x7e0] sm:$0xff]
      %v731 = vld [vmem:[#allocation6 + $0x7e8] sm:$0xff]
      %v732 = vld [vmem:[#allocation6 + $0x7f0] sm:$0xff]
      %v733 = vld [vmem:[#allocation6 + $0x7f8] sm:$0xff]
      %v734 = vld [vmem:[#allocation6 + $0x800] sm:$0xff]
      %v735 = vld [vmem:[#allocation6 + $0x808] sm:$0xff]
      %v736 = vld [vmem:[#allocation6 + $0x810] sm:$0xff]
      %v737 = vld [vmem:[#allocation6 + $0x818] sm:$0xff]
      %v738 = vld [vmem:[#allocation6 + $0x820] sm:$0xff]
      %v739 = vld [vmem:[#allocation6 + $0x828] sm:$0xff]
      %v740 = vld [vmem:[#allocation6 + $0x830] sm:$0xff]
      %v741 = vld [vmem:[#allocation6 + $0x838] sm:$0xff]
      %v742 = vld [vmem:[#allocation6 + $0x840] sm:$0xff]
      %v743 = vld [vmem:[#allocation6 + $0x848] sm:$0xff]
      %v744 = vld [vmem:[#allocation6 + $0x850] sm:$0xff]
      %v745 = vld [vmem:[#allocation6 + $0x858] sm:$0xff]
      %v746 = vld [vmem:[#allocation6 + $0x860] sm:$0xff]
      %v747 = vld [vmem:[#allocation6 + $0x868] sm:$0xff]
      %v748 = vld [vmem:[#allocation6 + $0x870] sm:$0xff]
      %v749 = vld [vmem:[#allocation6 + $0x878] sm:$0xff]
      %v750 = vld [vmem:[#allocation6 + $0x880] sm:$0xff]
      %v751 = vld [vmem:[#allocation6 + $0x888] sm:$0xff]
      %v752 = vld [vmem:[#allocation6 + $0x890] sm:$0xff]
      %v753 = vld [vmem:[#allocation6 + $0x898] sm:$0xff]
      %v754 = vld [vmem:[#allocation6 + $0x8a0] sm:$0xff]
      %v755 = vld [vmem:[#allocation6 + $0x8a8] sm:$0xff]
      %v756 = vld [vmem:[#allocation6 + $0x8b0] sm:$0xff]
      %v757 = vld [vmem:[#allocation6 + $0x8b8] sm:$0xff]
      %v758 = vld [vmem:[#allocation6 + $0x8c0] sm:$0xff]
      %v759 = vld [vmem:[#allocation6 + $0x8c8] sm:$0xff]
      %v760 = vld [vmem:[#allocation6 + $0x8d0] sm:$0xff]
      %v761 = vld [vmem:[#allocation6 + $0x8d8] sm:$0xff]
      %v762 = vld [vmem:[#allocation6 + $0x8e0] sm:$0xff]
      %v763 = vld [vmem:[#allocation6 + $0x8e8] sm:$0xff]
      %v764 = vld [vmem:[#allocation6 + $0x8f0] sm:$0xff]
      %v765 = vld [vmem:[#allocation6 + $0x8f8] sm:$0xff]
      %v766 = vld [vmem:[#allocation6 + $0x900] sm:$0xff]
      %v767 = vld [vmem:[#allocation6 + $0x908] sm:$0xff]
      %v768 = vld [vmem:[#allocation6 + $0x910] sm:$0xff]
      %v769 = vld [vmem:[#allocation6 + $0x918] sm:$0xff]
      %v770 = vld [vmem:[#allocation6 + $0x920] sm:$0xff]
      %v771 = vld [vmem:[#allocation6 + $0x928] sm:$0xff]
      %v772 = vld [vmem:[#allocation6 + $0x930] sm:$0xff]
      %v773 = vld [vmem:[#allocation6 + $0x938] sm:$0xff]
      %v774 = vld [vmem:[#allocation6 + $0x940] sm:$0xff]
      %v775 = vld [vmem:[#allocation6 + $0x948] sm:$0xff]
      %v776 = vld [vmem:[#allocation6 + $0x950] sm:$0xff]
      %v777 = vld [vmem:[#allocation6 + $0x958] sm:$0xff]
      %v778 = vld [vmem:[#allocation6 + $0x960] sm:$0xff]
      %v779 = vld [vmem:[#allocation6 + $0x968] sm:$0xff]
      %v780 = vld [vmem:[#allocation6 + $0x970] sm:$0xff]
      %v781 = vld [vmem:[#allocation6 + $0x978] sm:$0xff]
      %v782 = vld [vmem:[#allocation6 + $0x980] sm:$0xff]
      %v783 = vld [vmem:[#allocation6 + $0x988] sm:$0xff]
      %v784 = vld [vmem:[#allocation6 + $0x990] sm:$0xff]
      %v785 = vld [vmem:[#allocation6 + $0x998] sm:$0xff]
      %v786 = vld [vmem:[#allocation6 + $0x9a0] sm:$0xff]
      %v787 = vld [vmem:[#allocation6 + $0x9a8] sm:$0xff]
      %v788 = vld [vmem:[#allocation6 + $0x9b0] sm:$0xff]
      %v789 = vld [vmem:[#allocation6 + $0x9b8] sm:$0xff]
      %v790 = vld [vmem:[#allocation6 + $0x9c0] sm:$0xff]
      %v791 = vld [vmem:[#allocation6 + $0x9c8] sm:$0xff]
      %v792 = vld [vmem:[#allocation6 + $0x9d0] sm:$0xff]
      %v793 = vld [vmem:[#allocation6 + $0x9d8] sm:$0xff]
      %v794 = vld [vmem:[#allocation6 + $0x9e0] sm:$0xff]
      %v795 = vld [vmem:[#allocation6 + $0x9e8] sm:$0xff]
      %v796 = vld [vmem:[#allocation6 + $0x9f0] sm:$0xff]
      %v797 = vld [vmem:[#allocation6 + $0x9f8] sm:$0xff]
      %v798 = vld [vmem:[#allocation8] sm:$0x3]
      %v800 = vlaneseq
      %v801 = vshrl.u32 %v800, 7
      %v802 = vsub.s32 0, %v801
      %v803 = vrot.slane %v798, %v802
      %v804 = vlaneseq
      %v805 = vshrl.u32 %v804, 7
      %v806 = vsub.s32 1, %v805
      %v807 = vrot.slane %v798, %v806
      %v813 = vcombine.high %v475, %v475
      %v815 = vunpack.c.l.s4 1983009808
      %v816 = vunpack.c.0.s8 %v815
      %v817 = vlaneseq
      %v818 = vshrl.u32 %v817, 7
      %v819 = vsub.s32 %v816, %v818
      %v820 = vrot.slane %v475, %v819
      %v822 = vunpack.c.l.s4 1983009808
      %v823 = vunpack.c.0.s8 %v822
      %v824 = vlaneseq
      %v825 = vshrl.u32 %v824, 7
      %v826 = vsub.s32 %v823, %v825
      %v827 = vrot.slane %v813, %v826
      %v828 = vcombine.high %v820, %v820
      %v829 = vcombine.high %v827, %v827
      %v830 = vcombine.high %v476, %v476
      %v832 = vunpack.c.l.s4 1983009808
      %v833 = vunpack.c.0.s8 %v832
      %v834 = vlaneseq
      %v835 = vshrl.u32 %v834, 7
      %v836 = vsub.s32 %v833, %v835
      %v837 = vrot.slane %v476, %v836
      %v839 = vunpack.c.l.s4 1983009808
      %v840 = vunpack.c.0.s8 %v839
      %v841 = vlaneseq
      %v842 = vshrl.u32 %v841, 7
      %v843 = vsub.s32 %v840, %v842
      %v844 = vrot.slane %v830, %v843
      %v845 = vcombine.high %v837, %v837
      %v846 = vcombine.high %v844, %v844
      %v848 = vunpack.c.l.s4 1983009808
      %v849 = vunpack.c.0.s8 %v848
      %v850 = vlaneseq
      %v851 = vshrl.u32 %v850, 7
      %v852 = vsub.s32 %v849, %v851
      %v853 = vrot.slane %v477, %v852
      %v854 = vcombine.high %v853, %v853
      %865 = vmatprep.subr.mxu0 %v479
      %866 = vmatpush1.msra.mxu0 %v478
      %867 = vmatprep.subr.mxu0 %v481
      %868 = vmatpush1.msra.mxu0 %v480
      %869 = vmatprep.subr.mxu0 %v483
      %870 = vmatpush1.msra.mxu0 %v482
      %871 = vmatprep.subr.mxu0 %v485
      %872 = vmatpush1.msra.mxu0 %v484
      %873 = vmatprep.subr.mxu0 %v487
      %874 = vmatpush1.msra.mxu0 %v486
      %875 = vmatprep.subr.mxu0 %v489
      %876 = vmatpush1.msra.mxu0 %v488
      %877 = vmatprep.subr.mxu0 %v491
      %878 = vmatpush1.msra.mxu0 %v490
      %879 = vmatprep.subr.mxu0 %v493
      %880 = vmatpush1.msra.mxu0 %v492
      %881 = vmatprep.subr.mxu0 %v495
      %882 = vmatpush1.msra.mxu0 %v494
      %883 = vmatprep.subr.mxu0 %v497
      %884 = vmatpush1.msra.mxu0 %v496
      %885 = vmatprep.subr.mxu0 %v499
      %886 = vmatpush1.msra.mxu0 %v498
      %887 = vmatprep.subr.mxu0 %v501
      %888 = vmatpush1.msra.mxu0 %v500
      %889 = vmatprep.subr.mxu0 %v503
      %890 = vmatpush1.msra.mxu0 %v502
      %891 = vmatprep.subr.mxu0 %v505
      %892 = vmatpush1.msra.mxu0 %v504
      %893 = vmatprep.subr.mxu0 %v507
      %894 = vmatpush1.msra.mxu0 %v506
      %895 = vmatprep.subr.mxu0 %v509
      %896 = vmatpush1.msra.mxu0 %v508
      %897 = vmatprep.subr.mxu0 %v511
      %898 = vmatpush1.msra.mxu0 %v510
      %899 = vmatprep.subr.mxu0 %v513
      %900 = vmatpush1.msra.mxu0 %v512
      %901 = vmatprep.subr.mxu0 %v515
      %902 = vmatpush1.msra.mxu0 %v514
      %903 = vmatprep.subr.mxu0 %v517
      %904 = vmatpush1.msra.mxu0 %v516
      %905 = vmatprep.subr.mxu0 %v519
      %906 = vmatpush1.msra.mxu0 %v518
      %907 = vmatprep.subr.mxu0 %v521
      %908 = vmatpush1.msra.mxu0 %v520
      %909 = vmatprep.subr.mxu0 %v523
      %910 = vmatpush1.msra.mxu0 %v522
      %911 = vmatprep.subr.mxu0 %v525
      %912 = vmatpush1.msra.mxu0 %v524
      %913 = vmatprep.subr.mxu0 %v527
      %914 = vmatpush1.msra.mxu0 %v526
      %915 = vmatprep.subr.mxu0 %v529
      %916 = vmatpush1.msra.mxu0 %v528
      %917 = vmatprep.subr.mxu0 %v531
      %918 = vmatpush1.msra.mxu0 %v530
      %919 = vmatprep.subr.mxu0 %v533
      %920 = vmatpush1.msra.mxu0 %v532
      %921 = vmatprep.subr.mxu0 %v535
      %922 = vmatpush1.msra.mxu0 %v534
      %923 = vmatprep.subr.mxu0 %v537
      %924 = vmatpush1.msra.mxu0 %v536
      %925 = vmatprep.subr.mxu0 %v539
      %926 = vmatpush1.msra.mxu0 %v538
      %927 = vmatprep.subr.mxu0 %v541
      %928 = vmatpush1.msra.mxu0 %v540
      %929 = vmatprep.mubr.f32.mxu0 %v828
      %930 = vmatmul.mubr.f32.gmra.mrb[0].mxu0 %v820
      %v931 = vpop.f32.mrb[0].mxu0
      %v932 = vadd.f32 %v803, %v931
      %v933 = vpop.f32.mrb[0].mxu0
      %v934 = vadd.f32 %v807, %v933
      %935 = vdwg.mxu0
      %936 = vmatprep.subr.mxu0 %v543
      %937 = vmatpush1.msra.mxu0 %v542
      %938 = vmatprep.subr.mxu0 %v545
      %939 = vmatpush1.msra.mxu0 %v544
      %940 = vmatprep.subr.mxu0 %v547
      %941 = vmatpush1.msra.mxu0 %v546
      %942 = vmatprep.subr.mxu0 %v549
      %943 = vmatpush1.msra.mxu0 %v548
      %944 = vmatprep.subr.mxu0 %v551
      %945 = vmatpush1.msra.mxu0 %v550
      %946 = vmatprep.subr.mxu0 %v553
      %947 = vmatpush1.msra.mxu0 %v552
      %948 = vmatprep.subr.mxu0 %v555
      %949 = vmatpush1.msra.mxu0 %v554
      %950 = vmatprep.subr.mxu0 %v557
      %951 = vmatpush1.msra.mxu0 %v556
      %952 = vmatprep.subr.mxu0 %v559
      %953 = vmatpush1.msra.mxu0 %v558
      %954 = vmatprep.subr.mxu0 %v561
      %955 = vmatpush1.msra.mxu0 %v560
      %956 = vmatprep.subr.mxu0 %v563
      %957 = vmatpush1.msra.mxu0 %v562
      %958 = vmatprep.subr.mxu0 %v565
      %959 = vmatpush1.msra.mxu0 %v564
      %960 = vmatprep.subr.mxu0 %v567
      %961 = vmatpush1.msra.mxu0 %v566
      %962 = vmatprep.subr.mxu0 %v569
      %963 = vmatpush1.msra.mxu0 %v568
      %964 = vmatprep.subr.mxu0 %v571
      %965 = vmatpush1.msra.mxu0 %v570
      %966 = vmatprep.subr.mxu0 %v573
      %967 = vmatpush1.msra.mxu0 %v572
      %968 = vmatprep.subr.mxu0 %v575
      %969 = vmatpush1.msra.mxu0 %v574
      %970 = vmatprep.subr.mxu0 %v577
      %971 = vmatpush1.msra.mxu0 %v576
      %972 = vmatprep.subr.mxu0 %v579
      %973 = vmatpush1.msra.mxu0 %v578
      %974 = vmatprep.subr.mxu0 %v581
      %975 = vmatpush1.msra.mxu0 %v580
      %976 = vmatprep.subr.mxu0 %v583
      %977 = vmatpush1.msra.mxu0 %v582
      %978 = vmatprep.subr.mxu0 %v585
      %979 = vmatpush1.msra.mxu0 %v584
      %980 = vmatprep.subr.mxu0 %v587
      %981 = vmatpush1.msra.mxu0 %v586
      %982 = vmatprep.subr.mxu0 %v589
      %983 = vmatpush1.msra.mxu0 %v588
      %984 = vmatprep.subr.mxu0 %v591
      %985 = vmatpush1.msra.mxu0 %v590
      %986 = vmatprep.subr.mxu0 %v593
      %987 = vmatpush1.msra.mxu0 %v592
      %988 = vmatprep.subr.mxu0 %v595
      %989 = vmatpush1.msra.mxu0 %v594
      %990 = vmatprep.subr.mxu0 %v597
      %991 = vmatpush1.msra.mxu0 %v596
      %992 = vmatprep.subr.mxu0 %v599
      %993 = vmatpush1.msra.mxu0 %v598
      %994 = vmatprep.subr.mxu0 %v601
      %995 = vmatpush1.msra.mxu0 %v600
      %996 = vmatprep.subr.mxu0 %v603
      %997 = vmatpush1.msra.mxu0 %v602
      %998 = vmatprep.subr.mxu0 %v605
      %999 = vmatpush1.msra.mxu0 %v604
      %1000 = vmatprep.mubr.f32.mxu0 %v829
      %1001 = vmatmul.mubr.f32.gmra.mrb[0].mxu0 %v827
      %v1002 = vpop.f32.mrb[0].mxu0
      %v1003 = vadd.f32 %v932, %v1002
      %v1004 = vpop.f32.mrb[0].mxu0
      %v1005 = vadd.f32 %v934, %v1004
      %1006 = vdwg.mxu0
      %1007 = vmatprep.subr.mxu0 %v607
      %1008 = vmatpush1.msra.mxu0 %v606
      %1009 = vmatprep.subr.mxu0 %v609
      %1010 = vmatpush1.msra.mxu0 %v608
      %1011 = vmatprep.subr.mxu0 %v611
      %1012 = vmatpush1.msra.mxu0 %v610
      %1013 = vmatprep.subr.mxu0 %v613
      %1014 = vmatpush1.msra.mxu0 %v612
      %1015 = vmatprep.subr.mxu0 %v615
      %1016 = vmatpush1.msra.mxu0 %v614
      %1017 = vmatprep.subr.mxu0 %v617
      %1018 = vmatpush1.msra.mxu0 %v616
      %1019 = vmatprep.subr.mxu0 %v619
      %1020 = vmatpush1.msra.mxu0 %v618
      %1021 = vmatprep.subr.mxu0 %v621
      %1022 = vmatpush1.msra.mxu0 %v620
      %1023 = vmatprep.subr.mxu0 %v623
      %1024 = vmatpush1.msra.mxu0 %v622
      %1025 = vmatprep.subr.mxu0 %v625
      %1026 = vmatpush1.msra.mxu0 %v624
      %1027 = vmatprep.subr.mxu0 %v627
      %1028 = vmatpush1.msra.mxu0 %v626
      %1029 = vmatprep.subr.mxu0 %v629
      %1030 = vmatpush1.msra.mxu0 %v628
      %1031 = vmatprep.subr.mxu0 %v631
      %1032 = vmatpush1.msra.mxu0 %v630
      %1033 = vmatprep.subr.mxu0 %v633
      %1034 = vmatpush1.msra.mxu0 %v632
      %1035 = vmatprep.subr.mxu0 %v635
      %1036 = vmatpush1.msra.mxu0 %v634
      %1037 = vmatprep.subr.mxu0 %v637
      %1038 = vmatpush1.msra.mxu0 %v636
      %1039 = vmatprep.subr.mxu0 %v639
      %1040 = vmatpush1.msra.mxu0 %v638
      %1041 = vmatprep.subr.mxu0 %v641
      %1042 = vmatpush1.msra.mxu0 %v640
      %1043 = vmatprep.subr.mxu0 %v643
      %1044 = vmatpush1.msra.mxu0 %v642
      %1045 = vmatprep.subr.mxu0 %v645
      %1046 = vmatpush1.msra.mxu0 %v644
      %1047 = vmatprep.subr.mxu0 %v647
      %1048 = vmatpush1.msra.mxu0 %v646
      %1049 = vmatprep.subr.mxu0 %v649
      %1050 = vmatpush1.msra.mxu0 %v648
      %1051 = vmatprep.subr.mxu0 %v651
      %1052 = vmatpush1.msra.mxu0 %v650
      %1053 = vmatprep.subr.mxu0 %v653
      %1054 = vmatpush1.msra.mxu0 %v652
      %1055 = vmatprep.subr.mxu0 %v655
      %1056 = vmatpush1.msra.mxu0 %v654
      %1057 = vmatprep.subr.mxu0 %v657
      %1058 = vmatpush1.msra.mxu0 %v656
      %1059 = vmatprep.subr.mxu0 %v659
      %1060 = vmatpush1.msra.mxu0 %v658
      %1061 = vmatprep.subr.mxu0 %v661
      %1062 = vmatpush1.msra.mxu0 %v660
      %1063 = vmatprep.subr.mxu0 %v663
      %1064 = vmatpush1.msra.mxu0 %v662
      %1065 = vmatprep.subr.mxu0 %v665
      %1066 = vmatpush1.msra.mxu0 %v664
      %1067 = vmatprep.subr.mxu0 %v667
      %1068 = vmatpush1.msra.mxu0 %v666
      %1069 = vmatprep.subr.mxu0 %v669
      %1070 = vmatpush1.msra.mxu0 %v668
      %1071 = vmatprep.mubr.f32.mxu0 %v845
      %1072 = vmatmul.mubr.f32.gmra.mrb[0].mxu0 %v837
      %v1073 = vpop.f32.mrb[0].mxu0
      %v1074 = vadd.f32 %v1003, %v1073
      %v1075 = vpop.f32.mrb[0].mxu0
      %v1076 = vadd.f32 %v1005, %v1075
      %1077 = vdwg.mxu0
      %1078 = vmatprep.subr.mxu0 %v671
      %1079 = vmatpush1.msra.mxu0 %v670
      %1080 = vmatprep.subr.mxu0 %v673
      %1081 = vmatpush1.msra.mxu0 %v672
      %1082 = vmatprep.subr.mxu0 %v675
      %1083 = vmatpush1.msra.mxu0 %v674
      %1084 = vmatprep.subr.mxu0 %v677
      %1085 = vmatpush1.msra.mxu0 %v676
      %1086 = vmatprep.subr.mxu0 %v679
      %1087 = vmatpush1.msra.mxu0 %v678
      %1088 = vmatprep.subr.mxu0 %v681
      %1089 = vmatpush1.msra.mxu0 %v680
      %1090 = vmatprep.subr.mxu0 %v683
      %1091 = vmatpush1.msra.mxu0 %v682
      %1092 = vmatprep.subr.mxu0 %v685
      %1093 = vmatpush1.msra.mxu0 %v684
      %1094 = vmatprep.subr.mxu0 %v687
      %1095 = vmatpush1.msra.mxu0 %v686
      %1096 = vmatprep.subr.mxu0 %v689
      %1097 = vmatpush1.msra.mxu0 %v688
      %1098 = vmatprep.subr.mxu0 %v691
      %1099 = vmatpush1.msra.mxu0 %v690
      %1100 = vmatprep.subr.mxu0 %v693
      %1101 = vmatpush1.msra.mxu0 %v692
      %1102 = vmatprep.subr.mxu0 %v695
      %1103 = vmatpush1.msra.mxu0 %v694
      %1104 = vmatprep.subr.mxu0 %v697
      %1105 = vmatpush1.msra.mxu0 %v696
      %1106 = vmatprep.subr.mxu0 %v699
      %1107 = vmatpush1.msra.mxu0 %v698
      %1108 = vmatprep.subr.mxu0 %v701
      %1109 = vmatpush1.msra.mxu0 %v700
      %1110 = vmatprep.subr.mxu0 %v703
      %1111 = vmatpush1.msra.mxu0 %v702
      %1112 = vmatprep.subr.mxu0 %v705
      %1113 = vmatpush1.msra.mxu0 %v704
      %1114 = vmatprep.subr.mxu0 %v707
      %1115 = vmatpush1.msra.mxu0 %v706
      %1116 = vmatprep.subr.mxu0 %v709
      %1117 = vmatpush1.msra.mxu0 %v708
      %1118 = vmatprep.subr.mxu0 %v711
      %1119 = vmatpush1.msra.mxu0 %v710
      %1120 = vmatprep.subr.mxu0 %v713
      %1121 = vmatpush1.msra.mxu0 %v712
      %1122 = vmatprep.subr.mxu0 %v715
      %1123 = vmatpush1.msra.mxu0 %v714
      %1124 = vmatprep.subr.mxu0 %v717
      %1125 = vmatpush1.msra.mxu0 %v716
      %1126 = vmatprep.subr.mxu0 %v719
      %1127 = vmatpush1.msra.mxu0 %v718
      %1128 = vmatprep.subr.mxu0 %v721
      %1129 = vmatpush1.msra.mxu0 %v720
      %1130 = vmatprep.subr.mxu0 %v723
      %1131 = vmatpush1.msra.mxu0 %v722
      %1132 = vmatprep.subr.mxu0 %v725
      %1133 = vmatpush1.msra.mxu0 %v724
      %1134 = vmatprep.subr.mxu0 %v727
      %1135 = vmatpush1.msra.mxu0 %v726
      %1136 = vmatprep.subr.mxu0 %v729
      %1137 = vmatpush1.msra.mxu0 %v728
      %1138 = vmatprep.subr.mxu0 %v731
      %1139 = vmatpush1.msra.mxu0 %v730
      %1140 = vmatprep.subr.mxu0 %v733
      %1141 = vmatpush1.msra.mxu0 %v732
      %1142 = vmatprep.mubr.f32.mxu0 %v846
      %1143 = vmatmul.mubr.f32.gmra.mrb[0].mxu0 %v844
      %v1144 = vpop.f32.mrb[0].mxu0
      %v1145 = vadd.f32 %v1074, %v1144
      %v1146 = vpop.f32.mrb[0].mxu0
      %v1147 = vadd.f32 %v1076, %v1146
      %1148 = vdwg.mxu0
      %1149 = vmatprep.subr.mxu0 %v735
      %1150 = vmatpush1.msra.mxu0 %v734
      %1151 = vmatprep.subr.mxu0 %v737
      %1152 = vmatpush1.msra.mxu0 %v736
      %1153 = vmatprep.subr.mxu0 %v739
      %1154 = vmatpush1.msra.mxu0 %v738
      %1155 = vmatprep.subr.mxu0 %v741
      %1156 = vmatpush1.msra.mxu0 %v740
      %1157 = vmatprep.subr.mxu0 %v743
      %1158 = vmatpush1.msra.mxu0 %v742
      %1159 = vmatprep.subr.mxu0 %v745
      %1160 = vmatpush1.msra.mxu0 %v744
      %1161 = vmatprep.subr.mxu0 %v747
      %1162 = vmatpush1.msra.mxu0 %v746
      %1163 = vmatprep.subr.mxu0 %v749
      %1164 = vmatpush1.msra.mxu0 %v748
      %1165 = vmatprep.subr.mxu0 %v751
      %1166 = vmatpush1.msra.mxu0 %v750
      %1167 = vmatprep.subr.mxu0 %v753
      %1168 = vmatpush1.msra.mxu0 %v752
      %1169 = vmatprep.subr.mxu0 %v755
      %1170 = vmatpush1.msra.mxu0 %v754
      %1171 = vmatprep.subr.mxu0 %v757
      %1172 = vmatpush1.msra.mxu0 %v756
      %1173 = vmatprep.subr.mxu0 %v759
      %1174 = vmatpush1.msra.mxu0 %v758
      %1175 = vmatprep.subr.mxu0 %v761
      %1176 = vmatpush1.msra.mxu0 %v760
      %1177 = vmatprep.subr.mxu0 %v763
      %1178 = vmatpush1.msra.mxu0 %v762
      %1179 = vmatprep.subr.mxu0 %v765
      %1180 = vmatpush1.msra.mxu0 %v764
      %1181 = vmatprep.subr.mxu0 %v767
      %1182 = vmatpush1.msra.mxu0 %v766
      %1183 = vmatprep.subr.mxu0 %v769
      %1184 = vmatpush1.msra.mxu0 %v768
      %1185 = vmatprep.subr.mxu0 %v771
      %1186 = vmatpush1.msra.mxu0 %v770
      %1187 = vmatprep.subr.mxu0 %v773
      %1188 = vmatpush1.msra.mxu0 %v772
      %1189 = vmatprep.subr.mxu0 %v775
      %1190 = vmatpush1.msra.mxu0 %v774
      %1191 = vmatprep.subr.mxu0 %v777
      %1192 = vmatpush1.msra.mxu0 %v776
      %1193 = vmatprep.subr.mxu0 %v779
      %1194 = vmatpush1.msra.mxu0 %v778
      %1195 = vmatprep.subr.mxu0 %v781
      %1196 = vmatpush1.msra.mxu0 %v780
      %1197 = vmatprep.subr.mxu0 %v783
      %1198 = vmatpush1.msra.mxu0 %v782
      %1199 = vmatprep.subr.mxu0 %v785
      %1200 = vmatpush1.msra.mxu0 %v784
      %1201 = vmatprep.subr.mxu0 %v787
      %1202 = vmatpush1.msra.mxu0 %v786
      %1203 = vmatprep.subr.mxu0 %v789
      %1204 = vmatpush1.msra.mxu0 %v788
      %1205 = vmatprep.subr.mxu0 %v791
      %1206 = vmatpush1.msra.mxu0 %v790
      %1207 = vmatprep.subr.mxu0 %v793
      %1208 = vmatpush1.msra.mxu0 %v792
      %1209 = vmatprep.subr.mxu0 %v795
      %1210 = vmatpush1.msra.mxu0 %v794
      %1211 = vmatprep.subr.mxu0 %v797
      %1212 = vmatpush1.msra.mxu0 %v796
      %1213 = vmatprep.mubr.f32.mxu0 %v854
      %1214 = vmatmul.mubr.f32.gmra.mrb[0].mxu0 %v853
      %v1215 = vpop.f32.mrb[0].mxu0
      %v1216 = vadd.f32 %v1145, %v1215
      %v1217 = vpop.f32.mrb[0].mxu0
      %v1218 = vadd.f32 %v1147, %v1217
      %1219 = vdwg.mxu0
      %v1220 = vmax.f32 %v1216, 0.0
      %v1221 = vmax.f32 %v1218, 0.0
      %v1222 = vld [vmem:[#allocation9] sm:$0xff]
      %v1223 = vld [vmem:[#allocation9 + $0x8] sm:$0xff]
      %v1224 = vld [vmem:[#allocation9 + $0x10] sm:$0xff]
      %v1225 = vld [vmem:[#allocation9 + $0x18] sm:$0xff]
      %v1226 = vld [vmem:[#allocation9 + $0x20] sm:$0xff]
      %v1227 = vld [vmem:[#allocation9 + $0x28] sm:$0xff]
      %v1228 = vld [vmem:[#allocation9 + $0x30] sm:$0xff]
      %v1229 = vld [vmem:[#allocation9 + $0x38] sm:$0xff]
      %v1230 = vld [vmem:[#allocation9 + $0x40] sm:$0xff]
      %v1231 = vld [vmem:[#allocation9 + $0x48] sm:$0xff]
      %v1232 = vld [vmem:[#allocation9 + $0x50] sm:$0xff]
      %v1233 = vld [vmem:[#allocation9 + $0x58] sm:$0xff]
      %v1234 = vld [vmem:[#allocation9 + $0x60] sm:$0xff]
      %v1235 = vld [vmem:[#allocation9 + $0x68] sm:$0xff]
      %v1236 = vld [vmem:[#allocation9 + $0x70] sm:$0xff]
      %v1237 = vld [vmem:[#allocation9 + $0x78] sm:$0xff]
      %v1238 = vld [vmem:[#allocation9 + $0x80] sm:$0xff]
      %v1239 = vld [vmem:[#allocation9 + $0x88] sm:$0xff]
      %v1240 = vld [vmem:[#allocation9 + $0x90] sm:$0xff]
      %v1241 = vld [vmem:[#allocation9 + $0x98] sm:$0xff]
      %v1242 = vld [vmem:[#allocation9 + $0xa0] sm:$0xff]
      %v1243 = vld [vmem:[#allocation9 + $0xa8] sm:$0xff]
      %v1244 = vld [vmem:[#allocation9 + $0xb0] sm:$0xff]
      %v1245 = vld [vmem:[#allocation9 + $0xb8] sm:$0xff]
      %v1246 = vld [vmem:[#allocation9 + $0xc0] sm:$0xff]
      %v1247 = vld [vmem:[#allocation9 + $0xc8] sm:$0xff]
      %v1248 = vld [vmem:[#allocation9 + $0xd0] sm:$0xff]
      %v1249 = vld [vmem:[#allocation9 + $0xd8] sm:$0xff]
      %v1250 = vld [vmem:[#allocation9 + $0xe0] sm:$0xff]
      %v1251 = vld [vmem:[#allocation9 + $0xe8] sm:$0xff]
      %v1252 = vld [vmem:[#allocation9 + $0xf0] sm:$0xff]
      %v1253 = vld [vmem:[#allocation9 + $0xf8] sm:$0xff]
      %v1254 = vld [vmem:[#allocation9 + $0x100] sm:$0xff]
      %v1255 = vld [vmem:[#allocation9 + $0x108] sm:$0xff]
      %v1256 = vld [vmem:[#allocation9 + $0x110] sm:$0xff]
      %v1257 = vld [vmem:[#allocation9 + $0x118] sm:$0xff]
      %v1258 = vld [vmem:[#allocation9 + $0x120] sm:$0xff]
      %v1259 = vld [vmem:[#allocation9 + $0x128] sm:$0xff]
      %v1260 = vld [vmem:[#allocation9 + $0x130] sm:$0xff]
      %v1261 = vld [vmem:[#allocation9 + $0x138] sm:$0xff]
      %v1262 = vld [vmem:[#allocation9 + $0x140] sm:$0xff]
      %v1263 = vld [vmem:[#allocation9 + $0x148] sm:$0xff]
      %v1264 = vld [vmem:[#allocation9 + $0x150] sm:$0xff]
      %v1265 = vld [vmem:[#allocation9 + $0x158] sm:$0xff]
      %v1266 = vld [vmem:[#allocation9 + $0x160] sm:$0xff]
      %v1267 = vld [vmem:[#allocation9 + $0x168] sm:$0xff]
      %v1268 = vld [vmem:[#allocation9 + $0x170] sm:$0xff]
      %v1269 = vld [vmem:[#allocation9 + $0x178] sm:$0xff]
      %v1270 = vld [vmem:[#allocation9 + $0x180] sm:$0xff]
      %v1271 = vld [vmem:[#allocation9 + $0x188] sm:$0xff]
      %v1272 = vld [vmem:[#allocation9 + $0x190] sm:$0xff]
      %v1273 = vld [vmem:[#allocation9 + $0x198] sm:$0xff]
      %v1274 = vld [vmem:[#allocation9 + $0x1a0] sm:$0xff]
      %v1275 = vld [vmem:[#allocation9 + $0x1a8] sm:$0xff]
      %v1276 = vld [vmem:[#allocation9 + $0x1b0] sm:$0xff]
      %v1277 = vld [vmem:[#allocation9 + $0x1b8] sm:$0xff]
      %v1278 = vld [vmem:[#allocation9 + $0x1c0] sm:$0xff]
      %v1279 = vld [vmem:[#allocation9 + $0x1c8] sm:$0xff]
      %v1280 = vld [vmem:[#allocation9 + $0x1d0] sm:$0xff]
      %v1281 = vld [vmem:[#allocation9 + $0x1d8] sm:$0xff]
      %v1282 = vld [vmem:[#allocation9 + $0x1e0] sm:$0xff]
      %v1283 = vld [vmem:[#allocation9 + $0x1e8] sm:$0xff]
      %v1284 = vld [vmem:[#allocation9 + $0x1f0] sm:$0xff]
      %v1285 = vld [vmem:[#allocation9 + $0x1f8] sm:$0xff]
      %v1286 = vld [vmem:[#allocation11] sm:$0x3]
      %v1288 = vlaneseq
      %v1289 = vshrl.u32 %v1288, 7
      %v1290 = vsub.s32 0, %v1289
      %v1291 = vrot.slane %v1286, %v1290
      %v1292 = vlaneseq
      %v1293 = vshrl.u32 %v1292, 7
      %v1294 = vsub.s32 1, %v1293
      %v1295 = vrot.slane %v1286, %v1294
      %1298 = vmatprep.subr.mxu0 %v1223
      %1299 = vmatpush1.msra.mxu0 %v1222
      %1300 = vmatprep.subr.mxu0 %v1225
      %1301 = vmatpush1.msra.mxu0 %v1224
      %1302 = vmatprep.subr.mxu0 %v1227
      %1303 = vmatpush1.msra.mxu0 %v1226
      %1304 = vmatprep.subr.mxu0 %v1229
      %1305 = vmatpush1.msra.mxu0 %v1228
      %1306 = vmatprep.subr.mxu0 %v1231
      %1307 = vmatpush1.msra.mxu0 %v1230
      %1308 = vmatprep.subr.mxu0 %v1233
      %1309 = vmatpush1.msra.mxu0 %v1232
      %1310 = vmatprep.subr.mxu0 %v1235
      %1311 = vmatpush1.msra.mxu0 %v1234
      %1312 = vmatprep.subr.mxu0 %v1237
      %1313 = vmatpush1.msra.mxu0 %v1236
      %1314 = vmatprep.subr.mxu0 %v1239
      %1315 = vmatpush1.msra.mxu0 %v1238
      %1316 = vmatprep.subr.mxu0 %v1241
      %1317 = vmatpush1.msra.mxu0 %v1240
      %1318 = vmatprep.subr.mxu0 %v1243
      %1319 = vmatpush1.msra.mxu0 %v1242
      %1320 = vmatprep.subr.mxu0 %v1245
      %1321 = vmatpush1.msra.mxu0 %v1244
      %1322 = vmatprep.subr.mxu0 %v1247
      %1323 = vmatpush1.msra.mxu0 %v1246
      %1324 = vmatprep.subr.mxu0 %v1249
      %1325 = vmatpush1.msra.mxu0 %v1248
      %1326 = vmatprep.subr.mxu0 %v1251
      %1327 = vmatpush1.msra.mxu0 %v1250
      %1328 = vmatprep.subr.mxu0 %v1253
      %1329 = vmatpush1.msra.mxu0 %v1252
      %1330 = vmatprep.subr.mxu0 %v1255
      %1331 = vmatpush1.msra.mxu0 %v1254
      %1332 = vmatprep.subr.mxu0 %v1257
      %1333 = vmatpush1.msra.mxu0 %v1256
      %1334 = vmatprep.subr.mxu0 %v1259
      %1335 = vmatpush1.msra.mxu0 %v1258
      %1336 = vmatprep.subr.mxu0 %v1261
      %1337 = vmatpush1.msra.mxu0 %v1260
      %1338 = vmatprep.subr.mxu0 %v1263
      %1339 = vmatpush1.msra.mxu0 %v1262
      %1340 = vmatprep.subr.mxu0 %v1265
      %1341 = vmatpush1.msra.mxu0 %v1264
      %1342 = vmatprep.subr.mxu0 %v1267
      %1343 = vmatpush1.msra.mxu0 %v1266
      %1344 = vmatprep.subr.mxu0 %v1269
      %1345 = vmatpush1.msra.mxu0 %v1268
      %1346 = vmatprep.subr.mxu0 %v1271
      %1347 = vmatpush1.msra.mxu0 %v1270
      %1348 = vmatprep.subr.mxu0 %v1273
      %1349 = vmatpush1.msra.mxu0 %v1272
      %1350 = vmatprep.subr.mxu0 %v1275
      %1351 = vmatpush1.msra.mxu0 %v1274
      %1352 = vmatprep.subr.mxu0 %v1277
      %1353 = vmatpush1.msra.mxu0 %v1276
      %1354 = vmatprep.subr.mxu0 %v1279
      %1355 = vmatpush1.msra.mxu0 %v1278
      %1356 = vmatprep.subr.mxu0 %v1281
      %1357 = vmatpush1.msra.mxu0 %v1280
      %1358 = vmatprep.subr.mxu0 %v1283
      %1359 = vmatpush1.msra.mxu0 %v1282
      %1360 = vmatprep.subr.mxu0 %v1285
      %1361 = vmatpush1.msra.mxu0 %v1284
      %1362 = vmatprep.mubr.f32.mxu0 %v1221
      %1363 = vmatmul.mubr.f32.gmra.mrb[0].mxu0 %v1220
      %v1364 = vpop.f32.mrb[0].mxu0
      %v1365 = vadd.f32 %v1291, %v1364
      %v1366 = vpop.f32.mrb[0].mxu0
      %v1367 = vadd.f32 %v1295, %v1366
      %1368 = vdwg.mxu0
      %v1371 = vcombine.low %v1365, %v1367
      %v1373 = vunpack.c.l.s4 1983009808
      %v1374 = vunpack.c.0.s8 %v1373
      %v1375 = vlaneseq
      %v1376 = vshrl.u32 %v1375, 7
      %v1377 = vsub.s32 %v1374, %v1376
      %v1378 = vrot.slane %v1371, %v1377
      %1380 = vst [vmem:[#allocation15] sm:$0xf] %v1378
      %v1381 = vld [vmem:[#allocation12] sm:$0xff]
      %v1382 = vld [vmem:[#allocation12 + $0x8] sm:$0xff]
      %v1383 = vld [vmem:[#allocation12 + $0x10] sm:$0xff]
      %v1384 = vld [vmem:[#allocation12 + $0x18] sm:$0xff]
      %v1385 = vld [vmem:[#allocation12 + $0x20] sm:$0xff]
      %v1386 = vld [vmem:[#allocation12 + $0x28] sm:$0xff]
      %v1387 = vld [vmem:[#allocation12 + $0x30] sm:$0xff]
      %v1388 = vld [vmem:[#allocation12 + $0x38] sm:$0xff]
      %v1389 = vld [vmem:[#allocation12 + $0x40] sm:$0xff]
      %v1390 = vld [vmem:[#allocation12 + $0x48] sm:$0xff]
      %v1391 = vld [vmem:[#allocation12 + $0x50] sm:$0xff]
      %v1392 = vld [vmem:[#allocation12 + $0x58] sm:$0xff]
      %v1393 = vld [vmem:[#allocation12 + $0x60] sm:$0xff]
      %v1394 = vld [vmem:[#allocation12 + $0x68] sm:$0xff]
      %v1395 = vld [vmem:[#allocation12 + $0x70] sm:$0xff]
      %v1396 = vld [vmem:[#allocation12 + $0x78] sm:$0xff]
      %v1397 = vld [vmem:[#allocation12 + $0x80] sm:$0xff]
      %v1398 = vld [vmem:[#allocation12 + $0x88] sm:$0xff]
      %v1399 = vld [vmem:[#allocation12 + $0x90] sm:$0xff]
      %v1400 = vld [vmem:[#allocation12 + $0x98] sm:$0xff]
      %v1401 = vld [vmem:[#allocation12 + $0xa0] sm:$0xff]
      %v1402 = vld [vmem:[#allocation12 + $0xa8] sm:$0xff]
      %v1403 = vld [vmem:[#allocation12 + $0xb0] sm:$0xff]
      %v1404 = vld [vmem:[#allocation12 + $0xb8] sm:$0xff]
      %v1405 = vld [vmem:[#allocation12 + $0xc0] sm:$0xff]
      %v1406 = vld [vmem:[#allocation12 + $0xc8] sm:$0xff]
      %v1407 = vld [vmem:[#allocation12 + $0xd0] sm:$0xff]
      %v1408 = vld [vmem:[#allocation12 + $0xd8] sm:$0xff]
      %v1409 = vld [vmem:[#allocation12 + $0xe0] sm:$0xff]
      %v1410 = vld [vmem:[#allocation12 + $0xe8] sm:$0xff]
      %v1411 = vld [vmem:[#allocation12 + $0xf0] sm:$0xff]
      %v1412 = vld [vmem:[#allocation12 + $0xf8] sm:$0xff]
      %v1413 = vld [vmem:[#allocation14] sm:$0x1]
      %v1415 = vlaneseq
      %v1416 = vshrl.u32 %v1415, 7
      %v1417 = vsub.s32 0, %v1416
      %v1418 = vrot.slane %v1413, %v1417
      %1420 = vmatprep.subr.mxu0 0.0
      %1421 = vmatpush1.msra.mxu0 %v1381
      %1422 = vmatprep.subr.mxu0 0.0
      %1423 = vmatpush1.msra.mxu0 %v1382
      %1424 = vmatprep.subr.mxu0 0.0
      %1425 = vmatpush1.msra.mxu0 %v1383
      %1426 = vmatprep.subr.mxu0 0.0
      %1427 = vmatpush1.msra.mxu0 %v1384
      %1428 = vmatprep.subr.mxu0 0.0
      %1429 = vmatpush1.msra.mxu0 %v1385
      %1430 = vmatprep.subr.mxu0 0.0
      %1431 = vmatpush1.msra.mxu0 %v1386
      %1432 = vmatprep.subr.mxu0 0.0
      %1433 = vmatpush1.msra.mxu0 %v1387
      %1434 = vmatprep.subr.mxu0 0.0
      %1435 = vmatpush1.msra.mxu0 %v1388
      %1436 = vmatprep.subr.mxu0 0.0
      %1437 = vmatpush1.msra.mxu0 %v1389
      %1438 = vmatprep.subr.mxu0 0.0
      %1439 = vmatpush1.msra.mxu0 %v1390
      %1440 = vmatprep.subr.mxu0 0.0
      %1441 = vmatpush1.msra.mxu0 %v1391
      %1442 = vmatprep.subr.mxu0 0.0
      %1443 = vmatpush1.msra.mxu0 %v1392
      %1444 = vmatprep.subr.mxu0 0.0
      %1445 = vmatpush1.msra.mxu0 %v1393
      %1446 = vmatprep.subr.mxu0 0.0
      %1447 = vmatpush1.msra.mxu0 %v1394
      %1448 = vmatprep.subr.mxu0 0.0
      %1449 = vmatpush1.msra.mxu0 %v1395
      %1450 = vmatprep.subr.mxu0 0.0
      %1451 = vmatpush1.msra.mxu0 %v1396
      %1452 = vmatprep.subr.mxu0 0.0
      %1453 = vmatpush1.msra.mxu0 %v1397
      %1454 = vmatprep.subr.mxu0 0.0
      %1455 = vmatpush1.msra.mxu0 %v1398
      %1456 = vmatprep.subr.mxu0 0.0
      %1457 = vmatpush1.msra.mxu0 %v1399
      %1458 = vmatprep.subr.mxu0 0.0
      %1459 = vmatpush1.msra.mxu0 %v1400
      %1460 = vmatprep.subr.mxu0 0.0
      %1461 = vmatpush1.msra.mxu0 %v1401
      %1462 = vmatprep.subr.mxu0 0.0
      %1463 = vmatpush1.msra.mxu0 %v1402
      %1464 = vmatprep.subr.mxu0 0.0
      %1465 = vmatpush1.msra.mxu0 %v1403
      %1466 = vmatprep.subr.mxu0 0.0
      %1467 = vmatpush1.msra.mxu0 %v1404
      %1468 = vmatprep.subr.mxu0 0.0
      %1469 = vmatpush1.msra.mxu0 %v1405
      %1470 = vmatprep.subr.mxu0 0.0
      %1471 = vmatpush1.msra.mxu0 %v1406
      %1472 = vmatprep.subr.mxu0 0.0
      %1473 = vmatpush1.msra.mxu0 %v1407
      %1474 = vmatprep.subr.mxu0 0.0
      %1475 = vmatpush1.msra.mxu0 %v1408
      %1476 = vmatprep.subr.mxu0 0.0
      %1477 = vmatpush1.msra.mxu0 %v1409
      %1478 = vmatprep.subr.mxu0 0.0
      %1479 = vmatpush1.msra.mxu0 %v1410
      %1480 = vmatprep.subr.mxu0 0.0
      %1481 = vmatpush1.msra.mxu0 %v1411
      %1482 = vmatprep.subr.mxu0 0.0
      %1483 = vmatpush1.msra.mxu0 %v1412
      %1484 = vmatprep.mubr.f32.mxu0 %v1221
      %1485 = vmatmul.mubr.f32.gmra.mrb[0].mxu0 %v1220
      %v1486 = vpop.f32.mrb[0].mxu0
      %v1487 = vadd.f32 %v1418, %v1486
      %v1488 = vpop.f32.mrb[0].mxu0
      %1489 = vdwg.mxu0
      %1490 = vst [vmem:[#allocation16] sm:$0x3] %v1487
    $region65: #{tpu_custom_call.1} parent=1 // pred_fallthru
      _
    // Predicated region
    $region66: #{tpu_custom_call.1} parent=1 // pred_check
      _
    $region67: #{tpu_custom_call.1} parent=1 // pred_check_branch
      %1492 = sbr.rel (0) target = $region69
    $region68: #{tpu_custom_call.1} parent=1 // pred_region
      %s1494 = ssub.s32 64, 64
      %1495 = vsyncadd [#allocation5], %s1494
      %s1497 = sshll.u32 [#allocation15], 4
      %s1498 = int_to_ptr.vmem [resolvable:$true] %s1497
      %1500 = dma.vmem_to_hbm [thread:$0]  %s1498, 64, %s7, [#allocation5]
    $region69: #{tpu_custom_call.1} parent=1 // pred_fallthru
      _
    // Predicated region
    $region70: #{tpu_custom_call.1} parent=1 // pred_check
      _
    $region71: #{tpu_custom_call.1} parent=1 // pred_check_branch
      %1502 = sbr.rel (0) target = $region73
    $region72: #{tpu_custom_call.1} parent=1 // pred_region
      %s1504 = ssub.s32 32, 32
      %1505 = vsyncadd [#allocation17], %s1504
      %s1507 = sshll.u32 [#allocation16], 4
      %s1508 = int_to_ptr.vmem [resolvable:$true] %s1507
      %1510 = dma.vmem_to_hbm [thread:$0]  %s1508, 32, %s8, [#allocation17]
    $region73: #{tpu_custom_call.1} parent=1 // pred_fallthru
      _
    // Predicated region
    $region74: #{tpu_custom_call.1} parent=1 // pred_check
      _
    $region75: #{tpu_custom_call.1} parent=1 // pred_check_branch
      %1512 = sbr.rel (0) target = $region77
    $region76: #{tpu_custom_call.1} parent=1 // pred_region
      %1513 = dma.done [#allocation5], 64
    $region77: #{tpu_custom_call.1} parent=1 // pred_fallthru
      _
    // Predicated region
    $region78: #{tpu_custom_call.1} parent=1 // pred_check
      _
    $region79: #{tpu_custom_call.1} parent=1 // pred_check_branch
      %1515 = sbr.rel (0) target = $region81
    $region80: #{tpu_custom_call.1} parent=1 // pred_region
      %1516 = dma.done [#allocation17], 32
    $region81: #{tpu_custom_call.1} parent=1 // pred_fallthru
      _
    %1517 = vsyncpa [#allocation4], 1
    %1518 = vsyncpa [#allocation7], 1
    %1519 = vsyncpa [#allocation10], 1
    %1520 = vsyncpa [#allocation13], 1
    %1521 = vsyncpa [#allocation5], 1
    %1522 = vsyncpa [#allocation17], 1

</llo_original>
